<compile_context>
chip_gen: v7x
topology: tpu7x:2x2x1
jax: 0.10.0
libtpu: 0.0.40
codegen_flags: <defaults>
</compile_context>

<pallas_src>
import jax
import jax.numpy as jnp
from jax import lax
from jax.experimental import pallas as pl
from jax.experimental.pallas import tpu as pltpu

EPS = 1e-5  # nn.BatchNorm2d default eps


def _conv_stats_kernel(x_ref, w_ref, y_ref, stats_ref, xpad_ref):
    """Pass 1: 3x3 conv (MXU) + per-tile BN partial statistics.

    x_ref    : (1, H, W, Cin)      input tile, native dtype (NHWC)
    w_ref    : (3, 3, Cin, Cout)   conv weight (HWIO)
    y_ref    : (1, H, W, Cout)     conv output tile (f32)
    stats_ref: (1, 2, Cin+Cout)    row 0: per-channel mean, row 1: centered M2
    xpad_ref : (H+2, W+2, Cin)     VMEM scratch holding the zero-padded tile
    """
    _, H, W, Cin = x_ref.shape
    Cout = w_ref.shape[3]

    # Zero only the 1-pixel halo; the interior is fully overwritten each step.
    zrow = jnp.zeros((1, W + 2, Cin), xpad_ref.dtype)
    zcol = jnp.zeros((H + 2, 1, Cin), xpad_ref.dtype)
    xpad_ref[0:1, :, :] = zrow
    xpad_ref[H + 1:H + 2, :, :] = zrow
    xpad_ref[:, 0:1, :] = zcol
    xpad_ref[:, W + 1:W + 2, :] = zcol
    xpad_ref[1:H + 1, 1:W + 1, :] = x_ref[0]

    # 3x3 "same" conv = 9 shifted (H*W, Cin) @ (Cin, Cout) MXU matmuls,
    # accumulated in f32.  Inputs stay in their native dtype.
    acc = jnp.zeros((H * W, Cout), jnp.float32)
    for ky in range(3):
        for kx in range(3):
            patch = xpad_ref[ky:ky + H, kx:kx + W, :].reshape(H * W, Cin)
            acc = acc + jnp.dot(patch, w_ref[ky, kx],
                                preferred_element_type=jnp.float32)
    y_ref[0] = acc.reshape(H, W, Cout).astype(y_ref.dtype)

    # Per-tile BN partial statistics (mean + centered sum of squares).
    cnt = jnp.float32(H * W)
    xf = x_ref[0].astype(jnp.float32).reshape(H * W, Cin)
    mean_x = jnp.sum(xf, axis=0, keepdims=True) / cnt           # (1, Cin)
    m2_x = jnp.sum((xf - mean_x) ** 2, axis=0, keepdims=True)   # (1, Cin)
    mean_y = jnp.sum(acc, axis=0, keepdims=True) / cnt          # (1, Cout)
    m2_y = jnp.sum((acc - mean_y) ** 2, axis=0, keepdims=True)  # (1, Cout)

    # Disjoint lane-slice stores (no concatenate).
    stats_ref[0, 0:1, 0:Cin] = mean_x
    stats_ref[0, 0:1, Cin:Cin + Cout] = mean_y
    stats_ref[0, 1:2, 0:Cin] = m2_x
    stats_ref[0, 1:2, Cin:Cin + Cout] = m2_y


def _bn_relu_kernel(x_ref, y_ref, scale_ref, bias_ref, out_ref):
    """Pass 2: fused affine BN + ReLU; 'concat' realised as disjoint stores.

    x_ref    : (1, H, W, Cin)       passthrough channels (native dtype)
    y_ref    : (1, H, W, Cout)      conv channels (f32, from pass 1)
    scale_ref: (1, Cin+Cout)        gamma / sqrt(var + eps)
    bias_ref : (1, Cin+Cout)        beta - mean * scale
    out_ref  : (1, H, W, Cin+Cout)
    """
    Cin = x_ref.shape[3]
    Cout = y_ref.shape[3]

    sc_x = scale_ref[0:1, 0:Cin]            # (1, Cin) -> broadcasts on lanes
    b_x = bias_ref[0:1, 0:Cin]
    sc_y = scale_ref[0:1, Cin:Cin + Cout]
    b_y = bias_ref[0:1, Cin:Cin + Cout]

    xf = x_ref[0].astype(jnp.float32)
    yf = y_ref[0].astype(jnp.float32)
    out_ref[0, :, :, 0:Cin] = jnp.maximum(xf * sc_x + b_x, 0.0).astype(out_ref.dtype)
    out_ref[0, :, :, Cin:Cin + Cout] = jnp.maximum(yf * sc_y + b_y, 0.0).astype(out_ref.dtype)


def conv_block_forward_nhwc(x_nhwc, w_hwio, gamma, beta):
    """NHWC-native ConvBlock forward. x: (N,H,W,Cin), w: (3,3,Cin,Cout)."""
    N, H, W, Cin = x_nhwc.shape
    Cout = w_hwio.shape[3]
    Ctot = Cin + Cout
    in_bytes = x_nhwc.dtype.itemsize
    f32b = 4

    params = pltpu.CompilerParams(dimension_semantics=("parallel",))

    cost1 = pl.CostEstimate(
        flops=2 * N * H * W * 9 * Cin * Cout,
        transcendentals=0,
        bytes_accessed=(N * H * W * Cin * in_bytes + 9 * Cin * Cout * in_bytes
                        + N * H * W * Cout * f32b + N * 2 * Ctot * f32b))

    y_conv, stats = pl.pallas_call(
        _conv_stats_kernel,
        grid=(N,),
        in_specs=[
            pl.BlockSpec((1, H, W, Cin), lambda n: (n, 0, 0, 0)),
            pl.BlockSpec((3, 3, Cin, Cout), lambda n: (0, 0, 0, 0)),
        ],
        out_specs=[
            pl.BlockSpec((1, H, W, Cout), lambda n: (n, 0, 0, 0)),
            pl.BlockSpec((1, 2, Ctot), lambda n: (n, 0, 0)),
        ],
        out_shape=[
            jax.ShapeDtypeStruct((N, H, W, Cout), jnp.float32),
            jax.ShapeDtypeStruct((N, 2, Ctot), jnp.float32),
        ],
        scratch_shapes=[pltpu.VMEM((H + 2, W + 2, Cin), x_nhwc.dtype)],
        compiler_params=params,
        cost_estimate=cost1,
    )(x_nhwc, w_hwio)

    # Tiny cross-tile combine of the BN batch statistics (Chan's parallel
    # variance formula): exact global (N,H,W) stats, numerically stable.
    tile_mean = stats[:, 0, :]                        # (N, Ctot)
    tile_m2 = stats[:, 1, :]                          # (N, Ctot)
    cnt_tile = jnp.float32(H * W)
    cnt_total = jnp.float32(N * H * W)
    mean = jnp.mean(tile_mean, axis=0)                # equal per-tile counts
    m2 = jnp.sum(tile_m2, axis=0) + cnt_tile * jnp.sum((tile_mean - mean) ** 2, axis=0)
    var = m2 / cnt_total                              # biased, as BN training uses
    inv_std = lax.rsqrt(var + EPS)
    g32 = gamma.astype(jnp.float32)
    scale = (g32 * inv_std).reshape(1, Ctot)
    bias = (beta.astype(jnp.float32) - mean * g32 * inv_std).reshape(1, Ctot)

    cost2 = pl.CostEstimate(
        flops=3 * N * H * W * Ctot,
        transcendentals=0,
        bytes_accessed=(N * H * W * Cin * in_bytes + N * H * W * Cout * f32b
                        + N * H * W * Ctot * in_bytes + 2 * Ctot * f32b))

    out_nhwc = pl.pallas_call(
        _bn_relu_kernel,
        grid=(N,),
        in_specs=[
            pl.BlockSpec((1, H, W, Cin), lambda n: (n, 0, 0, 0)),
            pl.BlockSpec((1, H, W, Cout), lambda n: (n, 0, 0, 0)),
            pl.BlockSpec((1, Ctot), lambda n: (0, 0)),
            pl.BlockSpec((1, Ctot), lambda n: (0, 0)),
        ],
        out_specs=pl.BlockSpec((1, H, W, Ctot), lambda n: (n, 0, 0, 0)),
        out_shape=jax.ShapeDtypeStruct((N, H, W, Ctot), x_nhwc.dtype),
        compiler_params=params,
        cost_estimate=cost2,
    )(x_nhwc, y_conv, scale, bias)

    return out_nhwc


@jax.jit
def conv_block_forward(x_nchw, w_oihw, gamma, beta):
    """PyTorch-facing NCHW wrapper. x: (N,Cin,H,W); w: (Cout,Cin,3,3)."""
    # In an NHWC end-to-end model these transposes fold away; they exist only
    # to match the nn.Module's NCHW interface.
    x_nhwc = jnp.transpose(x_nchw, (0, 2, 3, 1))
    w_hwio = jnp.transpose(w_oihw, (2, 3, 1, 0))
    out_nhwc = conv_block_forward_nhwc(x_nhwc, w_hwio, gamma, beta)
    return jnp.transpose(out_nhwc, (0, 3, 1, 2))


@jax.jit
def reference_forward(x_nchw, w_oihw, gamma, beta):
    """Pure-JAX reference mirroring the PyTorch forward (training-mode BN)."""
    y = lax.conv_general_dilated(
        x_nchw.astype(jnp.float32), w_oihw.astype(jnp.float32),
        window_strides=(1, 1), padding=((1, 1), (1, 1)),
        dimension_numbers=("NCHW", "OIHW", "NCHW"))
    ycat = jnp.concatenate([x_nchw.astype(jnp.float32), y], axis=1)
    mean = jnp.mean(ycat, axis=(0, 2, 3), keepdims=True)
    var = jnp.mean((ycat - mean) ** 2, axis=(0, 2, 3), keepdims=True)
    yn = (ycat - mean) * lax.rsqrt(var + EPS)
    yn = yn * gamma.reshape(1, -1, 1, 1) + beta.reshape(1, -1, 1, 1)
    return jnp.maximum(yn, 0.0)


if __name__ == "__main__":
    # Small shapes consistent with the module: N=2, in_channels=4, growth_rate=8, 16x16.
    N, Cin, H, W = 2, 4, 16, 16
    growth = 8
    Ctot = Cin + growth

    key = jax.random.PRNGKey(0)
    kx, kw, kg, kb = jax.random.split(key, 4)
    x = jax.random.normal(kx, (N, Cin, H, W), dtype=jnp.float32)
    w = jax.random.normal(kw, (growth, Cin, 3, 3), dtype=jnp.float32) * 0.1
    gamma = 1.0 + 0.1 * jax.random.normal(kg, (Ctot,), dtype=jnp.float32)
    beta = 0.1 * jax.random.normal(kb, (Ctot,), dtype=jnp.float32)

    out = jax.block_until_ready(conv_block_forward(x, w, gamma, beta))
    ref = jax.block_until_ready(reference_forward(x, w, gamma, beta))

    assert out.shape == (N, Ctot, H, W)
    assert jnp.allclose(out, ref, atol=1e-4, rtol=1e-4), "mismatch vs reference"

    print("KERNEL_OK")
</pallas_src>

<mosaic_0001>
module attributes {stable_mosaic.version = 11 : i64} {
  func.func @_conv_stats_kernel(%arg0: i32, %arg1: memref<1x16x16x4xf32, #tpu.memory_space<vmem>>, %arg2: memref<3x3x4x8xf32, #tpu.memory_space<vmem>>, %arg3: memref<1x16x16x8xf32, #tpu.memory_space<vmem>>, %arg4: memref<1x2x12xf32, #tpu.memory_space<vmem>>, %arg5: memref<18x18x4xf32, #tpu.memory_space<vmem>>) attributes {dimension_semantics = [#tpu.dimension_semantics<parallel>], iteration_bounds = array<i64: 2>, scalar_prefetch = 0 : i64, scratch_operands = 1 : i64, tpu.core_type = #tpu.core_type<tc>, window_params = [{transform_indices = @transform_0, window_bounds = array<i64: 1, 16, 16, 4>}, {pipeline_mode = #tpu.pipeline_mode<synchronous>, transform_indices = @transform_1, window_bounds = array<i64: 3, 3, 4, 8>}, {transform_indices = @transform_2, window_bounds = array<i64: 1, 16, 16, 8>}, {transform_indices = @transform_3, window_bounds = array<i64: 1, 2, 12>}]} {
    %cst = arith.constant 0.000000e+00 : f32
    %0 = vector.broadcast %cst : f32 to vector<1x18x4xf32>
    %cst_0 = arith.constant 0.000000e+00 : f32
    %1 = vector.broadcast %cst_0 : f32 to vector<18x1x4xf32>
    %c0 = arith.constant 0 : index
    %c0_1 = arith.constant 0 : index
    %c0_2 = arith.constant 0 : index
    %2 = vector.load %arg5[%c0, %c0_1, %c0_2] : memref<18x18x4xf32, #tpu.memory_space<vmem>>, vector<1x18x4xf32>
    tpu.vector_store %arg5[%c0, %c0_1, %c0_2], %0 {strides = array<i32>} : memref<18x18x4xf32, #tpu.memory_space<vmem>>, vector<1x18x4xf32>,
    %c17 = arith.constant 17 : index
    %c0_3 = arith.constant 0 : index
    %c0_4 = arith.constant 0 : index
    %3 = vector.load %arg5[%c17, %c0_3, %c0_4] : memref<18x18x4xf32, #tpu.memory_space<vmem>>, vector<1x18x4xf32>
    tpu.vector_store %arg5[%c17, %c0_3, %c0_4], %0 {strides = array<i32>} : memref<18x18x4xf32, #tpu.memory_space<vmem>>, vector<1x18x4xf32>,
    %c0_5 = arith.constant 0 : index
    %c0_6 = arith.constant 0 : index
    %c0_7 = arith.constant 0 : index
    %4 = vector.load %arg5[%c0_5, %c0_6, %c0_7] : memref<18x18x4xf32, #tpu.memory_space<vmem>>, vector<18x1x4xf32>
    tpu.vector_store %arg5[%c0_5, %c0_6, %c0_7], %1 {strides = array<i32>} : memref<18x18x4xf32, #tpu.memory_space<vmem>>, vector<18x1x4xf32>,
    %c0_8 = arith.constant 0 : index
    %c17_9 = arith.constant 17 : index
    %c0_10 = arith.constant 0 : index
    %5 = vector.load %arg5[%c0_8, %c17_9, %c0_10] : memref<18x18x4xf32, #tpu.memory_space<vmem>>, vector<18x1x4xf32>
    tpu.vector_store %arg5[%c0_8, %c17_9, %c0_10], %1 {strides = array<i32>} : memref<18x18x4xf32, #tpu.memory_space<vmem>>, vector<18x1x4xf32>,
    %c0_11 = arith.constant 0 : index
    %c0_12 = arith.constant 0 : index
    %c0_13 = arith.constant 0 : index
    %c0_14 = arith.constant 0 : index
    %6 = vector.load %arg1[%c0_11, %c0_12, %c0_13, %c0_14] : memref<1x16x16x4xf32, #tpu.memory_space<vmem>>, vector<1x16x16x4xf32>
    %7 = vector.shape_cast %6 : vector<1x16x16x4xf32> to vector<16x16x4xf32>
    %c1 = arith.constant 1 : index
    %c1_15 = arith.constant 1 : index
    %c0_16 = arith.constant 0 : index
    %8 = vector.load %arg5[%c1, %c1_15, %c0_16] : memref<18x18x4xf32, #tpu.memory_space<vmem>>, vector<16x16x4xf32>
    tpu.vector_store %arg5[%c1, %c1_15, %c0_16], %7 {strides = array<i32>} : memref<18x18x4xf32, #tpu.memory_space<vmem>>, vector<16x16x4xf32>,
    %cst_17 = arith.constant 0.000000e+00 : f32
    %9 = vector.broadcast %cst_17 : f32 to vector<256x8xf32>
    %c0_18 = arith.constant 0 : index
    %c0_19 = arith.constant 0 : index
    %c0_20 = arith.constant 0 : index
    %10 = vector.load %arg5[%c0_18, %c0_19, %c0_20] : memref<18x18x4xf32, #tpu.memory_space<vmem>>, vector<16x16x4xf32>
    %11 = vector.shape_cast %10 : vector<16x16x4xf32> to vector<256x4xf32>
    %c0_21 = arith.constant 0 : index
    %c0_22 = arith.constant 0 : index
    %c0_23 = arith.constant 0 : index
    %c0_24 = arith.constant 0 : index
    %12 = vector.load %arg2[%c0_21, %c0_22, %c0_23, %c0_24] : memref<3x3x4x8xf32, #tpu.memory_space<vmem>>, vector<1x1x4x8xf32>
    %13 = vector.shape_cast %12 : vector<1x1x4x8xf32> to vector<4x8xf32>
    %cst_25 = arith.constant dense<0.000000e+00> : vector<256x8xf32>
    %14 = tpu.matmul %11, %13, %cst_25 {dimension_numbers = #tpu.dot_dimension_numbers<[1], [0], [0], [1], [0, 0, 1, 1], [], []>} : vector<256x4xf32>, vector<4x8xf32>, vector<256x8xf32> -> vector<256x8xf32>
    %15 = arith.addf %9, %14 : vector<256x8xf32>
    %c0_26 = arith.constant 0 : index
    %c1_27 = arith.constant 1 : index
    %c0_28 = arith.constant 0 : index
    %16 = vector.load %arg5[%c0_26, %c1_27, %c0_28] : memref<18x18x4xf32, #tpu.memory_space<vmem>>, vector<16x16x4xf32>
    %17 = vector.shape_cast %16 : vector<16x16x4xf32> to vector<256x4xf32>
    %c0_29 = arith.constant 0 : index
    %c1_30 = arith.constant 1 : index
    %c0_31 = arith.constant 0 : index
    %c0_32 = arith.constant 0 : index
    %18 = vector.load %arg2[%c0_29, %c1_30, %c0_31, %c0_32] : memref<3x3x4x8xf32, #tpu.memory_space<vmem>>, vector<1x1x4x8xf32>
    %19 = vector.shape_cast %18 : vector<1x1x4x8xf32> to vector<4x8xf32>
    %cst_33 = arith.constant dense<0.000000e+00> : vector<256x8xf32>
    %20 = tpu.matmul %17, %19, %cst_33 {dimension_numbers = #tpu.dot_dimension_numbers<[1], [0], [0], [1], [0, 0, 1, 1], [], []>} : vector<256x4xf32>, vector<4x8xf32>, vector<256x8xf32> -> vector<256x8xf32>
    %21 = arith.addf %15, %20 : vector<256x8xf32>
    %c0_34 = arith.constant 0 : index
    %c2 = arith.constant 2 : index
    %c0_35 = arith.constant 0 : index
    %22 = vector.load %arg5[%c0_34, %c2, %c0_35] : memref<18x18x4xf32, #tpu.memory_space<vmem>>, vector<16x16x4xf32>
    %23 = vector.shape_cast %22 : vector<16x16x4xf32> to vector<256x4xf32>
    %c0_36 = arith.constant 0 : index
    %c2_37 = arith.constant 2 : index
    %c0_38 = arith.constant 0 : index
    %c0_39 = arith.constant 0 : index
    %24 = vector.load %arg2[%c0_36, %c2_37, %c0_38, %c0_39] : memref<3x3x4x8xf32, #tpu.memory_space<vmem>>, vector<1x1x4x8xf32>
    %25 = vector.shape_cast %24 : vector<1x1x4x8xf32> to vector<4x8xf32>
    %cst_40 = arith.constant dense<0.000000e+00> : vector<256x8xf32>
    %26 = tpu.matmul %23, %25, %cst_40 {dimension_numbers = #tpu.dot_dimension_numbers<[1], [0], [0], [1], [0, 0, 1, 1], [], []>} : vector<256x4xf32>, vector<4x8xf32>, vector<256x8xf32> -> vector<256x8xf32>
    %27 = arith.addf %21, %26 : vector<256x8xf32>
    %c1_41 = arith.constant 1 : index
    %c0_42 = arith.constant 0 : index
    %c0_43 = arith.constant 0 : index
    %28 = vector.load %arg5[%c1_41, %c0_42, %c0_43] : memref<18x18x4xf32, #tpu.memory_space<vmem>>, vector<16x16x4xf32>
    %29 = vector.shape_cast %28 : vector<16x16x4xf32> to vector<256x4xf32>
    %c1_44 = arith.constant 1 : index
    %c0_45 = arith.constant 0 : index
    %c0_46 = arith.constant 0 : index
    %c0_47 = arith.constant 0 : index
    %30 = vector.load %arg2[%c1_44, %c0_45, %c0_46, %c0_47] : memref<3x3x4x8xf32, #tpu.memory_space<vmem>>, vector<1x1x4x8xf32>
    %31 = vector.shape_cast %30 : vector<1x1x4x8xf32> to vector<4x8xf32>
    %cst_48 = arith.constant dense<0.000000e+00> : vector<256x8xf32>
    %32 = tpu.matmul %29, %31, %cst_48 {dimension_numbers = #tpu.dot_dimension_numbers<[1], [0], [0], [1], [0, 0, 1, 1], [], []>} : vector<256x4xf32>, vector<4x8xf32>, vector<256x8xf32> -> vector<256x8xf32>
    %33 = arith.addf %27, %32 : vector<256x8xf32>
    %c1_49 = arith.constant 1 : index
    %c1_50 = arith.constant 1 : index
    %c0_51 = arith.constant 0 : index
    %34 = vector.load %arg5[%c1_49, %c1_50, %c0_51] : memref<18x18x4xf32, #tpu.memory_space<vmem>>, vector<16x16x4xf32>
    %35 = vector.shape_cast %34 : vector<16x16x4xf32> to vector<256x4xf32>
    %c1_52 = arith.constant 1 : index
    %c1_53 = arith.constant 1 : index
    %c0_54 = arith.constant 0 : index
    %c0_55 = arith.constant 0 : index
    %36 = vector.load %arg2[%c1_52, %c1_53, %c0_54, %c0_55] : memref<3x3x4x8xf32, #tpu.memory_space<vmem>>, vector<1x1x4x8xf32>
    %37 = vector.shape_cast %36 : vector<1x1x4x8xf32> to vector<4x8xf32>
    %cst_56 = arith.constant dense<0.000000e+00> : vector<256x8xf32>
    %38 = tpu.matmul %35, %37, %cst_56 {dimension_numbers = #tpu.dot_dimension_numbers<[1], [0], [0], [1], [0, 0, 1, 1], [], []>} : vector<256x4xf32>, vector<4x8xf32>, vector<256x8xf32> -> vector<256x8xf32>
    %39 = arith.addf %33, %38 : vector<256x8xf32>
    %c1_57 = arith.constant 1 : index
    %c2_58 = arith.constant 2 : index
    %c0_59 = arith.constant 0 : index
    %40 = vector.load %arg5[%c1_57, %c2_58, %c0_59] : memref<18x18x4xf32, #tpu.memory_space<vmem>>, vector<16x16x4xf32>
    %41 = vector.shape_cast %40 : vector<16x16x4xf32> to vector<256x4xf32>
    %c1_60 = arith.constant 1 : index
    %c2_61 = arith.constant 2 : index
    %c0_62 = arith.constant 0 : index
    %c0_63 = arith.constant 0 : index
    %42 = vector.load %arg2[%c1_60, %c2_61, %c0_62, %c0_63] : memref<3x3x4x8xf32, #tpu.memory_space<vmem>>, vector<1x1x4x8xf32>
    %43 = vector.shape_cast %42 : vector<1x1x4x8xf32> to vector<4x8xf32>
    %cst_64 = arith.constant dense<0.000000e+00> : vector<256x8xf32>
    %44 = tpu.matmul %41, %43, %cst_64 {dimension_numbers = #tpu.dot_dimension_numbers<[1], [0], [0], [1], [0, 0, 1, 1], [], []>} : vector<256x4xf32>, vector<4x8xf32>, vector<256x8xf32> -> vector<256x8xf32>
    %45 = arith.addf %39, %44 : vector<256x8xf32>
    %c2_65 = arith.constant 2 : index
    %c0_66 = arith.constant 0 : index
    %c0_67 = arith.constant 0 : index
    %46 = vector.load %arg5[%c2_65, %c0_66, %c0_67] : memref<18x18x4xf32, #tpu.memory_space<vmem>>, vector<16x16x4xf32>
    %47 = vector.shape_cast %46 : vector<16x16x4xf32> to vector<256x4xf32>
    %c2_68 = arith.constant 2 : index
    %c0_69 = arith.constant 0 : index
    %c0_70 = arith.constant 0 : index
    %c0_71 = arith.constant 0 : index
    %48 = vector.load %arg2[%c2_68, %c0_69, %c0_70, %c0_71] : memref<3x3x4x8xf32, #tpu.memory_space<vmem>>, vector<1x1x4x8xf32>
    %49 = vector.shape_cast %48 : vector<1x1x4x8xf32> to vector<4x8xf32>
    %cst_72 = arith.constant dense<0.000000e+00> : vector<256x8xf32>
    %50 = tpu.matmul %47, %49, %cst_72 {dimension_numbers = #tpu.dot_dimension_numbers<[1], [0], [0], [1], [0, 0, 1, 1], [], []>} : vector<256x4xf32>, vector<4x8xf32>, vector<256x8xf32> -> vector<256x8xf32>
    %51 = arith.addf %45, %50 : vector<256x8xf32>
    %c2_73 = arith.constant 2 : index
    %c1_74 = arith.constant 1 : index
    %c0_75 = arith.constant 0 : index
    %52 = vector.load %arg5[%c2_73, %c1_74, %c0_75] : memref<18x18x4xf32, #tpu.memory_space<vmem>>, vector<16x16x4xf32>
    %53 = vector.shape_cast %52 : vector<16x16x4xf32> to vector<256x4xf32>
    %c2_76 = arith.constant 2 : index
    %c1_77 = arith.constant 1 : index
    %c0_78 = arith.constant 0 : index
    %c0_79 = arith.constant 0 : index
    %54 = vector.load %arg2[%c2_76, %c1_77, %c0_78, %c0_79] : memref<3x3x4x8xf32, #tpu.memory_space<vmem>>, vector<1x1x4x8xf32>
    %55 = vector.shape_cast %54 : vector<1x1x4x8xf32> to vector<4x8xf32>
    %cst_80 = arith.constant dense<0.000000e+00> : vector<256x8xf32>
    %56 = tpu.matmul %53, %55, %cst_80 {dimension_numbers = #tpu.dot_dimension_numbers<[1], [0], [0], [1], [0, 0, 1, 1], [], []>} : vector<256x4xf32>, vector<4x8xf32>, vector<256x8xf32> -> vector<256x8xf32>
    %57 = arith.addf %51, %56 : vector<256x8xf32>
    %c2_81 = arith.constant 2 : index
    %c2_82 = arith.constant 2 : index
    %c0_83 = arith.constant 0 : index
    %58 = vector.load %arg5[%c2_81, %c2_82, %c0_83] : memref<18x18x4xf32, #tpu.memory_space<vmem>>, vector<16x16x4xf32>
    %59 = vector.shape_cast %58 : vector<16x16x4xf32> to vector<256x4xf32>
    %c2_84 = arith.constant 2 : index
    %c2_85 = arith.constant 2 : index
    %c0_86 = arith.constant 0 : index
    %c0_87 = arith.constant 0 : index
    %60 = vector.load %arg2[%c2_84, %c2_85, %c0_86, %c0_87] : memref<3x3x4x8xf32, #tpu.memory_space<vmem>>, vector<1x1x4x8xf32>
    %61 = vector.shape_cast %60 : vector<1x1x4x8xf32> to vector<4x8xf32>
    %cst_88 = arith.constant dense<0.000000e+00> : vector<256x8xf32>
    %62 = tpu.matmul %59, %61, %cst_88 {dimension_numbers = #tpu.dot_dimension_numbers<[1], [0], [0], [1], [0, 0, 1, 1], [], []>} : vector<256x4xf32>, vector<4x8xf32>, vector<256x8xf32> -> vector<256x8xf32>
    %63 = arith.addf %57, %62 : vector<256x8xf32>
    %64 = vector.shape_cast %63 : vector<256x8xf32> to vector<16x16x8xf32>
    %c0_89 = arith.constant 0 : index
    %c0_90 = arith.constant 0 : index
    %c0_91 = arith.constant 0 : index
    %c0_92 = arith.constant 0 : index
    %65 = vector.load %arg3[%c0_89, %c0_90, %c0_91, %c0_92] : memref<1x16x16x8xf32, #tpu.memory_space<vmem>>, vector<1x16x16x8xf32>
    %66 = vector.shape_cast %65 : vector<1x16x16x8xf32> to vector<16x16x8xf32>
    %67 = vector.shape_cast %64 : vector<16x16x8xf32> to vector<1x16x16x8xf32>
    tpu.vector_store %arg3[%c0_89, %c0_90, %c0_91, %c0_92], %67 {strides = array<i32>} : memref<1x16x16x8xf32, #tpu.memory_space<vmem>>, vector<1x16x16x8xf32>,
    %c0_93 = arith.constant 0 : index
    %c0_94 = arith.constant 0 : index
    %c0_95 = arith.constant 0 : index
    %c0_96 = arith.constant 0 : index
    %68 = vector.load %arg1[%c0_93, %c0_94, %c0_95, %c0_96] : memref<1x16x16x4xf32, #tpu.memory_space<vmem>>, vector<1x16x16x4xf32>
    %69 = vector.shape_cast %68 : vector<1x16x16x4xf32> to vector<16x16x4xf32>
    %70 = vector.shape_cast %69 : vector<16x16x4xf32> to vector<256x4xf32>
    %cst_97 = arith.constant dense<0.000000e+00> : vector<4xf32>
    %71 = vector.multi_reduction <add>, %70, %cst_97 [0] : vector<256x4xf32> to vector<4xf32>
    %72 = vector.shape_cast %71 : vector<4xf32> to vector<1x4xf32>
    %cst_98 = arith.constant 2.560000e+02 : f32
    %73 = vector.broadcast %cst_98 : f32 to vector<1x4xf32>
    %74 = arith.divf %72, %73 : vector<1x4xf32>
    %75 = vector.broadcast %74 : vector<1x4xf32> to vector<256x4xf32>
    %76 = arith.subf %70, %75 : vector<256x4xf32>
    %77 = arith.mulf %76, %76 : vector<256x4xf32>
    %cst_99 = arith.constant dense<0.000000e+00> : vector<4xf32>
    %78 = vector.multi_reduction <add>, %77, %cst_99 [0] : vector<256x4xf32> to vector<4xf32>
    %79 = vector.shape_cast %78 : vector<4xf32> to vector<1x4xf32>
    %cst_100 = arith.constant dense<0.000000e+00> : vector<8xf32>
    %80 = vector.multi_reduction <add>, %63, %cst_100 [0] : vector<256x8xf32> to vector<8xf32>
    %81 = vector.shape_cast %80 : vector<8xf32> to vector<1x8xf32>
    %cst_101 = arith.constant 2.560000e+02 : f32
    %82 = vector.broadcast %cst_101 : f32 to vector<1x8xf32>
    %83 = arith.divf %81, %82 : vector<1x8xf32>
    %84 = vector.broadcast %83 : vector<1x8xf32> to vector<256x8xf32>
    %85 = arith.subf %63, %84 : vector<256x8xf32>
    %86 = arith.mulf %85, %85 : vector<256x8xf32>
    %cst_102 = arith.constant dense<0.000000e+00> : vector<8xf32>
    %87 = vector.multi_reduction <add>, %86, %cst_102 [0] : vector<256x8xf32> to vector<8xf32>
    %88 = vector.shape_cast %87 : vector<8xf32> to vector<1x8xf32>
    %c0_103 = arith.constant 0 : index
    %c0_104 = arith.constant 0 : index
    %c0_105 = arith.constant 0 : index
    %89 = vector.load %arg4[%c0_103, %c0_104, %c0_105] : memref<1x2x12xf32, #tpu.memory_space<vmem>>, vector<1x1x4xf32>
    %90 = vector.shape_cast %89 : vector<1x1x4xf32> to vector<1x4xf32>
    %91 = vector.shape_cast %74 : vector<1x4xf32> to vector<1x1x4xf32>
    tpu.vector_store %arg4[%c0_103, %c0_104, %c0_105], %91 {strides = array<i32>} : memref<1x2x12xf32, #tpu.memory_space<vmem>>, vector<1x1x4xf32>,
    %c0_106 = arith.constant 0 : index
    %c0_107 = arith.constant 0 : index
    %c4 = arith.constant 4 : index
    %92 = vector.load %arg4[%c0_106, %c0_107, %c4] : memref<1x2x12xf32, #tpu.memory_space<vmem>>, vector<1x1x8xf32>
    %93 = vector.shape_cast %92 : vector<1x1x8xf32> to vector<1x8xf32>
    %94 = vector.shape_cast %83 : vector<1x8xf32> to vector<1x1x8xf32>
    tpu.vector_store %arg4[%c0_106, %c0_107, %c4], %94 {strides = array<i32>} : memref<1x2x12xf32, #tpu.memory_space<vmem>>, vector<1x1x8xf32>,
    %c0_108 = arith.constant 0 : index
    %c1_109 = arith.constant 1 : index
    %c0_110 = arith.constant 0 : index
    %95 = vector.load %arg4[%c0_108, %c1_109, %c0_110] : memref<1x2x12xf32, #tpu.memory_space<vmem>>, vector<1x1x4xf32>
    %96 = vector.shape_cast %95 : vector<1x1x4xf32> to vector<1x4xf32>
    %97 = vector.shape_cast %79 : vector<1x4xf32> to vector<1x1x4xf32>
    tpu.vector_store %arg4[%c0_108, %c1_109, %c0_110], %97 {strides = array<i32>} : memref<1x2x12xf32, #tpu.memory_space<vmem>>, vector<1x1x4xf32>,
    %c0_111 = arith.constant 0 : index
    %c1_112 = arith.constant 1 : index
    %c4_113 = arith.constant 4 : index
    %98 = vector.load %arg4[%c0_111, %c1_112, %c4_113] : memref<1x2x12xf32, #tpu.memory_space<vmem>>, vector<1x1x8xf32>
    %99 = vector.shape_cast %98 : vector<1x1x8xf32> to vector<1x8xf32>
    %100 = vector.shape_cast %88 : vector<1x8xf32> to vector<1x1x8xf32>
    tpu.vector_store %arg4[%c0_111, %c1_112, %c4_113], %100 {strides = array<i32>} : memref<1x2x12xf32, #tpu.memory_space<vmem>>, vector<1x1x8xf32>,
    return
  }
  func.func @transform_0(%arg0: i32) -> (i32, i32, i32, i32) {
    %c0_i32 = arith.constant 0 : i32
    %c0_i32_0 = arith.constant 0 : i32
    %c0_i32_1 = arith.constant 0 : i32
    %c0_i32_2 = arith.constant 0 : i32
    return %arg0, %c0_i32, %c0_i32_0, %c0_i32_1 : i32, i32, i32, i32
  }
  func.func @transform_1(%arg0: i32) -> (i32, i32, i32, i32) {
    %c0_i32 = arith.constant 0 : i32
    %c0_i32_0 = arith.constant 0 : i32
    %c0_i32_1 = arith.constant 0 : i32
    %c0_i32_2 = arith.constant 0 : i32
    %c0_i32_3 = arith.constant 0 : i32
    return %c0_i32, %c0_i32_0, %c0_i32_1, %c0_i32_2 : i32, i32, i32, i32
  }
  func.func @transform_2(%arg0: i32) -> (i32, i32, i32, i32) {
    %c0_i32 = arith.constant 0 : i32
    %c0_i32_0 = arith.constant 0 : i32
    %c0_i32_1 = arith.constant 0 : i32
    %c0_i32_2 = arith.constant 0 : i32
    return %arg0, %c0_i32, %c0_i32_0, %c0_i32_1 : i32, i32, i32, i32
  }
  func.func @transform_3(%arg0: i32) -> (i32, i32, i32) {
    %c0_i32 = arith.constant 0 : i32
    %c0_i32_0 = arith.constant 0 : i32
    %c0_i32_1 = arith.constant 0 : i32
    return %arg0, %c0_i32, %c0_i32_0 : i32, i32, i32
  }
}

module attributes {stable_mosaic.version = 11 : i64} {
  func.func @_bn_relu_kernel(%arg0: i32, %arg1: memref<1x16x16x4xf32, #tpu.memory_space<vmem>>, %arg2: memref<1x16x16x8xf32, #tpu.memory_space<vmem>>, %arg3: memref<1x12xf32, #tpu.memory_space<vmem>>, %arg4: memref<1x12xf32, #tpu.memory_space<vmem>>, %arg5: memref<1x16x16x12xf32, #tpu.memory_space<vmem>>) attributes {dimension_semantics = [#tpu.dimension_semantics<parallel>], iteration_bounds = array<i64: 2>, scalar_prefetch = 0 : i64, scratch_operands = 0 : i64, tpu.core_type = #tpu.core_type<tc>, window_params = [{transform_indices = @transform_0, window_bounds = array<i64: 1, 16, 16, 4>}, {transform_indices = @transform_1, window_bounds = array<i64: 1, 16, 16, 8>}, {pipeline_mode = #tpu.pipeline_mode<synchronous>, transform_indices = @transform_2, window_bounds = array<i64: 1, 12>}, {pipeline_mode = #tpu.pipeline_mode<synchronous>, transform_indices = @transform_3, window_bounds = array<i64: 1, 12>}, {transform_indices = @transform_4, window_bounds = array<i64: 1, 16, 16, 12>}]} {
    %c0 = arith.constant 0 : index
    %c0_0 = arith.constant 0 : index
    %0 = vector.load %arg3[%c0, %c0_0] : memref<1x12xf32, #tpu.memory_space<vmem>>, vector<1x4xf32>
    %c0_1 = arith.constant 0 : index
    %c0_2 = arith.constant 0 : index
    %1 = vector.load %arg4[%c0_1, %c0_2] : memref<1x12xf32, #tpu.memory_space<vmem>>, vector<1x4xf32>
    %c0_3 = arith.constant 0 : index
    %c4 = arith.constant 4 : index
    %2 = vector.load %arg3[%c0_3, %c4] : memref<1x12xf32, #tpu.memory_space<vmem>>, vector<1x8xf32>
    %c0_4 = arith.constant 0 : index
    %c4_5 = arith.constant 4 : index
    %3 = vector.load %arg4[%c0_4, %c4_5] : memref<1x12xf32, #tpu.memory_space<vmem>>, vector<1x8xf32>
    %c0_6 = arith.constant 0 : index
    %c0_7 = arith.constant 0 : index
    %c0_8 = arith.constant 0 : index
    %c0_9 = arith.constant 0 : index
    %4 = vector.load %arg1[%c0_6, %c0_7, %c0_8, %c0_9] : memref<1x16x16x4xf32, #tpu.memory_space<vmem>>, vector<1x16x16x4xf32>
    %5 = vector.shape_cast %4 : vector<1x16x16x4xf32> to vector<16x16x4xf32>
    %c0_10 = arith.constant 0 : index
    %c0_11 = arith.constant 0 : index
    %c0_12 = arith.constant 0 : index
    %c0_13 = arith.constant 0 : index
    %6 = vector.load %arg2[%c0_10, %c0_11, %c0_12, %c0_13] : memref<1x16x16x8xf32, #tpu.memory_space<vmem>>, vector<1x16x16x8xf32>
    %7 = vector.shape_cast %6 : vector<1x16x16x8xf32> to vector<16x16x8xf32>
    %8 = vector.shape_cast %0 : vector<1x4xf32> to vector<1x1x4xf32>
    %9 = vector.broadcast %8 : vector<1x1x4xf32> to vector<16x16x4xf32>
    %10 = arith.mulf %5, %9 : vector<16x16x4xf32>
    %11 = vector.shape_cast %1 : vector<1x4xf32> to vector<1x1x4xf32>
    %12 = vector.broadcast %11 : vector<1x1x4xf32> to vector<16x16x4xf32>
    %13 = arith.addf %10, %12 : vector<16x16x4xf32>
    %cst = arith.constant 0.000000e+00 : f32
    %14 = vector.broadcast %cst : f32 to vector<16x16x4xf32>
    %15 = arith.maximumf %13, %14 : vector<16x16x4xf32>
    %c0_14 = arith.constant 0 : index
    %c0_15 = arith.constant 0 : index
    %c0_16 = arith.constant 0 : index
    %c0_17 = arith.constant 0 : index
    %16 = vector.load %arg5[%c0_14, %c0_15, %c0_16, %c0_17] : memref<1x16x16x12xf32, #tpu.memory_space<vmem>>, vector<1x16x16x4xf32>
    %17 = vector.shape_cast %16 : vector<1x16x16x4xf32> to vector<16x16x4xf32>
    %18 = vector.shape_cast %15 : vector<16x16x4xf32> to vector<1x16x16x4xf32>
    tpu.vector_store %arg5[%c0_14, %c0_15, %c0_16, %c0_17], %18 {strides = array<i32>} : memref<1x16x16x12xf32, #tpu.memory_space<vmem>>, vector<1x16x16x4xf32>,
    %19 = vector.shape_cast %2 : vector<1x8xf32> to vector<1x1x8xf32>
    %20 = vector.broadcast %19 : vector<1x1x8xf32> to vector<16x16x8xf32>
    %21 = arith.mulf %7, %20 : vector<16x16x8xf32>
    %22 = vector.shape_cast %3 : vector<1x8xf32> to vector<1x1x8xf32>
    %23 = vector.broadcast %22 : vector<1x1x8xf32> to vector<16x16x8xf32>
    %24 = arith.addf %21, %23 : vector<16x16x8xf32>
    %cst_18 = arith.constant 0.000000e+00 : f32
    %25 = vector.broadcast %cst_18 : f32 to vector<16x16x8xf32>
    %26 = arith.maximumf %24, %25 : vector<16x16x8xf32>
    %c0_19 = arith.constant 0 : index
    %c0_20 = arith.constant 0 : index
    %c0_21 = arith.constant 0 : index
    %c4_22 = arith.constant 4 : index
    %27 = vector.load %arg5[%c0_19, %c0_20, %c0_21, %c4_22] : memref<1x16x16x12xf32, #tpu.memory_space<vmem>>, vector<1x16x16x8xf32>
    %28 = vector.shape_cast %27 : vector<1x16x16x8xf32> to vector<16x16x8xf32>
    %29 = vector.shape_cast %26 : vector<16x16x8xf32> to vector<1x16x16x8xf32>
    tpu.vector_store %arg5[%c0_19, %c0_20, %c0_21, %c4_22], %29 {strides = array<i32>} : memref<1x16x16x12xf32, #tpu.memory_space<vmem>>, vector<1x16x16x8xf32>,
    return
  }
  func.func @transform_0(%arg0: i32) -> (i32, i32, i32, i32) {
    %c0_i32 = arith.constant 0 : i32
    %c0_i32_0 = arith.constant 0 : i32
    %c0_i32_1 = arith.constant 0 : i32
    %c0_i32_2 = arith.constant 0 : i32
    return %arg0, %c0_i32, %c0_i32_0, %c0_i32_1 : i32, i32, i32, i32
  }
  func.func @transform_1(%arg0: i32) -> (i32, i32, i32, i32) {
    %c0_i32 = arith.constant 0 : i32
    %c0_i32_0 = arith.constant 0 : i32
    %c0_i32_1 = arith.constant 0 : i32
    %c0_i32_2 = arith.constant 0 : i32
    return %arg0, %c0_i32, %c0_i32_0, %c0_i32_1 : i32, i32, i32, i32
  }
  func.func @transform_2(%arg0: i32) -> (i32, i32) {
    %c0_i32 = arith.constant 0 : i32
    %c0_i32_0 = arith.constant 0 : i32
    %c0_i32_1 = arith.constant 0 : i32
    return %c0_i32, %c0_i32_0 : i32, i32
  }
  func.func @transform_3(%arg0: i32) -> (i32, i32) {
    %c0_i32 = arith.constant 0 : i32
    %c0_i32_0 = arith.constant 0 : i32
    %c0_i32_1 = arith.constant 0 : i32
    return %c0_i32, %c0_i32_0 : i32, i32
  }
  func.func @transform_4(%arg0: i32) -> (i32, i32, i32, i32) {
    %c0_i32 = arith.constant 0 : i32
    %c0_i32_0 = arith.constant 0 : i32
    %c0_i32_1 = arith.constant 0 : i32
    %c0_i32_2 = arith.constant 0 : i32
    return %arg0, %c0_i32, %c0_i32_0, %c0_i32_1 : i32, i32, i32, i32
  }
}

</mosaic_0001>

<llo_original>
// kernel: conv_block_forward.3
$region0: #{conv_block_forward.3}
  #allocation0 [shape = 'u32[]', space=smem, size = 0x4, offset = 0x4, fixed_abs, tag = 'smem constant byte address 0x4 - core index']
  #allocation1 [shape = 'u32[144,128]{1,0:T(1,128)}', space=vmem, size = 0x12000, scoped, tag = 'internal scratch']
  %s0 = inlined_call_operand.vmem [shape: f32[2,16,16,4], index: 0, kind: input, shape index: {}]
  %s1 = inlined_call_operand.vmem [shape: f32[2,16,16,8], index: 1, kind: input, shape index: {}]
  %s2 = inlined_call_operand.vmem [shape: f32[1,12], index: 2, kind: input, shape index: {}]
  %s3 = inlined_call_operand.vmem [shape: f32[1,12], index: 3, kind: input, shape index: {}]
  %s4 = inlined_call_operand.vmem [shape: f32[2,16,16,12], index: 4, kind: output, shape index: {}]
  %s5 = sld [smem:[#allocation0]]
  $region49: #{conv_block_forward.3} parent=0
    _
  %s7 = ssub.s32 1, %s5
  %s8 = scalar_select 0, %s7, %s5
  loop: start=0, step=1, limit=4
  $region2: #{conv_block_forward.3} parent=0 // loop_pre_header
    _
  $region3: #{conv_block_forward.3} parent=0 // loop_header
    %s10 = sphi 0, %s14
    %p11 = scmp.ge.s32.totalorder %s10, 4
    %s20 = sphi 0, %s22
    %s23 = sphi 0, %s20
    %s24 = sphi 0, %s23
    %s40 = sphi 0, %s24
    %s46 = sphi 0, %s48
    %s49 = sphi 0, %s46
    %s50 = sphi 0, %s49
    %s66 = sphi 0, %s50
    %s70 = sphi 0, %s70
    %s72 = sphi 0, %s70
    %s73 = sphi 0, %s72
    %s87 = sphi 0, %s73
    %s91 = sphi 0, %s91
    %s93 = sphi 0, %s91
    %s94 = sphi 0, %s93
    %s108 = sphi 0, %s94
    %s114 = sphi 0, %s116
    %s117 = sphi 0, %s114
    %s118 = sphi 0, %s117
    %s134 = sphi 0, %s118
  $region4: #{conv_block_forward.3} parent=0 // loop_header_branch
    %13 = sbr.rel (%p11) target = $region8
  $region5: #{conv_block_forward.3} parent=0 // loop_body
    %s15 = ssub.s32 %s10, 1
    %s16 = ssub.s32 %s10, 2
    %s17 = sadd.s32 %s10, 1
    %s18 = ssub.s32 %s10, %s17
    %p19 = scmp.eq.s32.totalorder %s18, 0
    %s21 = sadd.s32 %s20, 1
    %s22 = scalar_select %p19, %s20, %s21
    %p25 = pneg %p19
    %p26 = scmp.eq.s32.totalorder %s10, 1
    %p27 = por %p25, %p26
    %p28 = scmp.ne.s32.totalorder %s20, %s23
    %p29 = scmp.eq.s32.totalorder %s10, 0
    %p30 = por %p28, %p29
    %p31 = scmp.ne.s32.totalorder %s20, %s23
    %p32 = scmp.eq.s32.totalorder %s15, 1
    %p33 = por %p31, %p32
    %p34 = scmp.ne.s32.totalorder %s23, %s24
    %p35 = scmp.eq.s32.totalorder %s15, 0
    %p36 = por %p34, %p35
    %p37 = scmp.ne.s32.totalorder %s23, %s24
    %p38 = scmp.eq.s32.totalorder %s16, 1
    %p39 = por %p37, %p38
    %p41 = scmp.ne.s32.totalorder %s24, %s40
    %p42 = scmp.eq.s32.totalorder %s16, 0
    %p43 = por %p41, %p42
    %s44 = ssub.s32 %s10, %s17
    %p45 = scmp.eq.s32.totalorder %s44, 0
    %s47 = sadd.s32 %s46, 1
    %s48 = scalar_select %p45, %s46, %s47
    %p51 = pneg %p45
    %p52 = scmp.eq.s32.totalorder %s10, 1
    %p53 = por %p51, %p52
    %p54 = scmp.ne.s32.totalorder %s46, %s49
    %p55 = scmp.eq.s32.totalorder %s10, 0
    %p56 = por %p54, %p55
    %p57 = scmp.ne.s32.totalorder %s46, %s49
    %p58 = scmp.eq.s32.totalorder %s15, 1
    %p59 = por %p57, %p58
    %p60 = scmp.ne.s32.totalorder %s49, %s50
    %p61 = scmp.eq.s32.totalorder %s15, 0
    %p62 = por %p60, %p61
    %p63 = scmp.ne.s32.totalorder %s49, %s50
    %p64 = scmp.eq.s32.totalorder %s16, 1
    %p65 = por %p63, %p64
    %p67 = scmp.ne.s32.totalorder %s50, %s66
    %p68 = scmp.eq.s32.totalorder %s16, 0
    %p69 = por %p67, %p68
    %s71 = sadd.s32 %s70, 1
    %p74 = scmp.eq.s32.totalorder %s10, 1
    %p75 = scmp.ne.s32.totalorder %s70, %s72
    %p76 = scmp.eq.s32.totalorder %s10, 0
    %p77 = por %p75, %p76
    %p78 = scmp.ne.s32.totalorder %s70, %s72
    %p79 = scmp.eq.s32.totalorder %s15, 1
    %p80 = por %p78, %p79
    %p81 = scmp.ne.s32.totalorder %s72, %s73
    %p82 = scmp.eq.s32.totalorder %s15, 0
    %p83 = por %p81, %p82
    %p84 = scmp.ne.s32.totalorder %s72, %s73
    %p85 = scmp.eq.s32.totalorder %s16, 1
    %p86 = por %p84, %p85
    %p88 = scmp.ne.s32.totalorder %s73, %s87
    %p89 = scmp.eq.s32.totalorder %s16, 0
    %p90 = por %p88, %p89
    %s92 = sadd.s32 %s91, 1
    %p95 = scmp.eq.s32.totalorder %s10, 1
    %p96 = scmp.ne.s32.totalorder %s91, %s93
    %p97 = scmp.eq.s32.totalorder %s10, 0
    %p98 = por %p96, %p97
    %p99 = scmp.ne.s32.totalorder %s91, %s93
    %p100 = scmp.eq.s32.totalorder %s15, 1
    %p101 = por %p99, %p100
    %p102 = scmp.ne.s32.totalorder %s93, %s94
    %p103 = scmp.eq.s32.totalorder %s15, 0
    %p104 = por %p102, %p103
    %p105 = scmp.ne.s32.totalorder %s93, %s94
    %p106 = scmp.eq.s32.totalorder %s16, 1
    %p107 = por %p105, %p106
    %p109 = scmp.ne.s32.totalorder %s94, %s108
    %p110 = scmp.eq.s32.totalorder %s16, 0
    %p111 = por %p109, %p110
    %s112 = ssub.s32 %s10, %s17
    %p113 = scmp.eq.s32.totalorder %s112, 0
    %s115 = sadd.s32 %s114, 1
    %s116 = scalar_select %p113, %s114, %s115
    %p119 = pneg %p113
    %p120 = scmp.eq.s32.totalorder %s10, 1
    %p121 = por %p119, %p120
    %p122 = scmp.ne.s32.totalorder %s114, %s117
    %p123 = scmp.eq.s32.totalorder %s10, 0
    %p124 = por %p122, %p123
    %p125 = scmp.ne.s32.totalorder %s114, %s117
    %p126 = scmp.eq.s32.totalorder %s15, 1
    %p127 = por %p125, %p126
    %p128 = scmp.ne.s32.totalorder %s117, %s118
    %p129 = scmp.eq.s32.totalorder %s15, 0
    %p130 = por %p128, %p129
    %p131 = scmp.ne.s32.totalorder %s117, %s118
    %p132 = scmp.eq.s32.totalorder %s16, 1
    %p133 = por %p131, %p132
    %p135 = scmp.ne.s32.totalorder %s118, %s134
    %p136 = scmp.eq.s32.totalorder %s16, 0
    %p137 = por %p135, %p136
    %p138 = scmp.le.s32.totalorder 1, %s10
    %p139 = scmp.lt.s32.totalorder %s10, 3
    %p140 = pnand %p138, %p139
    %p141 = pneg %p140
    // Predicated region
    $region9: #{conv_block_forward.3} parent=5 // pred_check
      _
    $region10: #{conv_block_forward.3} parent=5 // pred_check_branch
      %143 = sbr.rel (%p140) target = $region12
    $region11: #{conv_block_forward.3} parent=5 // pred_region
      %s144 = ssub.s32 %s10, 1
      // Predicated region
      $region13: #{conv_block_forward.3} parent=11 // pred_check
        %p145 = pneg %p83
      $region14: #{conv_block_forward.3} parent=11 // pred_check_branch
        %147 = sbr.rel (%p145) target = $region16
      $region15: #{conv_block_forward.3} parent=11 // pred_region
        _
      $region16: #{conv_block_forward.3} parent=11 // pred_fallthru
        _
      // Predicated region
      $region17: #{conv_block_forward.3} parent=11 // pred_check
        %p148 = pneg %p104
      $region18: #{conv_block_forward.3} parent=11 // pred_check_branch
        %150 = sbr.rel (%p148) target = $region20
      $region19: #{conv_block_forward.3} parent=11 // pred_region
        _
      $region20: #{conv_block_forward.3} parent=11 // pred_fallthru
        _
    $region12: #{conv_block_forward.3} parent=5 // pred_fallthru
      _
    %p151 = scmp.lt.s32.totalorder %s10, 2
    // Predicated region
    $region21: #{conv_block_forward.3} parent=5 // pred_check
      %p152 = pneg %p151
    $region22: #{conv_block_forward.3} parent=5 // pred_check_branch
      %154 = sbr.rel (%p152) target = $region24
    $region23: #{conv_block_forward.3} parent=5 // pred_region
      // Predicated region
      $region25: #{conv_block_forward.3} parent=23 // pred_check
        %p155 = pneg %p30
      $region26: #{conv_block_forward.3} parent=23 // pred_check_branch
        %157 = sbr.rel (%p155) target = $region28
      $region27: #{conv_block_forward.3} parent=23 // pred_region
        %p158 = scmp.lt.s32.totalorder %s10, 1
        %s159 = scalar_select %p158, %s10, 1
        %s160 = smul.addr %s159, 32
        %s161 = smul.addr %s160, 8
        %s162 = scalar_lea.vmem %s0, %s161
      $region28: #{conv_block_forward.3} parent=23 // pred_fallthru
        _
      // Predicated region
      $region29: #{conv_block_forward.3} parent=23 // pred_check
        %p163 = pneg %p56
      $region30: #{conv_block_forward.3} parent=23 // pred_check_branch
        %165 = sbr.rel (%p163) target = $region32
      $region31: #{conv_block_forward.3} parent=23 // pred_region
        %p166 = scmp.lt.s32.totalorder %s10, 1
        %s167 = scalar_select %p166, %s10, 1
        %s168 = smul.addr %s167, 32
        %s169 = smul.addr %s168, 8
        %s170 = scalar_lea.vmem %s1, %s169
      $region32: #{conv_block_forward.3} parent=23 // pred_fallthru
        _
    $region24: #{conv_block_forward.3} parent=5 // pred_fallthru
      _
    %p171 = scmp.le.s32.totalorder 1, %s10
    %p172 = scmp.lt.s32.totalorder %s10, 3
    %p173 = pnand %p171, %p172
    %p174 = pneg %p173
    // Predicated region
    $region33: #{conv_block_forward.3} parent=5 // pred_check
      _
    $region34: #{conv_block_forward.3} parent=5 // pred_check_branch
      %176 = sbr.rel (%p173) target = $region36
    $region35: #{conv_block_forward.3} parent=5 // pred_region
      %s177 = ssub.s32 %s10, 1
      %p178 = scmp.lt.s32.totalorder %s15, 1
      %s179 = scalar_select %p178, %s15, 1
      %s180 = smul.addr %s179, 32
      %s181 = smul.addr %s180, 8
      %s182 = scalar_lea.vmem %s0, %s181
      %p183 = pneg %p36
      %p184 = pneg %p33
      %p185 = scmp.lt.s32.totalorder %s15, 1
      %s186 = scalar_select %p185, %s15, 1
      %s187 = smul.addr %s186, 32
      %s188 = smul.addr %s187, 8
      %s189 = scalar_lea.vmem %s1, %s188
      %p190 = pneg %p62
      %p191 = pneg %p59
      %p192 = pneg %p83
      %p193 = pneg %p80
      %p194 = pneg %p104
      %p195 = pneg %p101
      %p196 = pneg %p130
      %p197 = pneg %p127
      %p198 = scmp.lt.s32.totalorder %s15, 1
      %s199 = scalar_select %p198, %s15, 1
      %s200 = smul.addr %s199, 32
      %s201 = smul.addr %s200, 8
      %s202 = scalar_lea.vmem %s4, %s201
      %p203 = scmp.lt.s32.totalorder %s15, 1
      %s204 = scalar_select %p203, %s15, 1
      %s205 = smul.addr %s204, 32
      %s206 = smul.addr %s205, 8
      %s207 = scalar_lea.vmem %s0, %s206
      %p208 = scmp.lt.s32.totalorder %s15, 1
      %s209 = scalar_select %p208, %s15, 1
      %s210 = smul.addr %s209, 32
      %s211 = smul.addr %s210, 8
      %s212 = scalar_lea.vmem %s1, %s211
      %p213 = scmp.lt.s32.totalorder %s15, 1
      %s214 = scalar_select %p213, %s15, 1
      %s215 = smul.addr %s214, 32
      %s216 = smul.addr %s215, 8
      %s217 = scalar_lea.vmem %s4, %s216
      %v218 = vld [vmem:[%s2] sm:$0x1]
      %v219 = vld [vmem:[%s3] sm:$0x1]
      %v220 = vld [vmem:[%s207] sm:$0xff]
      %v221 = vld [vmem:[%s207 + $0x8] sm:$0xff]
      %v222 = vld [vmem:[%s207 + $0x10] sm:$0xff]
      %v223 = vld [vmem:[%s207 + $0x18] sm:$0xff]
      %v224 = vld [vmem:[%s207 + $0x20] sm:$0xff]
      %v225 = vld [vmem:[%s207 + $0x28] sm:$0xff]
      %v226 = vld [vmem:[%s207 + $0x30] sm:$0xff]
      %v227 = vld [vmem:[%s207 + $0x38] sm:$0xff]
      %v228 = vld [vmem:[%s207 + $0x40] sm:$0xff]
      %v229 = vld [vmem:[%s207 + $0x48] sm:$0xff]
      %v230 = vld [vmem:[%s207 + $0x50] sm:$0xff]
      %v231 = vld [vmem:[%s207 + $0x58] sm:$0xff]
      %v232 = vld [vmem:[%s207 + $0x60] sm:$0xff]
      %v233 = vld [vmem:[%s207 + $0x68] sm:$0xff]
      %v234 = vld [vmem:[%s207 + $0x70] sm:$0xff]
      %v235 = vld [vmem:[%s207 + $0x78] sm:$0xff]
      %v236 = vld [vmem:[%s207 + $0x80] sm:$0xff]
      %v237 = vld [vmem:[%s207 + $0x88] sm:$0xff]
      %v238 = vld [vmem:[%s207 + $0x90] sm:$0xff]
      %v239 = vld [vmem:[%s207 + $0x98] sm:$0xff]
      %v240 = vld [vmem:[%s207 + $0xa0] sm:$0xff]
      %v241 = vld [vmem:[%s207 + $0xa8] sm:$0xff]
      %v242 = vld [vmem:[%s207 + $0xb0] sm:$0xff]
      %v243 = vld [vmem:[%s207 + $0xb8] sm:$0xff]
      %v244 = vld [vmem:[%s207 + $0xc0] sm:$0xff]
      %v245 = vld [vmem:[%s207 + $0xc8] sm:$0xff]
      %v246 = vld [vmem:[%s207 + $0xd0] sm:$0xff]
      %v247 = vld [vmem:[%s207 + $0xd8] sm:$0xff]
      %v248 = vld [vmem:[%s207 + $0xe0] sm:$0xff]
      %v249 = vld [vmem:[%s207 + $0xe8] sm:$0xff]
      %v250 = vld [vmem:[%s207 + $0xf0] sm:$0xff]
      %v251 = vld [vmem:[%s207 + $0xf8] sm:$0xff]
      %v252 = vld [vmem:[%s212] sm:$0xff]
      %v253 = vld [vmem:[%s212 + $0x8] sm:$0xff]
      %v254 = vld [vmem:[%s212 + $0x10] sm:$0xff]
      %v255 = vld [vmem:[%s212 + $0x18] sm:$0xff]
      %v256 = vld [vmem:[%s212 + $0x20] sm:$0xff]
      %v257 = vld [vmem:[%s212 + $0x28] sm:$0xff]
      %v258 = vld [vmem:[%s212 + $0x30] sm:$0xff]
      %v259 = vld [vmem:[%s212 + $0x38] sm:$0xff]
      %v260 = vld [vmem:[%s212 + $0x40] sm:$0xff]
      %v261 = vld [vmem:[%s212 + $0x48] sm:$0xff]
      %v262 = vld [vmem:[%s212 + $0x50] sm:$0xff]
      %v263 = vld [vmem:[%s212 + $0x58] sm:$0xff]
      %v264 = vld [vmem:[%s212 + $0x60] sm:$0xff]
      %v265 = vld [vmem:[%s212 + $0x68] sm:$0xff]
      %v266 = vld [vmem:[%s212 + $0x70] sm:$0xff]
      %v267 = vld [vmem:[%s212 + $0x78] sm:$0xff]
      %v268 = vld [vmem:[%s212 + $0x80] sm:$0xff]
      %v269 = vld [vmem:[%s212 + $0x88] sm:$0xff]
      %v270 = vld [vmem:[%s212 + $0x90] sm:$0xff]
      %v271 = vld [vmem:[%s212 + $0x98] sm:$0xff]
      %v272 = vld [vmem:[%s212 + $0xa0] sm:$0xff]
      %v273 = vld [vmem:[%s212 + $0xa8] sm:$0xff]
      %v274 = vld [vmem:[%s212 + $0xb0] sm:$0xff]
      %v275 = vld [vmem:[%s212 + $0xb8] sm:$0xff]
      %v276 = vld [vmem:[%s212 + $0xc0] sm:$0xff]
      %v277 = vld [vmem:[%s212 + $0xc8] sm:$0xff]
      %v278 = vld [vmem:[%s212 + $0xd0] sm:$0xff]
      %v279 = vld [vmem:[%s212 + $0xd8] sm:$0xff]
      %v280 = vld [vmem:[%s212 + $0xe0] sm:$0xff]
      %v281 = vld [vmem:[%s212 + $0xe8] sm:$0xff]
      %v282 = vld [vmem:[%s212 + $0xf0] sm:$0xff]
      %v283 = vld [vmem:[%s212 + $0xf8] sm:$0xff]
      %v285 = vlaneseq
      %v286 = vshrl.u32 %v285, 7
      %v287 = vsub.s32 0, %v286
      %v288 = vrot.slane %v218, %v287
      %v290 = vmul.f32 %v220, %v288
      %v291 = vmul.f32 %v221, %v288
      %v292 = vmul.f32 %v222, %v288
      %v293 = vmul.f32 %v223, %v288
      %v294 = vmul.f32 %v224, %v288
      %v295 = vmul.f32 %v225, %v288
      %v296 = vmul.f32 %v226, %v288
      %v297 = vmul.f32 %v227, %v288
      %v298 = vmul.f32 %v228, %v288
      %v299 = vmul.f32 %v229, %v288
      %v300 = vmul.f32 %v230, %v288
      %v301 = vmul.f32 %v231, %v288
      %v302 = vmul.f32 %v232, %v288
      %v303 = vmul.f32 %v233, %v288
      %v304 = vmul.f32 %v234, %v288
      %v305 = vmul.f32 %v235, %v288
      %v306 = vmul.f32 %v236, %v288
      %v307 = vmul.f32 %v237, %v288
      %v308 = vmul.f32 %v238, %v288
      %v309 = vmul.f32 %v239, %v288
      %v310 = vmul.f32 %v240, %v288
      %v311 = vmul.f32 %v241, %v288
      %v312 = vmul.f32 %v242, %v288
      %v313 = vmul.f32 %v243, %v288
      %v314 = vmul.f32 %v244, %v288
      %v315 = vmul.f32 %v245, %v288
      %v316 = vmul.f32 %v246, %v288
      %v317 = vmul.f32 %v247, %v288
      %v318 = vmul.f32 %v248, %v288
      %v319 = vmul.f32 %v249, %v288
      %v320 = vmul.f32 %v250, %v288
      %v321 = vmul.f32 %v251, %v288
      %v323 = vlaneseq
      %v324 = vshrl.u32 %v323, 7
      %v325 = vsub.s32 0, %v324
      %v326 = vrot.slane %v219, %v325
      %v328 = vadd.f32 %v290, %v326
      %v329 = vadd.f32 %v291, %v326
      %v330 = vadd.f32 %v292, %v326
      %v331 = vadd.f32 %v293, %v326
      %v332 = vadd.f32 %v294, %v326
      %v333 = vadd.f32 %v295, %v326
      %v334 = vadd.f32 %v296, %v326
      %v335 = vadd.f32 %v297, %v326
      %v336 = vadd.f32 %v298, %v326
      %v337 = vadd.f32 %v299, %v326
      %v338 = vadd.f32 %v300, %v326
      %v339 = vadd.f32 %v301, %v326
      %v340 = vadd.f32 %v302, %v326
      %v341 = vadd.f32 %v303, %v326
      %v342 = vadd.f32 %v304, %v326
      %v343 = vadd.f32 %v305, %v326
      %v344 = vadd.f32 %v306, %v326
      %v345 = vadd.f32 %v307, %v326
      %v346 = vadd.f32 %v308, %v326
      %v347 = vadd.f32 %v309, %v326
      %v348 = vadd.f32 %v310, %v326
      %v349 = vadd.f32 %v311, %v326
      %v350 = vadd.f32 %v312, %v326
      %v351 = vadd.f32 %v313, %v326
      %v352 = vadd.f32 %v314, %v326
      %v353 = vadd.f32 %v315, %v326
      %v354 = vadd.f32 %v316, %v326
      %v355 = vadd.f32 %v317, %v326
      %v356 = vadd.f32 %v318, %v326
      %v357 = vadd.f32 %v319, %v326
      %v358 = vadd.f32 %v320, %v326
      %v359 = vadd.f32 %v321, %v326
      %v360 = vmax.f32 %v328, 0.0
      %v361 = vmax.f32 %v329, 0.0
      %v362 = vmax.f32 %v330, 0.0
      %v363 = vmax.f32 %v331, 0.0
      %v364 = vmax.f32 %v332, 0.0
      %v365 = vmax.f32 %v333, 0.0
      %v366 = vmax.f32 %v334, 0.0
      %v367 = vmax.f32 %v335, 0.0
      %v368 = vmax.f32 %v336, 0.0
      %v369 = vmax.f32 %v337, 0.0
      %v370 = vmax.f32 %v338, 0.0
      %v371 = vmax.f32 %v339, 0.0
      %v372 = vmax.f32 %v340, 0.0
      %v373 = vmax.f32 %v341, 0.0
      %v374 = vmax.f32 %v342, 0.0
      %v375 = vmax.f32 %v343, 0.0
      %v376 = vmax.f32 %v344, 0.0
      %v377 = vmax.f32 %v345, 0.0
      %v378 = vmax.f32 %v346, 0.0
      %v379 = vmax.f32 %v347, 0.0
      %v380 = vmax.f32 %v348, 0.0
      %v381 = vmax.f32 %v349, 0.0
      %v382 = vmax.f32 %v350, 0.0
      %v383 = vmax.f32 %v351, 0.0
      %v384 = vmax.f32 %v352, 0.0
      %v385 = vmax.f32 %v353, 0.0
      %v386 = vmax.f32 %v354, 0.0
      %v387 = vmax.f32 %v355, 0.0
      %v388 = vmax.f32 %v356, 0.0
      %v389 = vmax.f32 %v357, 0.0
      %v390 = vmax.f32 %v358, 0.0
      %v391 = vmax.f32 %v359, 0.0
      %vm392 = vcmask 31744
      %393 = vst.msk [vmem:[%s217] sm:$0xff] %vm392, %v360
      %394 = vst.msk [vmem:[%s217 + $0x8] sm:$0xff] %vm392, %v361
      %395 = vst.msk [vmem:[%s217 + $0x10] sm:$0xff] %vm392, %v362
      %396 = vst.msk [vmem:[%s217 + $0x18] sm:$0xff] %vm392, %v363
      %397 = vst.msk [vmem:[%s217 + $0x20] sm:$0xff] %vm392, %v364
      %398 = vst.msk [vmem:[%s217 + $0x28] sm:$0xff] %vm392, %v365
      %399 = vst.msk [vmem:[%s217 + $0x30] sm:$0xff] %vm392, %v366
      %400 = vst.msk [vmem:[%s217 + $0x38] sm:$0xff] %vm392, %v367
      %401 = vst.msk [vmem:[%s217 + $0x40] sm:$0xff] %vm392, %v368
      %402 = vst.msk [vmem:[%s217 + $0x48] sm:$0xff] %vm392, %v369
      %403 = vst.msk [vmem:[%s217 + $0x50] sm:$0xff] %vm392, %v370
      %404 = vst.msk [vmem:[%s217 + $0x58] sm:$0xff] %vm392, %v371
      %405 = vst.msk [vmem:[%s217 + $0x60] sm:$0xff] %vm392, %v372
      %406 = vst.msk [vmem:[%s217 + $0x68] sm:$0xff] %vm392, %v373
      %407 = vst.msk [vmem:[%s217 + $0x70] sm:$0xff] %vm392, %v374
      %408 = vst.msk [vmem:[%s217 + $0x78] sm:$0xff] %vm392, %v375
      %409 = vst.msk [vmem:[%s217 + $0x80] sm:$0xff] %vm392, %v376
      %410 = vst.msk [vmem:[%s217 + $0x88] sm:$0xff] %vm392, %v377
      %411 = vst.msk [vmem:[%s217 + $0x90] sm:$0xff] %vm392, %v378
      %412 = vst.msk [vmem:[%s217 + $0x98] sm:$0xff] %vm392, %v379
      %413 = vst.msk [vmem:[%s217 + $0xa0] sm:$0xff] %vm392, %v380
      %414 = vst.msk [vmem:[%s217 + $0xa8] sm:$0xff] %vm392, %v381
      %415 = vst.msk [vmem:[%s217 + $0xb0] sm:$0xff] %vm392, %v382
      %416 = vst.msk [vmem:[%s217 + $0xb8] sm:$0xff] %vm392, %v383
      %417 = vst.msk [vmem:[%s217 + $0xc0] sm:$0xff] %vm392, %v384
      %418 = vst.msk [vmem:[%s217 + $0xc8] sm:$0xff] %vm392, %v385
      %419 = vst.msk [vmem:[%s217 + $0xd0] sm:$0xff] %vm392, %v386
      %420 = vst.msk [vmem:[%s217 + $0xd8] sm:$0xff] %vm392, %v387
      %421 = vst.msk [vmem:[%s217 + $0xe0] sm:$0xff] %vm392, %v388
      %422 = vst.msk [vmem:[%s217 + $0xe8] sm:$0xff] %vm392, %v389
      %423 = vst.msk [vmem:[%s217 + $0xf0] sm:$0xff] %vm392, %v390
      %424 = vst.msk [vmem:[%s217 + $0xf8] sm:$0xff] %vm392, %v391
      %425 = vrot.lane.b32.xlu0 %v288, 124
      %v426 = vpop.permute.xlu0 %425
      %v428 = vmul.f32 %v252, %v426
      %v429 = vmul.f32 %v253, %v426
      %v430 = vmul.f32 %v254, %v426
      %v431 = vmul.f32 %v255, %v426
      %v432 = vmul.f32 %v256, %v426
      %v433 = vmul.f32 %v257, %v426
      %v434 = vmul.f32 %v258, %v426
      %v435 = vmul.f32 %v259, %v426
      %v436 = vmul.f32 %v260, %v426
      %v437 = vmul.f32 %v261, %v426
      %v438 = vmul.f32 %v262, %v426
      %v439 = vmul.f32 %v263, %v426
      %v440 = vmul.f32 %v264, %v426
      %v441 = vmul.f32 %v265, %v426
      %v442 = vmul.f32 %v266, %v426
      %v443 = vmul.f32 %v267, %v426
      %v444 = vmul.f32 %v268, %v426
      %v445 = vmul.f32 %v269, %v426
      %v446 = vmul.f32 %v270, %v426
      %v447 = vmul.f32 %v271, %v426
      %v448 = vmul.f32 %v272, %v426
      %v449 = vmul.f32 %v273, %v426
      %v450 = vmul.f32 %v274, %v426
      %v451 = vmul.f32 %v275, %v426
      %v452 = vmul.f32 %v276, %v426
      %v453 = vmul.f32 %v277, %v426
      %v454 = vmul.f32 %v278, %v426
      %v455 = vmul.f32 %v279, %v426
      %v456 = vmul.f32 %v280, %v426
      %v457 = vmul.f32 %v281, %v426
      %v458 = vmul.f32 %v282, %v426
      %v459 = vmul.f32 %v283, %v426
      %460 = vrot.lane.b32.xlu0 %v326, 124
      %v461 = vpop.permute.xlu0 %460
      %v463 = vadd.f32 %v428, %v461
      %v464 = vadd.f32 %v429, %v461
      %v465 = vadd.f32 %v430, %v461
      %v466 = vadd.f32 %v431, %v461
      %v467 = vadd.f32 %v432, %v461
      %v468 = vadd.f32 %v433, %v461
      %v469 = vadd.f32 %v434, %v461
      %v470 = vadd.f32 %v435, %v461
      %v471 = vadd.f32 %v436, %v461
      %v472 = vadd.f32 %v437, %v461
      %v473 = vadd.f32 %v438, %v461
      %v474 = vadd.f32 %v439, %v461
      %v475 = vadd.f32 %v440, %v461
      %v476 = vadd.f32 %v441, %v461
      %v477 = vadd.f32 %v442, %v461
      %v478 = vadd.f32 %v443, %v461
      %v479 = vadd.f32 %v444, %v461
      %v480 = vadd.f32 %v445, %v461
      %v481 = vadd.f32 %v446, %v461
      %v482 = vadd.f32 %v447, %v461
      %v483 = vadd.f32 %v448, %v461
      %v484 = vadd.f32 %v449, %v461
      %v485 = vadd.f32 %v450, %v461
      %v486 = vadd.f32 %v451, %v461
      %v487 = vadd.f32 %v452, %v461
      %v488 = vadd.f32 %v453, %v461
      %v489 = vadd.f32 %v454, %v461
      %v490 = vadd.f32 %v455, %v461
      %v491 = vadd.f32 %v456, %v461
      %v492 = vadd.f32 %v457, %v461
      %v493 = vadd.f32 %v458, %v461
      %v494 = vadd.f32 %v459, %v461
      %v495 = vmax.f32 %v463, 0.0
      %v496 = vmax.f32 %v464, 0.0
      %v497 = vmax.f32 %v465, 0.0
      %v498 = vmax.f32 %v466, 0.0
      %v499 = vmax.f32 %v467, 0.0
      %v500 = vmax.f32 %v468, 0.0
      %v501 = vmax.f32 %v469, 0.0
      %v502 = vmax.f32 %v470, 0.0
      %v503 = vmax.f32 %v471, 0.0
      %v504 = vmax.f32 %v472, 0.0
      %v505 = vmax.f32 %v473, 0.0
      %v506 = vmax.f32 %v474, 0.0
      %v507 = vmax.f32 %v475, 0.0
      %v508 = vmax.f32 %v476, 0.0
      %v509 = vmax.f32 %v477, 0.0
      %v510 = vmax.f32 %v478, 0.0
      %v511 = vmax.f32 %v479, 0.0
      %v512 = vmax.f32 %v480, 0.0
      %v513 = vmax.f32 %v481, 0.0
      %v514 = vmax.f32 %v482, 0.0
      %v515 = vmax.f32 %v483, 0.0
      %v516 = vmax.f32 %v484, 0.0
      %v517 = vmax.f32 %v485, 0.0
      %v518 = vmax.f32 %v486, 0.0
      %v519 = vmax.f32 %v487, 0.0
      %v520 = vmax.f32 %v488, 0.0
      %v521 = vmax.f32 %v489, 0.0
      %v522 = vmax.f32 %v490, 0.0
      %v523 = vmax.f32 %v491, 0.0
      %v524 = vmax.f32 %v492, 0.0
      %v525 = vmax.f32 %v493, 0.0
      %v526 = vmax.f32 %v494, 0.0
      %559 = vrot.lane.b32.xlu0 %v495, 4
      %v560 = vpop.permute.xlu0 %559
      %561 = vrot.lane.b32.xlu0 %v496, 4
      %v562 = vpop.permute.xlu0 %561
      %563 = vrot.lane.b32.xlu0 %v497, 4
      %v564 = vpop.permute.xlu0 %563
      %565 = vrot.lane.b32.xlu0 %v498, 4
      %v566 = vpop.permute.xlu0 %565
      %567 = vrot.lane.b32.xlu0 %v499, 4
      %v568 = vpop.permute.xlu0 %567
      %569 = vrot.lane.b32.xlu0 %v500, 4
      %v570 = vpop.permute.xlu0 %569
      %571 = vrot.lane.b32.xlu0 %v501, 4
      %v572 = vpop.permute.xlu0 %571
      %573 = vrot.lane.b32.xlu0 %v502, 4
      %v574 = vpop.permute.xlu0 %573
      %575 = vrot.lane.b32.xlu0 %v503, 4
      %v576 = vpop.permute.xlu0 %575
      %577 = vrot.lane.b32.xlu0 %v504, 4
      %v578 = vpop.permute.xlu0 %577
      %579 = vrot.lane.b32.xlu0 %v505, 4
      %v580 = vpop.permute.xlu0 %579
      %581 = vrot.lane.b32.xlu0 %v506, 4
      %v582 = vpop.permute.xlu0 %581
      %583 = vrot.lane.b32.xlu0 %v507, 4
      %v584 = vpop.permute.xlu0 %583
      %585 = vrot.lane.b32.xlu0 %v508, 4
      %v586 = vpop.permute.xlu0 %585
      %587 = vrot.lane.b32.xlu0 %v509, 4
      %v588 = vpop.permute.xlu0 %587
      %589 = vrot.lane.b32.xlu0 %v510, 4
      %v590 = vpop.permute.xlu0 %589
      %591 = vrot.lane.b32.xlu0 %v511, 4
      %v592 = vpop.permute.xlu0 %591
      %593 = vrot.lane.b32.xlu0 %v512, 4
      %v594 = vpop.permute.xlu0 %593
      %595 = vrot.lane.b32.xlu0 %v513, 4
      %v596 = vpop.permute.xlu0 %595
      %597 = vrot.lane.b32.xlu0 %v514, 4
      %v598 = vpop.permute.xlu0 %597
      %599 = vrot.lane.b32.xlu0 %v515, 4
      %v600 = vpop.permute.xlu0 %599
      %601 = vrot.lane.b32.xlu0 %v516, 4
      %v602 = vpop.permute.xlu0 %601
      %603 = vrot.lane.b32.xlu0 %v517, 4
      %v604 = vpop.permute.xlu0 %603
      %605 = vrot.lane.b32.xlu0 %v518, 4
      %v606 = vpop.permute.xlu0 %605
      %607 = vrot.lane.b32.xlu0 %v519, 4
      %v608 = vpop.permute.xlu0 %607
      %609 = vrot.lane.b32.xlu0 %v520, 4
      %v610 = vpop.permute.xlu0 %609
      %611 = vrot.lane.b32.xlu0 %v521, 4
      %v612 = vpop.permute.xlu0 %611
      %613 = vrot.lane.b32.xlu0 %v522, 4
      %v614 = vpop.permute.xlu0 %613
      %615 = vrot.lane.b32.xlu0 %v523, 4
      %v616 = vpop.permute.xlu0 %615
      %617 = vrot.lane.b32.xlu0 %v524, 4
      %v618 = vpop.permute.xlu0 %617
      %619 = vrot.lane.b32.xlu0 %v525, 4
      %v620 = vpop.permute.xlu0 %619
      %621 = vrot.lane.b32.xlu0 %v526, 4
      %v622 = vpop.permute.xlu0 %621
      %vm655 = vcmask 97312
      %656 = vst.msk [vmem:[%s217] sm:$0xff] %vm655, %v560
      %657 = vst.msk [vmem:[%s217 + $0x8] sm:$0xff] %vm655, %v562
      %658 = vst.msk [vmem:[%s217 + $0x10] sm:$0xff] %vm655, %v564
      %659 = vst.msk [vmem:[%s217 + $0x18] sm:$0xff] %vm655, %v566
      %660 = vst.msk [vmem:[%s217 + $0x20] sm:$0xff] %vm655, %v568
      %661 = vst.msk [vmem:[%s217 + $0x28] sm:$0xff] %vm655, %v570
      %662 = vst.msk [vmem:[%s217 + $0x30] sm:$0xff] %vm655, %v572
      %663 = vst.msk [vmem:[%s217 + $0x38] sm:$0xff] %vm655, %v574
      %664 = vst.msk [vmem:[%s217 + $0x40] sm:$0xff] %vm655, %v576
      %665 = vst.msk [vmem:[%s217 + $0x48] sm:$0xff] %vm655, %v578
      %666 = vst.msk [vmem:[%s217 + $0x50] sm:$0xff] %vm655, %v580
      %667 = vst.msk [vmem:[%s217 + $0x58] sm:$0xff] %vm655, %v582
      %668 = vst.msk [vmem:[%s217 + $0x60] sm:$0xff] %vm655, %v584
      %669 = vst.msk [vmem:[%s217 + $0x68] sm:$0xff] %vm655, %v586
      %670 = vst.msk [vmem:[%s217 + $0x70] sm:$0xff] %vm655, %v588
      %671 = vst.msk [vmem:[%s217 + $0x78] sm:$0xff] %vm655, %v590
      %672 = vst.msk [vmem:[%s217 + $0x80] sm:$0xff] %vm655, %v592
      %673 = vst.msk [vmem:[%s217 + $0x88] sm:$0xff] %vm655, %v594
      %674 = vst.msk [vmem:[%s217 + $0x90] sm:$0xff] %vm655, %v596
      %675 = vst.msk [vmem:[%s217 + $0x98] sm:$0xff] %vm655, %v598
      %676 = vst.msk [vmem:[%s217 + $0xa0] sm:$0xff] %vm655, %v600
      %677 = vst.msk [vmem:[%s217 + $0xa8] sm:$0xff] %vm655, %v602
      %678 = vst.msk [vmem:[%s217 + $0xb0] sm:$0xff] %vm655, %v604
      %679 = vst.msk [vmem:[%s217 + $0xb8] sm:$0xff] %vm655, %v606
      %680 = vst.msk [vmem:[%s217 + $0xc0] sm:$0xff] %vm655, %v608
      %681 = vst.msk [vmem:[%s217 + $0xc8] sm:$0xff] %vm655, %v610
      %682 = vst.msk [vmem:[%s217 + $0xd0] sm:$0xff] %vm655, %v612
      %683 = vst.msk [vmem:[%s217 + $0xd8] sm:$0xff] %vm655, %v614
      %684 = vst.msk [vmem:[%s217 + $0xe0] sm:$0xff] %vm655, %v616
      %685 = vst.msk [vmem:[%s217 + $0xe8] sm:$0xff] %vm655, %v618
      %686 = vst.msk [vmem:[%s217 + $0xf0] sm:$0xff] %vm655, %v620
      %687 = vst.msk [vmem:[%s217 + $0xf8] sm:$0xff] %vm655, %v622
      %p688 = scmp.lt.s32.totalorder %s15, 1
      %s689 = scalar_select %p688, %s15, 1
      %s690 = smul.addr %s689, 32
      %s691 = smul.addr %s690, 8
      %s692 = scalar_lea.vmem %s4, %s691
      // Predicated region
      $region37: #{conv_block_forward.3} parent=35 // pred_check
        %p693 = pneg %p127
      $region38: #{conv_block_forward.3} parent=35 // pred_check_branch
        %695 = sbr.rel (%p693) target = $region40
      $region39: #{conv_block_forward.3} parent=35 // pred_region
        _
      $region40: #{conv_block_forward.3} parent=35 // pred_fallthru
        _
    $region36: #{conv_block_forward.3} parent=5 // pred_fallthru
      _
    %p696 = scmp.le.s32.totalorder 2, %s10
    // Predicated region
    $region41: #{conv_block_forward.3} parent=5 // pred_check
      %p697 = pneg %p696
    $region42: #{conv_block_forward.3} parent=5 // pred_check_branch
      %699 = sbr.rel (%p697) target = $region44
    $region43: #{conv_block_forward.3} parent=5 // pred_region
      %s700 = ssub.s32 %s10, 2
      // Predicated region
      $region45: #{conv_block_forward.3} parent=43 // pred_check
        %p701 = pneg %p133
      $region46: #{conv_block_forward.3} parent=43 // pred_check_branch
        %703 = sbr.rel (%p701) target = $region48
      $region47: #{conv_block_forward.3} parent=43 // pred_region
        %p704 = scmp.lt.s32.totalorder %s16, 1
        %s705 = scalar_select %p704, %s16, 1
        %s706 = smul.addr %s705, 32
        %s707 = smul.addr %s706, 8
        %s708 = scalar_lea.vmem %s4, %s707
      $region48: #{conv_block_forward.3} parent=43 // pred_fallthru
        _
    $region44: #{conv_block_forward.3} parent=5 // pred_fallthru
      _
  $region6: #{conv_block_forward.3} parent=0 // loop_footer
    %s14 = sadd.s32 1, %s10
  $region7: #{conv_block_forward.3} parent=0 // loop_footer_branch
    %9 = sbr.rel target = $region3
  $region8: #{conv_block_forward.3} parent=0 // loop_exit
    _

// kernel: conv_block_forward.2
$region0: #{conv_block_forward.2}
  #allocation0 [shape = 'u32[]', space=smem, size = 0x4, offset = 0x4, fixed_abs, tag = 'smem constant byte address 0x4 - core index']
  #allocation1 [shape = 'u32[144,128]{1,0:T(1,128)}', space=vmem, size = 0x12000, scoped, tag = 'internal scratch']
  #allocation2 [shape = 'f32[18,18,4]{2,1,0:T(8,128)}', space=vmem, size = 0x36000, scoped, tag = 'scratch operand']
  %s0 = inlined_call_operand.vmem [shape: f32[2,16,16,4], index: 0, kind: input, shape index: {}]
  %s1 = inlined_call_operand.vmem [shape: f32[3,3,4,8], index: 1, kind: input, shape index: {}]
  %s2 = inlined_call_operand.vmem [shape: f32[2,16,16,8], index: 2, kind: output, shape index: {0}]
  %s3 = inlined_call_operand.vmem [shape: f32[2,2,12], index: 3, kind: output, shape index: {1}]
  %4 = xla_tuple %s2, %s3
  %s5 = sld [smem:[#allocation0]]
  $region49: #{conv_block_forward.2} parent=0
    _
  %s7 = ssub.s32 1, %s5
  %s8 = scalar_select 0, %s7, %s5
  loop: start=0, step=1, limit=4
  $region2: #{conv_block_forward.2} parent=0 // loop_pre_header
    _
  $region3: #{conv_block_forward.2} parent=0 // loop_header
    %s10 = sphi 0, %s14
    %p11 = scmp.ge.s32.totalorder %s10, 4
    %s20 = sphi 0, %s22
    %s23 = sphi 0, %s20
    %s24 = sphi 0, %s23
    %s40 = sphi 0, %s24
    %s44 = sphi 0, %s44
    %s46 = sphi 0, %s44
    %s47 = sphi 0, %s46
    %s61 = sphi 0, %s47
    %s67 = sphi 0, %s69
    %s70 = sphi 0, %s67
    %s71 = sphi 0, %s70
    %s87 = sphi 0, %s71
    %s93 = sphi 0, %s95
    %s96 = sphi 0, %s93
    %s97 = sphi 0, %s96
    %s113 = sphi 0, %s97
  $region4: #{conv_block_forward.2} parent=0 // loop_header_branch
    %13 = sbr.rel (%p11) target = $region8
  $region5: #{conv_block_forward.2} parent=0 // loop_body
    %s15 = ssub.s32 %s10, 1
    %s16 = ssub.s32 %s10, 2
    %s17 = sadd.s32 %s10, 1
    %s18 = ssub.s32 %s10, %s17
    %p19 = scmp.eq.s32.totalorder %s18, 0
    %s21 = sadd.s32 %s20, 1
    %s22 = scalar_select %p19, %s20, %s21
    %p25 = pneg %p19
    %p26 = scmp.eq.s32.totalorder %s10, 1
    %p27 = por %p25, %p26
    %p28 = scmp.ne.s32.totalorder %s20, %s23
    %p29 = scmp.eq.s32.totalorder %s10, 0
    %p30 = por %p28, %p29
    %p31 = scmp.ne.s32.totalorder %s20, %s23
    %p32 = scmp.eq.s32.totalorder %s15, 1
    %p33 = por %p31, %p32
    %p34 = scmp.ne.s32.totalorder %s23, %s24
    %p35 = scmp.eq.s32.totalorder %s15, 0
    %p36 = por %p34, %p35
    %p37 = scmp.ne.s32.totalorder %s23, %s24
    %p38 = scmp.eq.s32.totalorder %s16, 1
    %p39 = por %p37, %p38
    %p41 = scmp.ne.s32.totalorder %s24, %s40
    %p42 = scmp.eq.s32.totalorder %s16, 0
    %p43 = por %p41, %p42
    %s45 = sadd.s32 %s44, 1
    %p48 = scmp.eq.s32.totalorder %s10, 1
    %p49 = scmp.ne.s32.totalorder %s44, %s46
    %p50 = scmp.eq.s32.totalorder %s10, 0
    %p51 = por %p49, %p50
    %p52 = scmp.ne.s32.totalorder %s44, %s46
    %p53 = scmp.eq.s32.totalorder %s15, 1
    %p54 = por %p52, %p53
    %p55 = scmp.ne.s32.totalorder %s46, %s47
    %p56 = scmp.eq.s32.totalorder %s15, 0
    %p57 = por %p55, %p56
    %p58 = scmp.ne.s32.totalorder %s46, %s47
    %p59 = scmp.eq.s32.totalorder %s16, 1
    %p60 = por %p58, %p59
    %p62 = scmp.ne.s32.totalorder %s47, %s61
    %p63 = scmp.eq.s32.totalorder %s16, 0
    %p64 = por %p62, %p63
    %s65 = ssub.s32 %s10, %s17
    %p66 = scmp.eq.s32.totalorder %s65, 0
    %s68 = sadd.s32 %s67, 1
    %s69 = scalar_select %p66, %s67, %s68
    %p72 = pneg %p66
    %p73 = scmp.eq.s32.totalorder %s10, 1
    %p74 = por %p72, %p73
    %p75 = scmp.ne.s32.totalorder %s67, %s70
    %p76 = scmp.eq.s32.totalorder %s10, 0
    %p77 = por %p75, %p76
    %p78 = scmp.ne.s32.totalorder %s67, %s70
    %p79 = scmp.eq.s32.totalorder %s15, 1
    %p80 = por %p78, %p79
    %p81 = scmp.ne.s32.totalorder %s70, %s71
    %p82 = scmp.eq.s32.totalorder %s15, 0
    %p83 = por %p81, %p82
    %p84 = scmp.ne.s32.totalorder %s70, %s71
    %p85 = scmp.eq.s32.totalorder %s16, 1
    %p86 = por %p84, %p85
    %p88 = scmp.ne.s32.totalorder %s71, %s87
    %p89 = scmp.eq.s32.totalorder %s16, 0
    %p90 = por %p88, %p89
    %s91 = ssub.s32 %s10, %s17
    %p92 = scmp.eq.s32.totalorder %s91, 0
    %s94 = sadd.s32 %s93, 1
    %s95 = scalar_select %p92, %s93, %s94
    %p98 = pneg %p92
    %p99 = scmp.eq.s32.totalorder %s10, 1
    %p100 = por %p98, %p99
    %p101 = scmp.ne.s32.totalorder %s93, %s96
    %p102 = scmp.eq.s32.totalorder %s10, 0
    %p103 = por %p101, %p102
    %p104 = scmp.ne.s32.totalorder %s93, %s96
    %p105 = scmp.eq.s32.totalorder %s15, 1
    %p106 = por %p104, %p105
    %p107 = scmp.ne.s32.totalorder %s96, %s97
    %p108 = scmp.eq.s32.totalorder %s15, 0
    %p109 = por %p107, %p108
    %p110 = scmp.ne.s32.totalorder %s96, %s97
    %p111 = scmp.eq.s32.totalorder %s16, 1
    %p112 = por %p110, %p111
    %p114 = scmp.ne.s32.totalorder %s97, %s113
    %p115 = scmp.eq.s32.totalorder %s16, 0
    %p116 = por %p114, %p115
    %p117 = scmp.le.s32.totalorder 1, %s10
    %p118 = scmp.lt.s32.totalorder %s10, 3
    %p119 = pnand %p117, %p118
    %p120 = pneg %p119
    // Predicated region
    $region9: #{conv_block_forward.2} parent=5 // pred_check
      _
    $region10: #{conv_block_forward.2} parent=5 // pred_check_branch
      %122 = sbr.rel (%p119) target = $region12
    $region11: #{conv_block_forward.2} parent=5 // pred_region
      %s123 = ssub.s32 %s10, 1
      // Predicated region
      $region13: #{conv_block_forward.2} parent=11 // pred_check
        %p124 = pneg %p57
      $region14: #{conv_block_forward.2} parent=11 // pred_check_branch
        %126 = sbr.rel (%p124) target = $region16
      $region15: #{conv_block_forward.2} parent=11 // pred_region
        _
      $region16: #{conv_block_forward.2} parent=11 // pred_fallthru
        _
    $region12: #{conv_block_forward.2} parent=5 // pred_fallthru
      _
    %p127 = scmp.lt.s32.totalorder %s10, 2
    // Predicated region
    $region17: #{conv_block_forward.2} parent=5 // pred_check
      %p128 = pneg %p127
    $region18: #{conv_block_forward.2} parent=5 // pred_check_branch
      %130 = sbr.rel (%p128) target = $region20
    $region19: #{conv_block_forward.2} parent=5 // pred_region
      // Predicated region
      $region21: #{conv_block_forward.2} parent=19 // pred_check
        %p131 = pneg %p30
      $region22: #{conv_block_forward.2} parent=19 // pred_check_branch
        %133 = sbr.rel (%p131) target = $region24
      $region23: #{conv_block_forward.2} parent=19 // pred_region
        %p134 = scmp.lt.s32.totalorder %s10, 1
        %s135 = scalar_select %p134, %s10, 1
        %s136 = smul.addr %s135, 32
        %s137 = smul.addr %s136, 8
        %s138 = scalar_lea.vmem %s0, %s137
      $region24: #{conv_block_forward.2} parent=19 // pred_fallthru
        _
    $region20: #{conv_block_forward.2} parent=5 // pred_fallthru
      _
    %p139 = scmp.le.s32.totalorder 1, %s10
    %p140 = scmp.lt.s32.totalorder %s10, 3
    %p141 = pnand %p139, %p140
    %p142 = pneg %p141
    // Predicated region
    $region25: #{conv_block_forward.2} parent=5 // pred_check
      _
    $region26: #{conv_block_forward.2} parent=5 // pred_check_branch
      %144 = sbr.rel (%p141) target = $region28
    $region27: #{conv_block_forward.2} parent=5 // pred_region
      %s145 = ssub.s32 %s10, 1
      %p146 = scmp.lt.s32.totalorder %s15, 1
      %s147 = scalar_select %p146, %s15, 1
      %s148 = smul.addr %s147, 32
      %s149 = smul.addr %s148, 8
      %s150 = scalar_lea.vmem %s0, %s149
      %p151 = pneg %p36
      %p152 = pneg %p33
      %p153 = pneg %p57
      %p154 = pneg %p54
      %p155 = pneg %p83
      %p156 = pneg %p80
      %p157 = scmp.lt.s32.totalorder %s15, 1
      %s158 = scalar_select %p157, %s15, 1
      %s159 = smul.addr %s158, 32
      %s160 = smul.addr %s159, 8
      %s161 = scalar_lea.vmem %s2, %s160
      %p162 = pneg %p109
      %p163 = pneg %p106
      %p164 = scmp.lt.s32.totalorder %s15, 1
      %s165 = scalar_select %p164, %s15, 1
      %s166 = smul.addr %s165, 2
      %s167 = scalar_lea.vmem %s3, %s166
      %p168 = scmp.lt.s32.totalorder %s15, 1
      %s169 = scalar_select %p168, %s15, 1
      %s170 = smul.addr %s169, 32
      %s171 = smul.addr %s170, 8
      %s172 = scalar_lea.vmem %s0, %s171
      %p173 = scmp.lt.s32.totalorder %s15, 1
      %s174 = scalar_select %p173, %s15, 1
      %s175 = smul.addr %s174, 32
      %s176 = smul.addr %s175, 8
      %s177 = scalar_lea.vmem %s2, %s176
      %p178 = scmp.lt.s32.totalorder %s15, 1
      %s179 = scalar_select %p178, %s15, 1
      %s180 = smul.addr %s179, 2
      %s181 = scalar_lea.vmem %s3, %s180
      %vm182 = vcmask 31744
      %183 = vst.msk [vmem:[#allocation2] sm:$0xff] %vm182, 0.0
      %184 = vst.msk [vmem:[#allocation2 + $0x8] sm:$0xff] %vm182, 0.0
      %vm185 = vcmask 25600
      %186 = vst.msk [vmem:[#allocation2 + $0x10] sm:$0x3] %vm185, 0.0
      %s187 = scalar_lea.vmem [#allocation2], 408
      %188 = vst.msk [vmem:[%s187] sm:$0xff] %vm182, 0.0
      %189 = vst.msk [vmem:[%s187 + $0x8] sm:$0xff] %vm182, 0.0
      %190 = vst.msk [vmem:[%s187 + $0x10] sm:$0x3] %vm185, 0.0
      %vm191 = vcmask 24576
      %192 = vst.msk [vmem:[#allocation2] sm:$0x1] %vm191, 0.0
      %193 = vst.msk [vmem:[#allocation2 + $0x18] sm:$0x1] %vm191, 0.0
      %194 = vst.msk [vmem:[#allocation2 + $0x30] sm:$0x1] %vm191, 0.0
      %195 = vst.msk [vmem:[#allocation2 + $0x48] sm:$0x1] %vm191, 0.0
      %196 = vst.msk [vmem:[#allocation2 + $0x60] sm:$0x1] %vm191, 0.0
      %197 = vst.msk [vmem:[#allocation2 + $0x78] sm:$0x1] %vm191, 0.0
      %198 = vst.msk [vmem:[#allocation2 + $0x90] sm:$0x1] %vm191, 0.0
      %199 = vst.msk [vmem:[#allocation2 + $0xa8] sm:$0x1] %vm191, 0.0
      %200 = vst.msk [vmem:[#allocation2 + $0xc0] sm:$0x1] %vm191, 0.0
      %201 = vst.msk [vmem:[#allocation2 + $0xd8] sm:$0x1] %vm191, 0.0
      %202 = vst.msk [vmem:[#allocation2 + $0xf0] sm:$0x1] %vm191, 0.0
      %203 = vst.msk [vmem:[#allocation2 + $0x108] sm:$0x1] %vm191, 0.0
      %204 = vst.msk [vmem:[#allocation2 + $0x120] sm:$0x1] %vm191, 0.0
      %205 = vst.msk [vmem:[#allocation2 + $0x138] sm:$0x1] %vm191, 0.0
      %206 = vst.msk [vmem:[#allocation2 + $0x150] sm:$0x1] %vm191, 0.0
      %207 = vst.msk [vmem:[#allocation2 + $0x168] sm:$0x1] %vm191, 0.0
      %208 = vst.msk [vmem:[#allocation2 + $0x180] sm:$0x1] %vm191, 0.0
      %209 = vst.msk [vmem:[#allocation2 + $0x198] sm:$0x1] %vm191, 0.0
      %210 = vst.msk [vmem:[#allocation2 + $0x11] sm:$0x1] %vm191, 0.0
      %211 = vst.msk [vmem:[#allocation2 + $0x29] sm:$0x1] %vm191, 0.0
      %212 = vst.msk [vmem:[#allocation2 + $0x41] sm:$0x1] %vm191, 0.0
      %213 = vst.msk [vmem:[#allocation2 + $0x59] sm:$0x1] %vm191, 0.0
      %214 = vst.msk [vmem:[#allocation2 + $0x71] sm:$0x1] %vm191, 0.0
      %215 = vst.msk [vmem:[#allocation2 + $0x89] sm:$0x1] %vm191, 0.0
      %216 = vst.msk [vmem:[#allocation2 + $0xa1] sm:$0x1] %vm191, 0.0
      %217 = vst.msk [vmem:[#allocation2 + $0xb9] sm:$0x1] %vm191, 0.0
      %218 = vst.msk [vmem:[#allocation2 + $0xd1] sm:$0x1] %vm191, 0.0
      %219 = vst.msk [vmem:[#allocation2 + $0xe9] sm:$0x1] %vm191, 0.0
      %220 = vst.msk [vmem:[#allocation2 + $0x101] sm:$0x1] %vm191, 0.0
      %221 = vst.msk [vmem:[#allocation2 + $0x119] sm:$0x1] %vm191, 0.0
      %222 = vst.msk [vmem:[#allocation2 + $0x131] sm:$0x1] %vm191, 0.0
      %223 = vst.msk [vmem:[#allocation2 + $0x149] sm:$0x1] %vm191, 0.0
      %224 = vst.msk [vmem:[#allocation2 + $0x161] sm:$0x1] %vm191, 0.0
      %225 = vst.msk [vmem:[#allocation2 + $0x179] sm:$0x1] %vm191, 0.0
      %226 = vst.msk [vmem:[#allocation2 + $0x191] sm:$0x1] %vm191, 0.0
      %227 = vst.msk [vmem:[#allocation2 + $0x1a9] sm:$0x1] %vm191, 0.0
      %v228 = vld [vmem:[%s172] sm:$0xff]
      %v229 = vld [vmem:[%s172 + $0x8] sm:$0xff]
      %v230 = vld [vmem:[%s172 + $0x10] sm:$0xff]
      %v231 = vld [vmem:[%s172 + $0x18] sm:$0xff]
      %v232 = vld [vmem:[%s172 + $0x20] sm:$0xff]
      %v233 = vld [vmem:[%s172 + $0x28] sm:$0xff]
      %v234 = vld [vmem:[%s172 + $0x30] sm:$0xff]
      %v235 = vld [vmem:[%s172 + $0x38] sm:$0xff]
      %v236 = vld [vmem:[%s172 + $0x40] sm:$0xff]
      %v237 = vld [vmem:[%s172 + $0x48] sm:$0xff]
      %v238 = vld [vmem:[%s172 + $0x50] sm:$0xff]
      %v239 = vld [vmem:[%s172 + $0x58] sm:$0xff]
      %v240 = vld [vmem:[%s172 + $0x60] sm:$0xff]
      %v241 = vld [vmem:[%s172 + $0x68] sm:$0xff]
      %v242 = vld [vmem:[%s172 + $0x70] sm:$0xff]
      %v243 = vld [vmem:[%s172 + $0x78] sm:$0xff]
      %v244 = vld [vmem:[%s172 + $0x80] sm:$0xff]
      %v245 = vld [vmem:[%s172 + $0x88] sm:$0xff]
      %v246 = vld [vmem:[%s172 + $0x90] sm:$0xff]
      %v247 = vld [vmem:[%s172 + $0x98] sm:$0xff]
      %v248 = vld [vmem:[%s172 + $0xa0] sm:$0xff]
      %v249 = vld [vmem:[%s172 + $0xa8] sm:$0xff]
      %v250 = vld [vmem:[%s172 + $0xb0] sm:$0xff]
      %v251 = vld [vmem:[%s172 + $0xb8] sm:$0xff]
      %v252 = vld [vmem:[%s172 + $0xc0] sm:$0xff]
      %v253 = vld [vmem:[%s172 + $0xc8] sm:$0xff]
      %v254 = vld [vmem:[%s172 + $0xd0] sm:$0xff]
      %v255 = vld [vmem:[%s172 + $0xd8] sm:$0xff]
      %v256 = vld [vmem:[%s172 + $0xe0] sm:$0xff]
      %v257 = vld [vmem:[%s172 + $0xe8] sm:$0xff]
      %v258 = vld [vmem:[%s172 + $0xf0] sm:$0xff]
      %v259 = vld [vmem:[%s172 + $0xf8] sm:$0xff]
      %s260 = scalar_lea.vmem [#allocation2], 24
      %261 = vst.msk [vmem:[%s260 + $0x1] sm:$0xff] %vm182, %v228
      %262 = vst.msk [vmem:[%s260 + $0x9] sm:$0xff] %vm182, %v229
      %263 = vst.msk [vmem:[%s260 + $0x19] sm:$0xff] %vm182, %v230
      %264 = vst.msk [vmem:[%s260 + $0x21] sm:$0xff] %vm182, %v231
      %265 = vst.msk [vmem:[%s260 + $0x31] sm:$0xff] %vm182, %v232
      %266 = vst.msk [vmem:[%s260 + $0x39] sm:$0xff] %vm182, %v233
      %267 = vst.msk [vmem:[%s260 + $0x49] sm:$0xff] %vm182, %v234
      %268 = vst.msk [vmem:[%s260 + $0x51] sm:$0xff] %vm182, %v235
      %269 = vst.msk [vmem:[%s260 + $0x61] sm:$0xff] %vm182, %v236
      %270 = vst.msk [vmem:[%s260 + $0x69] sm:$0xff] %vm182, %v237
      %271 = vst.msk [vmem:[%s260 + $0x79] sm:$0xff] %vm182, %v238
      %272 = vst.msk [vmem:[%s260 + $0x81] sm:$0xff] %vm182, %v239
      %273 = vst.msk [vmem:[%s260 + $0x91] sm:$0xff] %vm182, %v240
      %274 = vst.msk [vmem:[%s260 + $0x99] sm:$0xff] %vm182, %v241
      %275 = vst.msk [vmem:[%s260 + $0xa9] sm:$0xff] %vm182, %v242
      %276 = vst.msk [vmem:[%s260 + $0xb1] sm:$0xff] %vm182, %v243
      %277 = vst.msk [vmem:[%s260 + $0xc1] sm:$0xff] %vm182, %v244
      %278 = vst.msk [vmem:[%s260 + $0xc9] sm:$0xff] %vm182, %v245
      %279 = vst.msk [vmem:[%s260 + $0xd9] sm:$0xff] %vm182, %v246
      %280 = vst.msk [vmem:[%s260 + $0xe1] sm:$0xff] %vm182, %v247
      %281 = vst.msk [vmem:[%s260 + $0xf1] sm:$0xff] %vm182, %v248
      %282 = vst.msk [vmem:[%s260 + $0xf9] sm:$0xff] %vm182, %v249
      %283 = vst.msk [vmem:[%s260 + $0x109] sm:$0xff] %vm182, %v250
      %284 = vst.msk [vmem:[%s260 + $0x111] sm:$0xff] %vm182, %v251
      %285 = vst.msk [vmem:[%s260 + $0x121] sm:$0xff] %vm182, %v252
      %286 = vst.msk [vmem:[%s260 + $0x129] sm:$0xff] %vm182, %v253
      %287 = vst.msk [vmem:[%s260 + $0x139] sm:$0xff] %vm182, %v254
      %288 = vst.msk [vmem:[%s260 + $0x141] sm:$0xff] %vm182, %v255
      %289 = vst.msk [vmem:[%s260 + $0x151] sm:$0xff] %vm182, %v256
      %290 = vst.msk [vmem:[%s260 + $0x159] sm:$0xff] %vm182, %v257
      %291 = vst.msk [vmem:[%s260 + $0x169] sm:$0xff] %vm182, %v258
      %292 = vst.msk [vmem:[%s260 + $0x171] sm:$0xff] %vm182, %v259
      %v293 = vld [vmem:[#allocation2] sm:$0xff]
      %v294 = vld [vmem:[#allocation2 + $0x8] sm:$0xff]
      %v295 = vld [vmem:[#allocation2 + $0x18] sm:$0xff]
      %v296 = vld [vmem:[#allocation2 + $0x20] sm:$0xff]
      %v297 = vld [vmem:[#allocation2 + $0x30] sm:$0xff]
      %v298 = vld [vmem:[#allocation2 + $0x38] sm:$0xff]
      %v299 = vld [vmem:[#allocation2 + $0x48] sm:$0xff]
      %v300 = vld [vmem:[#allocation2 + $0x50] sm:$0xff]
      %v301 = vld [vmem:[#allocation2 + $0x60] sm:$0xff]
      %v302 = vld [vmem:[#allocation2 + $0x68] sm:$0xff]
      %v303 = vld [vmem:[#allocation2 + $0x78] sm:$0xff]
      %v304 = vld [vmem:[#allocation2 + $0x80] sm:$0xff]
      %v305 = vld [vmem:[#allocation2 + $0x90] sm:$0xff]
      %v306 = vld [vmem:[#allocation2 + $0x98] sm:$0xff]
      %v307 = vld [vmem:[#allocation2 + $0xa8] sm:$0xff]
      %v308 = vld [vmem:[#allocation2 + $0xb0] sm:$0xff]
      %v309 = vld [vmem:[#allocation2 + $0xc0] sm:$0xff]
      %v310 = vld [vmem:[#allocation2 + $0xc8] sm:$0xff]
      %v311 = vld [vmem:[#allocation2 + $0xd8] sm:$0xff]
      %v312 = vld [vmem:[#allocation2 + $0xe0] sm:$0xff]
      %v313 = vld [vmem:[#allocation2 + $0xf0] sm:$0xff]
      %v314 = vld [vmem:[#allocation2 + $0xf8] sm:$0xff]
      %v315 = vld [vmem:[#allocation2 + $0x108] sm:$0xff]
      %v316 = vld [vmem:[#allocation2 + $0x110] sm:$0xff]
      %v317 = vld [vmem:[#allocation2 + $0x120] sm:$0xff]
      %v318 = vld [vmem:[#allocation2 + $0x128] sm:$0xff]
      %v319 = vld [vmem:[#allocation2 + $0x138] sm:$0xff]
      %v320 = vld [vmem:[#allocation2 + $0x140] sm:$0xff]
      %v321 = vld [vmem:[#allocation2 + $0x150] sm:$0xff]
      %v322 = vld [vmem:[#allocation2 + $0x158] sm:$0xff]
      %v323 = vld [vmem:[#allocation2 + $0x168] sm:$0xff]
      %v324 = vld [vmem:[#allocation2 + $0x170] sm:$0xff]
      %v325 = vld [vmem:[%s1] sm:$0xf]
      %v326 = vld [vmem:[#allocation2 + $0x1] sm:$0xff]
      %v327 = vld [vmem:[#allocation2 + $0x9] sm:$0xff]
      %v328 = vld [vmem:[#allocation2 + $0x19] sm:$0xff]
      %v329 = vld [vmem:[#allocation2 + $0x21] sm:$0xff]
      %v330 = vld [vmem:[#allocation2 + $0x31] sm:$0xff]
      %v331 = vld [vmem:[#allocation2 + $0x39] sm:$0xff]
      %v332 = vld [vmem:[#allocation2 + $0x49] sm:$0xff]
      %v333 = vld [vmem:[#allocation2 + $0x51] sm:$0xff]
      %v334 = vld [vmem:[#allocation2 + $0x61] sm:$0xff]
      %v335 = vld [vmem:[#allocation2 + $0x69] sm:$0xff]
      %v336 = vld [vmem:[#allocation2 + $0x79] sm:$0xff]
      %v337 = vld [vmem:[#allocation2 + $0x81] sm:$0xff]
      %v338 = vld [vmem:[#allocation2 + $0x91] sm:$0xff]
      %v339 = vld [vmem:[#allocation2 + $0x99] sm:$0xff]
      %v340 = vld [vmem:[#allocation2 + $0xa9] sm:$0xff]
      %v341 = vld [vmem:[#allocation2 + $0xb1] sm:$0xff]
      %v342 = vld [vmem:[#allocation2 + $0xc1] sm:$0xff]
      %v343 = vld [vmem:[#allocation2 + $0xc9] sm:$0xff]
      %v344 = vld [vmem:[#allocation2 + $0xd9] sm:$0xff]
      %v345 = vld [vmem:[#allocation2 + $0xe1] sm:$0xff]
      %v346 = vld [vmem:[#allocation2 + $0xf1] sm:$0xff]
      %v347 = vld [vmem:[#allocation2 + $0xf9] sm:$0xff]
      %v348 = vld [vmem:[#allocation2 + $0x109] sm:$0xff]
      %v349 = vld [vmem:[#allocation2 + $0x111] sm:$0xff]
      %v350 = vld [vmem:[#allocation2 + $0x121] sm:$0xff]
      %v351 = vld [vmem:[#allocation2 + $0x129] sm:$0xff]
      %v352 = vld [vmem:[#allocation2 + $0x139] sm:$0xff]
      %v353 = vld [vmem:[#allocation2 + $0x141] sm:$0xff]
      %v354 = vld [vmem:[#allocation2 + $0x151] sm:$0xff]
      %v355 = vld [vmem:[#allocation2 + $0x159] sm:$0xff]
      %v356 = vld [vmem:[#allocation2 + $0x169] sm:$0xff]
      %v357 = vld [vmem:[#allocation2 + $0x171] sm:$0xff]
      %s358 = scalar_lea.vmem %s1, 4
      %v359 = vld [vmem:[%s358] sm:$0xf]
      %v361 = vsel %vm182, %v326, 0
      %v364 = vsel %vm182, %v327, 0
      %v367 = vsel %vm182, %v328, 0
      %v370 = vsel %vm182, %v329, 0
      %v373 = vsel %vm182, %v330, 0
      %v376 = vsel %vm182, %v331, 0
      %v379 = vsel %vm182, %v332, 0
      %v382 = vsel %vm182, %v333, 0
      %v385 = vsel %vm182, %v334, 0
      %v388 = vsel %vm182, %v335, 0
      %v391 = vsel %vm182, %v336, 0
      %v394 = vsel %vm182, %v337, 0
      %v397 = vsel %vm182, %v338, 0
      %v400 = vsel %vm182, %v339, 0
      %v403 = vsel %vm182, %v340, 0
      %v406 = vsel %vm182, %v341, 0
      %v409 = vsel %vm182, %v342, 0
      %v412 = vsel %vm182, %v343, 0
      %v415 = vsel %vm182, %v344, 0
      %v418 = vsel %vm182, %v345, 0
      %v421 = vsel %vm182, %v346, 0
      %v424 = vsel %vm182, %v347, 0
      %v427 = vsel %vm182, %v348, 0
      %v430 = vsel %vm182, %v349, 0
      %v433 = vsel %vm182, %v350, 0
      %v436 = vsel %vm182, %v351, 0
      %v439 = vsel %vm182, %v352, 0
      %v442 = vsel %vm182, %v353, 0
      %v445 = vsel %vm182, %v354, 0
      %v448 = vsel %vm182, %v355, 0
      %v451 = vsel %vm182, %v356, 0
      %v454 = vsel %vm182, %v357, 0
      %vm456 = vcmask 1043456
      %v458 = vsel %vm456, %v359, 0
      %460 = vmatprep.subr.mxu0 0.0
      %461 = vmatpush1.msra.mxu0 %v458
      %462 = vmatprep.subr.mxu0 0.0
      %463 = vmatpush1.msra.mxu0 0.0
      %464 = vmatprep.subr.mxu0 0.0
      %465 = vmatpush1.msra.mxu0 0.0
      %466 = vmatprep.subr.mxu0 0.0
      %467 = vmatpush1.msra.mxu0 0.0
      %468 = vmatprep.subr.mxu0 0.0
      %469 = vmatpush1.msra.mxu0 0.0
      %470 = vmatprep.subr.mxu0 0.0
      %471 = vmatpush1.msra.mxu0 0.0
      %472 = vmatprep.subr.mxu0 0.0
      %473 = vmatpush1.msra.mxu0 0.0
      %474 = vmatprep.subr.mxu0 0.0
      %475 = vmatpush1.msra.mxu0 0.0
      %476 = vmatprep.subr.mxu0 0.0
      %477 = vmatpush1.msra.mxu0 0.0
      %478 = vmatprep.subr.mxu0 0.0
      %479 = vmatpush1.msra.mxu0 0.0
      %480 = vmatprep.subr.mxu0 0.0
      %481 = vmatpush1.msra.mxu0 0.0
      %482 = vmatprep.subr.mxu0 0.0
      %483 = vmatpush1.msra.mxu0 0.0
      %484 = vmatprep.subr.mxu0 0.0
      %485 = vmatpush1.msra.mxu0 0.0
      %486 = vmatprep.subr.mxu0 0.0
      %487 = vmatpush1.msra.mxu0 0.0
      %488 = vmatprep.subr.mxu0 0.0
      %489 = vmatpush1.msra.mxu0 0.0
      %490 = vmatprep.subr.mxu0 0.0
      %491 = vmatpush1.msra.mxu0 0.0
      %492 = vmatprep.subr.mxu0 0.0
      %493 = vmatpush1.msra.mxu0 0.0
      %494 = vmatprep.subr.mxu0 0.0
      %495 = vmatpush1.msra.mxu0 0.0
      %496 = vmatprep.subr.mxu0 0.0
      %497 = vmatpush1.msra.mxu0 0.0
      %498 = vmatprep.subr.mxu0 0.0
      %499 = vmatpush1.msra.mxu0 0.0
      %500 = vmatprep.subr.mxu0 0.0
      %501 = vmatpush1.msra.mxu0 0.0
      %502 = vmatprep.subr.mxu0 0.0
      %503 = vmatpush1.msra.mxu0 0.0
      %504 = vmatprep.subr.mxu0 0.0
      %505 = vmatpush1.msra.mxu0 0.0
      %506 = vmatprep.subr.mxu0 0.0
      %507 = vmatpush1.msra.mxu0 0.0
      %508 = vmatprep.subr.mxu0 0.0
      %509 = vmatpush1.msra.mxu0 0.0
      %510 = vmatprep.subr.mxu0 0.0
      %511 = vmatpush1.msra.mxu0 0.0
      %512 = vmatprep.subr.mxu0 0.0
      %513 = vmatpush1.msra.mxu0 0.0
      %514 = vmatprep.subr.mxu0 0.0
      %515 = vmatpush1.msra.mxu0 0.0
      %516 = vmatprep.subr.mxu0 0.0
      %517 = vmatpush1.msra.mxu0 0.0
      %518 = vmatprep.subr.mxu0 0.0
      %519 = vmatpush1.msra.mxu0 0.0
      %520 = vmatprep.subr.mxu0 0.0
      %521 = vmatpush1.msra.mxu0 0.0
      %522 = vmatprep.subr.mxu0 0.0
      %523 = vmatpush1.msra.mxu0 0.0
      %524 = vmatprep.mubr.f32.mxu0 0.0
      %525 = vmatmul.mubr.f32.gmra.mrb[0].mxu0 %v361
      %v526 = vpop.f32.mrb[0].mxu0
      %v527 = vadd.f32 0.0, %v526
      %v528 = vpop.f32.mrb[0].mxu0
      %529 = vmatprep.mubr.f32.mxu0 0.0
      %530 = vmatmul.mubr.f32.gmra.mrb[0].mxu0 %v364
      %v531 = vpop.f32.mrb[0].mxu0
      %v532 = vadd.f32 0.0, %v531
      %v533 = vpop.f32.mrb[0].mxu0
      %534 = vmatprep.mubr.f32.mxu0 0.0
      %535 = vmatmul.mubr.f32.gmra.mrb[0].mxu0 %v367
      %v536 = vpop.f32.mrb[0].mxu0
      %v537 = vadd.f32 0.0, %v536
      %v538 = vpop.f32.mrb[0].mxu0
      %539 = vmatprep.mubr.f32.mxu0 0.0
      %540 = vmatmul.mubr.f32.gmra.mrb[0].mxu0 %v370
      %v541 = vpop.f32.mrb[0].mxu0
      %v542 = vadd.f32 0.0, %v541
      %v543 = vpop.f32.mrb[0].mxu0
      %544 = vmatprep.mubr.f32.mxu0 0.0
      %545 = vmatmul.mubr.f32.gmra.mrb[0].mxu0 %v373
      %v546 = vpop.f32.mrb[0].mxu0
      %v547 = vadd.f32 0.0, %v546
      %v548 = vpop.f32.mrb[0].mxu0
      %549 = vmatprep.mubr.f32.mxu0 0.0
      %550 = vmatmul.mubr.f32.gmra.mrb[0].mxu0 %v376
      %v551 = vpop.f32.mrb[0].mxu0
      %v552 = vadd.f32 0.0, %v551
      %v553 = vpop.f32.mrb[0].mxu0
      %554 = vmatprep.mubr.f32.mxu0 0.0
      %555 = vmatmul.mubr.f32.gmra.mrb[0].mxu0 %v379
      %v556 = vpop.f32.mrb[0].mxu0
      %v557 = vadd.f32 0.0, %v556
      %v558 = vpop.f32.mrb[0].mxu0
      %559 = vmatprep.mubr.f32.mxu0 0.0
      %560 = vmatmul.mubr.f32.gmra.mrb[0].mxu0 %v382
      %v561 = vpop.f32.mrb[0].mxu0
      %v562 = vadd.f32 0.0, %v561
      %v563 = vpop.f32.mrb[0].mxu0
      %564 = vmatprep.mubr.f32.mxu0 0.0
      %565 = vmatmul.mubr.f32.gmra.mrb[0].mxu0 %v385
      %v566 = vpop.f32.mrb[0].mxu0
      %v567 = vadd.f32 0.0, %v566
      %v568 = vpop.f32.mrb[0].mxu0
      %569 = vmatprep.mubr.f32.mxu0 0.0
      %570 = vmatmul.mubr.f32.gmra.mrb[0].mxu0 %v388
      %v571 = vpop.f32.mrb[0].mxu0
      %v572 = vadd.f32 0.0, %v571
      %v573 = vpop.f32.mrb[0].mxu0
      %574 = vmatprep.mubr.f32.mxu0 0.0
      %575 = vmatmul.mubr.f32.gmra.mrb[0].mxu0 %v391
      %v576 = vpop.f32.mrb[0].mxu0
      %v577 = vadd.f32 0.0, %v576
      %v578 = vpop.f32.mrb[0].mxu0
      %579 = vmatprep.mubr.f32.mxu0 0.0
      %580 = vmatmul.mubr.f32.gmra.mrb[0].mxu0 %v394
      %v581 = vpop.f32.mrb[0].mxu0
      %v582 = vadd.f32 0.0, %v581
      %v583 = vpop.f32.mrb[0].mxu0
      %584 = vmatprep.mubr.f32.mxu0 0.0
      %585 = vmatmul.mubr.f32.gmra.mrb[0].mxu0 %v397
      %v586 = vpop.f32.mrb[0].mxu0
      %v587 = vadd.f32 0.0, %v586
      %v588 = vpop.f32.mrb[0].mxu0
      %589 = vmatprep.mubr.f32.mxu0 0.0
      %590 = vmatmul.mubr.f32.gmra.mrb[0].mxu0 %v400
      %v591 = vpop.f32.mrb[0].mxu0
      %v592 = vadd.f32 0.0, %v591
      %v593 = vpop.f32.mrb[0].mxu0
      %594 = vmatprep.mubr.f32.mxu0 0.0
      %595 = vmatmul.mubr.f32.gmra.mrb[0].mxu0 %v403
      %v596 = vpop.f32.mrb[0].mxu0
      %v597 = vadd.f32 0.0, %v596
      %v598 = vpop.f32.mrb[0].mxu0
      %599 = vmatprep.mubr.f32.mxu0 0.0
      %600 = vmatmul.mubr.f32.gmra.mrb[0].mxu0 %v406
      %v601 = vpop.f32.mrb[0].mxu0
      %v602 = vadd.f32 0.0, %v601
      %v603 = vpop.f32.mrb[0].mxu0
      %604 = vmatprep.mubr.f32.mxu0 0.0
      %605 = vmatmul.mubr.f32.gmra.mrb[0].mxu0 %v409
      %v606 = vpop.f32.mrb[0].mxu0
      %v607 = vadd.f32 0.0, %v606
      %v608 = vpop.f32.mrb[0].mxu0
      %609 = vmatprep.mubr.f32.mxu0 0.0
      %610 = vmatmul.mubr.f32.gmra.mrb[0].mxu0 %v412
      %v611 = vpop.f32.mrb[0].mxu0
      %v612 = vadd.f32 0.0, %v611
      %v613 = vpop.f32.mrb[0].mxu0
      %614 = vmatprep.mubr.f32.mxu0 0.0
      %615 = vmatmul.mubr.f32.gmra.mrb[0].mxu0 %v415
      %v616 = vpop.f32.mrb[0].mxu0
      %v617 = vadd.f32 0.0, %v616
      %v618 = vpop.f32.mrb[0].mxu0
      %619 = vmatprep.mubr.f32.mxu0 0.0
      %620 = vmatmul.mubr.f32.gmra.mrb[0].mxu0 %v418
      %v621 = vpop.f32.mrb[0].mxu0
      %v622 = vadd.f32 0.0, %v621
      %v623 = vpop.f32.mrb[0].mxu0
      %624 = vmatprep.mubr.f32.mxu0 0.0
      %625 = vmatmul.mubr.f32.gmra.mrb[0].mxu0 %v421
      %v626 = vpop.f32.mrb[0].mxu0
      %v627 = vadd.f32 0.0, %v626
      %v628 = vpop.f32.mrb[0].mxu0
      %629 = vmatprep.mubr.f32.mxu0 0.0
      %630 = vmatmul.mubr.f32.gmra.mrb[0].mxu0 %v424
      %v631 = vpop.f32.mrb[0].mxu0
      %v632 = vadd.f32 0.0, %v631
      %v633 = vpop.f32.mrb[0].mxu0
      %634 = vmatprep.mubr.f32.mxu0 0.0
      %635 = vmatmul.mubr.f32.gmra.mrb[0].mxu0 %v427
      %v636 = vpop.f32.mrb[0].mxu0
      %v637 = vadd.f32 0.0, %v636
      %v638 = vpop.f32.mrb[0].mxu0
      %639 = vmatprep.mubr.f32.mxu0 0.0
      %640 = vmatmul.mubr.f32.gmra.mrb[0].mxu0 %v430
      %v641 = vpop.f32.mrb[0].mxu0
      %v642 = vadd.f32 0.0, %v641
      %v643 = vpop.f32.mrb[0].mxu0
      %644 = vmatprep.mubr.f32.mxu0 0.0
      %645 = vmatmul.mubr.f32.gmra.mrb[0].mxu0 %v433
      %v646 = vpop.f32.mrb[0].mxu0
      %v647 = vadd.f32 0.0, %v646
      %v648 = vpop.f32.mrb[0].mxu0
      %649 = vmatprep.mubr.f32.mxu0 0.0
      %650 = vmatmul.mubr.f32.gmra.mrb[0].mxu0 %v436
      %v651 = vpop.f32.mrb[0].mxu0
      %v652 = vadd.f32 0.0, %v651
      %v653 = vpop.f32.mrb[0].mxu0
      %654 = vmatprep.mubr.f32.mxu0 0.0
      %655 = vmatmul.mubr.f32.gmra.mrb[0].mxu0 %v439
      %v656 = vpop.f32.mrb[0].mxu0
      %v657 = vadd.f32 0.0, %v656
      %v658 = vpop.f32.mrb[0].mxu0
      %659 = vmatprep.mubr.f32.mxu0 0.0
      %660 = vmatmul.mubr.f32.gmra.mrb[0].mxu0 %v442
      %v661 = vpop.f32.mrb[0].mxu0
      %v662 = vadd.f32 0.0, %v661
      %v663 = vpop.f32.mrb[0].mxu0
      %664 = vmatprep.mubr.f32.mxu0 0.0
      %665 = vmatmul.mubr.f32.gmra.mrb[0].mxu0 %v445
      %v666 = vpop.f32.mrb[0].mxu0
      %v667 = vadd.f32 0.0, %v666
      %v668 = vpop.f32.mrb[0].mxu0
      %669 = vmatprep.mubr.f32.mxu0 0.0
      %670 = vmatmul.mubr.f32.gmra.mrb[0].mxu0 %v448
      %v671 = vpop.f32.mrb[0].mxu0
      %v672 = vadd.f32 0.0, %v671
      %v673 = vpop.f32.mrb[0].mxu0
      %674 = vmatprep.mubr.f32.mxu0 0.0
      %675 = vmatmul.mubr.f32.gmra.mrb[0].mxu0 %v451
      %v676 = vpop.f32.mrb[0].mxu0
      %v677 = vadd.f32 0.0, %v676
      %v678 = vpop.f32.mrb[0].mxu0
      %679 = vmatprep.mubr.f32.mxu0 0.0
      %680 = vmatmul.mubr.f32.gmra.mrb[0].mxu0 %v454
      %v681 = vpop.f32.mrb[0].mxu0
      %v682 = vadd.f32 0.0, %v681
      %v683 = vpop.f32.mrb[0].mxu0
      %684 = vdwg.mxu0
      %v686 = vsel %vm182, %v293, 0
      %v689 = vsel %vm182, %v294, 0
      %v692 = vsel %vm182, %v295, 0
      %v695 = vsel %vm182, %v296, 0
      %v698 = vsel %vm182, %v297, 0
      %v701 = vsel %vm182, %v298, 0
      %v704 = vsel %vm182, %v299, 0
      %v707 = vsel %vm182, %v300, 0
      %v710 = vsel %vm182, %v301, 0
      %v713 = vsel %vm182, %v302, 0
      %v716 = vsel %vm182, %v303, 0
      %v719 = vsel %vm182, %v304, 0
      %v722 = vsel %vm182, %v305, 0
      %v725 = vsel %vm182, %v306, 0
      %v728 = vsel %vm182, %v307, 0
      %v731 = vsel %vm182, %v308, 0
      %v734 = vsel %vm182, %v309, 0
      %v737 = vsel %vm182, %v310, 0
      %v740 = vsel %vm182, %v311, 0
      %v743 = vsel %vm182, %v312, 0
      %v746 = vsel %vm182, %v313, 0
      %v749 = vsel %vm182, %v314, 0
      %v752 = vsel %vm182, %v315, 0
      %v755 = vsel %vm182, %v316, 0
      %v758 = vsel %vm182, %v317, 0
      %v761 = vsel %vm182, %v318, 0
      %v764 = vsel %vm182, %v319, 0
      %v767 = vsel %vm182, %v320, 0
      %v770 = vsel %vm182, %v321, 0
      %v773 = vsel %vm182, %v322, 0
      %v776 = vsel %vm182, %v323, 0
      %v779 = vsel %vm182, %v324, 0
      %v782 = vsel %vm456, %v325, 0
      %784 = vmatprep.subr.mxu0 0.0
      %785 = vmatpush1.msra.mxu0 %v782
      %786 = vmatprep.subr.mxu0 0.0
      %787 = vmatpush1.msra.mxu0 0.0
      %788 = vmatprep.subr.mxu0 0.0
      %789 = vmatpush1.msra.mxu0 0.0
      %790 = vmatprep.subr.mxu0 0.0
      %791 = vmatpush1.msra.mxu0 0.0
      %792 = vmatprep.subr.mxu0 0.0
      %793 = vmatpush1.msra.mxu0 0.0
      %794 = vmatprep.subr.mxu0 0.0
      %795 = vmatpush1.msra.mxu0 0.0
      %796 = vmatprep.subr.mxu0 0.0
      %797 = vmatpush1.msra.mxu0 0.0
      %798 = vmatprep.subr.mxu0 0.0
      %799 = vmatpush1.msra.mxu0 0.0
      %800 = vmatprep.subr.mxu0 0.0
      %801 = vmatpush1.msra.mxu0 0.0
      %802 = vmatprep.subr.mxu0 0.0
      %803 = vmatpush1.msra.mxu0 0.0
      %804 = vmatprep.subr.mxu0 0.0
      %805 = vmatpush1.msra.mxu0 0.0
      %806 = vmatprep.subr.mxu0 0.0
      %807 = vmatpush1.msra.mxu0 0.0
      %808 = vmatprep.subr.mxu0 0.0
      %809 = vmatpush1.msra.mxu0 0.0
      %810 = vmatprep.subr.mxu0 0.0
      %811 = vmatpush1.msra.mxu0 0.0
      %812 = vmatprep.subr.mxu0 0.0
      %813 = vmatpush1.msra.mxu0 0.0
      %814 = vmatprep.subr.mxu0 0.0
      %815 = vmatpush1.msra.mxu0 0.0
      %816 = vmatprep.subr.mxu0 0.0
      %817 = vmatpush1.msra.mxu0 0.0
      %818 = vmatprep.subr.mxu0 0.0
      %819 = vmatpush1.msra.mxu0 0.0
      %820 = vmatprep.subr.mxu0 0.0
      %821 = vmatpush1.msra.mxu0 0.0
      %822 = vmatprep.subr.mxu0 0.0
      %823 = vmatpush1.msra.mxu0 0.0
      %824 = vmatprep.subr.mxu0 0.0
      %825 = vmatpush1.msra.mxu0 0.0
      %826 = vmatprep.subr.mxu0 0.0
      %827 = vmatpush1.msra.mxu0 0.0
      %828 = vmatprep.subr.mxu0 0.0
      %829 = vmatpush1.msra.mxu0 0.0
      %830 = vmatprep.subr.mxu0 0.0
      %831 = vmatpush1.msra.mxu0 0.0
      %832 = vmatprep.subr.mxu0 0.0
      %833 = vmatpush1.msra.mxu0 0.0
      %834 = vmatprep.subr.mxu0 0.0
      %835 = vmatpush1.msra.mxu0 0.0
      %836 = vmatprep.subr.mxu0 0.0
      %837 = vmatpush1.msra.mxu0 0.0
      %838 = vmatprep.subr.mxu0 0.0
      %839 = vmatpush1.msra.mxu0 0.0
      %840 = vmatprep.subr.mxu0 0.0
      %841 = vmatpush1.msra.mxu0 0.0
      %842 = vmatprep.subr.mxu0 0.0
      %843 = vmatpush1.msra.mxu0 0.0
      %844 = vmatprep.subr.mxu0 0.0
      %845 = vmatpush1.msra.mxu0 0.0
      %846 = vmatprep.subr.mxu0 0.0
      %847 = vmatpush1.msra.mxu0 0.0
      %848 = vmatprep.mubr.f32.mxu0 0.0
      %849 = vmatmul.mubr.f32.gmra.mrb[0].mxu0 %v686
      %v850 = vpop.f32.mrb[0].mxu0
      %v851 = vadd.f32 %v527, %v850
      %v852 = vpop.f32.mrb[0].mxu0
      %853 = vmatprep.mubr.f32.mxu0 0.0
      %854 = vmatmul.mubr.f32.gmra.mrb[0].mxu0 %v689
      %v855 = vpop.f32.mrb[0].mxu0
      %v856 = vadd.f32 %v532, %v855
      %v857 = vpop.f32.mrb[0].mxu0
      %858 = vmatprep.mubr.f32.mxu0 0.0
      %859 = vmatmul.mubr.f32.gmra.mrb[0].mxu0 %v692
      %v860 = vpop.f32.mrb[0].mxu0
      %v861 = vadd.f32 %v537, %v860
      %v862 = vpop.f32.mrb[0].mxu0
      %863 = vmatprep.mubr.f32.mxu0 0.0
      %864 = vmatmul.mubr.f32.gmra.mrb[0].mxu0 %v695
      %v865 = vpop.f32.mrb[0].mxu0
      %v866 = vadd.f32 %v542, %v865
      %v867 = vpop.f32.mrb[0].mxu0
      %868 = vmatprep.mubr.f32.mxu0 0.0
      %869 = vmatmul.mubr.f32.gmra.mrb[0].mxu0 %v698
      %v870 = vpop.f32.mrb[0].mxu0
      %v871 = vadd.f32 %v547, %v870
      %v872 = vpop.f32.mrb[0].mxu0
      %873 = vmatprep.mubr.f32.mxu0 0.0
      %874 = vmatmul.mubr.f32.gmra.mrb[0].mxu0 %v701
      %v875 = vpop.f32.mrb[0].mxu0
      %v876 = vadd.f32 %v552, %v875
      %v877 = vpop.f32.mrb[0].mxu0
      %878 = vmatprep.mubr.f32.mxu0 0.0
      %879 = vmatmul.mubr.f32.gmra.mrb[0].mxu0 %v704
      %v880 = vpop.f32.mrb[0].mxu0
      %v881 = vadd.f32 %v557, %v880
      %v882 = vpop.f32.mrb[0].mxu0
      %883 = vmatprep.mubr.f32.mxu0 0.0
      %884 = vmatmul.mubr.f32.gmra.mrb[0].mxu0 %v707
      %v885 = vpop.f32.mrb[0].mxu0
      %v886 = vadd.f32 %v562, %v885
      %v887 = vpop.f32.mrb[0].mxu0
      %888 = vmatprep.mubr.f32.mxu0 0.0
      %889 = vmatmul.mubr.f32.gmra.mrb[0].mxu0 %v710
      %v890 = vpop.f32.mrb[0].mxu0
      %v891 = vadd.f32 %v567, %v890
      %v892 = vpop.f32.mrb[0].mxu0
      %893 = vmatprep.mubr.f32.mxu0 0.0
      %894 = vmatmul.mubr.f32.gmra.mrb[0].mxu0 %v713
      %v895 = vpop.f32.mrb[0].mxu0
      %v896 = vadd.f32 %v572, %v895
      %v897 = vpop.f32.mrb[0].mxu0
      %898 = vmatprep.mubr.f32.mxu0 0.0
      %899 = vmatmul.mubr.f32.gmra.mrb[0].mxu0 %v716
      %v900 = vpop.f32.mrb[0].mxu0
      %v901 = vadd.f32 %v577, %v900
      %v902 = vpop.f32.mrb[0].mxu0
      %903 = vmatprep.mubr.f32.mxu0 0.0
      %904 = vmatmul.mubr.f32.gmra.mrb[0].mxu0 %v719
      %v905 = vpop.f32.mrb[0].mxu0
      %v906 = vadd.f32 %v582, %v905
      %v907 = vpop.f32.mrb[0].mxu0
      %908 = vmatprep.mubr.f32.mxu0 0.0
      %909 = vmatmul.mubr.f32.gmra.mrb[0].mxu0 %v722
      %v910 = vpop.f32.mrb[0].mxu0
      %v911 = vadd.f32 %v587, %v910
      %v912 = vpop.f32.mrb[0].mxu0
      %913 = vmatprep.mubr.f32.mxu0 0.0
      %914 = vmatmul.mubr.f32.gmra.mrb[0].mxu0 %v725
      %v915 = vpop.f32.mrb[0].mxu0
      %v916 = vadd.f32 %v592, %v915
      %v917 = vpop.f32.mrb[0].mxu0
      %918 = vmatprep.mubr.f32.mxu0 0.0
      %919 = vmatmul.mubr.f32.gmra.mrb[0].mxu0 %v728
      %v920 = vpop.f32.mrb[0].mxu0
      %v921 = vadd.f32 %v597, %v920
      %v922 = vpop.f32.mrb[0].mxu0
      %923 = vmatprep.mubr.f32.mxu0 0.0
      %924 = vmatmul.mubr.f32.gmra.mrb[0].mxu0 %v731
      %v925 = vpop.f32.mrb[0].mxu0
      %v926 = vadd.f32 %v602, %v925
      %v927 = vpop.f32.mrb[0].mxu0
      %928 = vmatprep.mubr.f32.mxu0 0.0
      %929 = vmatmul.mubr.f32.gmra.mrb[0].mxu0 %v734
      %v930 = vpop.f32.mrb[0].mxu0
      %v931 = vadd.f32 %v607, %v930
      %v932 = vpop.f32.mrb[0].mxu0
      %933 = vmatprep.mubr.f32.mxu0 0.0
      %934 = vmatmul.mubr.f32.gmra.mrb[0].mxu0 %v737
      %v935 = vpop.f32.mrb[0].mxu0
      %v936 = vadd.f32 %v612, %v935
      %v937 = vpop.f32.mrb[0].mxu0
      %938 = vmatprep.mubr.f32.mxu0 0.0
      %939 = vmatmul.mubr.f32.gmra.mrb[0].mxu0 %v740
      %v940 = vpop.f32.mrb[0].mxu0
      %v941 = vadd.f32 %v617, %v940
      %v942 = vpop.f32.mrb[0].mxu0
      %943 = vmatprep.mubr.f32.mxu0 0.0
      %944 = vmatmul.mubr.f32.gmra.mrb[0].mxu0 %v743
      %v945 = vpop.f32.mrb[0].mxu0
      %v946 = vadd.f32 %v622, %v945
      %v947 = vpop.f32.mrb[0].mxu0
      %948 = vmatprep.mubr.f32.mxu0 0.0
      %949 = vmatmul.mubr.f32.gmra.mrb[0].mxu0 %v746
      %v950 = vpop.f32.mrb[0].mxu0
      %v951 = vadd.f32 %v627, %v950
      %v952 = vpop.f32.mrb[0].mxu0
      %953 = vmatprep.mubr.f32.mxu0 0.0
      %954 = vmatmul.mubr.f32.gmra.mrb[0].mxu0 %v749
      %v955 = vpop.f32.mrb[0].mxu0
      %v956 = vadd.f32 %v632, %v955
      %v957 = vpop.f32.mrb[0].mxu0
      %958 = vmatprep.mubr.f32.mxu0 0.0
      %959 = vmatmul.mubr.f32.gmra.mrb[0].mxu0 %v752
      %v960 = vpop.f32.mrb[0].mxu0
      %v961 = vadd.f32 %v637, %v960
      %v962 = vpop.f32.mrb[0].mxu0
      %963 = vmatprep.mubr.f32.mxu0 0.0
      %964 = vmatmul.mubr.f32.gmra.mrb[0].mxu0 %v755
      %v965 = vpop.f32.mrb[0].mxu0
      %v966 = vadd.f32 %v642, %v965
      %v967 = vpop.f32.mrb[0].mxu0
      %968 = vmatprep.mubr.f32.mxu0 0.0
      %969 = vmatmul.mubr.f32.gmra.mrb[0].mxu0 %v758
      %v970 = vpop.f32.mrb[0].mxu0
      %v971 = vadd.f32 %v647, %v970
      %v972 = vpop.f32.mrb[0].mxu0
      %973 = vmatprep.mubr.f32.mxu0 0.0
      %974 = vmatmul.mubr.f32.gmra.mrb[0].mxu0 %v761
      %v975 = vpop.f32.mrb[0].mxu0
      %v976 = vadd.f32 %v652, %v975
      %v977 = vpop.f32.mrb[0].mxu0
      %978 = vmatprep.mubr.f32.mxu0 0.0
      %979 = vmatmul.mubr.f32.gmra.mrb[0].mxu0 %v764
      %v980 = vpop.f32.mrb[0].mxu0
      %v981 = vadd.f32 %v657, %v980
      %v982 = vpop.f32.mrb[0].mxu0
      %983 = vmatprep.mubr.f32.mxu0 0.0
      %984 = vmatmul.mubr.f32.gmra.mrb[0].mxu0 %v767
      %v985 = vpop.f32.mrb[0].mxu0
      %v986 = vadd.f32 %v662, %v985
      %v987 = vpop.f32.mrb[0].mxu0
      %988 = vmatprep.mubr.f32.mxu0 0.0
      %989 = vmatmul.mubr.f32.gmra.mrb[0].mxu0 %v770
      %v990 = vpop.f32.mrb[0].mxu0
      %v991 = vadd.f32 %v667, %v990
      %v992 = vpop.f32.mrb[0].mxu0
      %993 = vmatprep.mubr.f32.mxu0 0.0
      %994 = vmatmul.mubr.f32.gmra.mrb[0].mxu0 %v773
      %v995 = vpop.f32.mrb[0].mxu0
      %v996 = vadd.f32 %v672, %v995
      %v997 = vpop.f32.mrb[0].mxu0
      %998 = vmatprep.mubr.f32.mxu0 0.0
      %999 = vmatmul.mubr.f32.gmra.mrb[0].mxu0 %v776
      %v1000 = vpop.f32.mrb[0].mxu0
      %v1001 = vadd.f32 %v677, %v1000
      %v1002 = vpop.f32.mrb[0].mxu0
      %1003 = vmatprep.mubr.f32.mxu0 0.0
      %1004 = vmatmul.mubr.f32.gmra.mrb[0].mxu0 %v779
      %v1005 = vpop.f32.mrb[0].mxu0
      %v1006 = vadd.f32 %v682, %v1005
      %v1007 = vpop.f32.mrb[0].mxu0
      %1008 = vdwg.mxu0
      %v1009 = vld [vmem:[#allocation2 + $0x2] sm:$0xff]
      %v1010 = vld [vmem:[#allocation2 + $0xa] sm:$0xff]
      %v1011 = vld [vmem:[#allocation2 + $0x1a] sm:$0xff]
      %v1012 = vld [vmem:[#allocation2 + $0x22] sm:$0xff]
      %v1013 = vld [vmem:[#allocation2 + $0x32] sm:$0xff]
      %v1014 = vld [vmem:[#allocation2 + $0x3a] sm:$0xff]
      %v1015 = vld [vmem:[#allocation2 + $0x4a] sm:$0xff]
      %v1016 = vld [vmem:[#allocation2 + $0x52] sm:$0xff]
      %v1017 = vld [vmem:[#allocation2 + $0x62] sm:$0xff]
      %v1018 = vld [vmem:[#allocation2 + $0x6a] sm:$0xff]
      %v1019 = vld [vmem:[#allocation2 + $0x7a] sm:$0xff]
      %v1020 = vld [vmem:[#allocation2 + $0x82] sm:$0xff]
      %v1021 = vld [vmem:[#allocation2 + $0x92] sm:$0xff]
      %v1022 = vld [vmem:[#allocation2 + $0x9a] sm:$0xff]
      %v1023 = vld [vmem:[#allocation2 + $0xaa] sm:$0xff]
      %v1024 = vld [vmem:[#allocation2 + $0xb2] sm:$0xff]
      %v1025 = vld [vmem:[#allocation2 + $0xc2] sm:$0xff]
      %v1026 = vld [vmem:[#allocation2 + $0xca] sm:$0xff]
      %v1027 = vld [vmem:[#allocation2 + $0xda] sm:$0xff]
      %v1028 = vld [vmem:[#allocation2 + $0xe2] sm:$0xff]
      %v1029 = vld [vmem:[#allocation2 + $0xf2] sm:$0xff]
      %v1030 = vld [vmem:[#allocation2 + $0xfa] sm:$0xff]
      %v1031 = vld [vmem:[#allocation2 + $0x10a] sm:$0xff]
      %v1032 = vld [vmem:[#allocation2 + $0x112] sm:$0xff]
      %v1033 = vld [vmem:[#allocation2 + $0x122] sm:$0xff]
      %v1034 = vld [vmem:[#allocation2 + $0x12a] sm:$0xff]
      %v1035 = vld [vmem:[#allocation2 + $0x13a] sm:$0xff]
      %v1036 = vld [vmem:[#allocation2 + $0x142] sm:$0xff]
      %v1037 = vld [vmem:[#allocation2 + $0x152] sm:$0xff]
      %v1038 = vld [vmem:[#allocation2 + $0x15a] sm:$0xff]
      %v1039 = vld [vmem:[#allocation2 + $0x16a] sm:$0xff]
      %v1040 = vld [vmem:[#allocation2 + $0x172] sm:$0xff]
      %s1041 = scalar_lea.vmem %s1, 8
      %v1042 = vld [vmem:[%s1041] sm:$0xf]
      %v1044 = vsel %vm182, %v1009, 0
      %v1047 = vsel %vm182, %v1010, 0
      %v1050 = vsel %vm182, %v1011, 0
      %v1053 = vsel %vm182, %v1012, 0
      %v1056 = vsel %vm182, %v1013, 0
      %v1059 = vsel %vm182, %v1014, 0
      %v1062 = vsel %vm182, %v1015, 0
      %v1065 = vsel %vm182, %v1016, 0
      %v1068 = vsel %vm182, %v1017, 0
      %v1071 = vsel %vm182, %v1018, 0
      %v1074 = vsel %vm182, %v1019, 0
      %v1077 = vsel %vm182, %v1020, 0
      %v1080 = vsel %vm182, %v1021, 0
      %v1083 = vsel %vm182, %v1022, 0
      %v1086 = vsel %vm182, %v1023, 0
      %v1089 = vsel %vm182, %v1024, 0
      %v1092 = vsel %vm182, %v1025, 0
      %v1095 = vsel %vm182, %v1026, 0
      %v1098 = vsel %vm182, %v1027, 0
      %v1101 = vsel %vm182, %v1028, 0
      %v1104 = vsel %vm182, %v1029, 0
      %v1107 = vsel %vm182, %v1030, 0
      %v1110 = vsel %vm182, %v1031, 0
      %v1113 = vsel %vm182, %v1032, 0
      %v1116 = vsel %vm182, %v1033, 0
      %v1119 = vsel %vm182, %v1034, 0
      %v1122 = vsel %vm182, %v1035, 0
      %v1125 = vsel %vm182, %v1036, 0
      %v1128 = vsel %vm182, %v1037, 0
      %v1131 = vsel %vm182, %v1038, 0
      %v1134 = vsel %vm182, %v1039, 0
      %v1137 = vsel %vm182, %v1040, 0
      %v1140 = vsel %vm456, %v1042, 0
      %1142 = vmatprep.subr.mxu0 0.0
      %1143 = vmatpush1.msra.mxu0 %v1140
      %1144 = vmatprep.subr.mxu0 0.0
      %1145 = vmatpush1.msra.mxu0 0.0
      %1146 = vmatprep.subr.mxu0 0.0
      %1147 = vmatpush1.msra.mxu0 0.0
      %1148 = vmatprep.subr.mxu0 0.0
      %1149 = vmatpush1.msra.mxu0 0.0
      %1150 = vmatprep.subr.mxu0 0.0
      %1151 = vmatpush1.msra.mxu0 0.0
      %1152 = vmatprep.subr.mxu0 0.0
      %1153 = vmatpush1.msra.mxu0 0.0
      %1154 = vmatprep.subr.mxu0 0.0
      %1155 = vmatpush1.msra.mxu0 0.0
      %1156 = vmatprep.subr.mxu0 0.0
      %1157 = vmatpush1.msra.mxu0 0.0
      %1158 = vmatprep.subr.mxu0 0.0
      %1159 = vmatpush1.msra.mxu0 0.0
      %1160 = vmatprep.subr.mxu0 0.0
      %1161 = vmatpush1.msra.mxu0 0.0
      %1162 = vmatprep.subr.mxu0 0.0
      %1163 = vmatpush1.msra.mxu0 0.0
      %1164 = vmatprep.subr.mxu0 0.0
      %1165 = vmatpush1.msra.mxu0 0.0
      %1166 = vmatprep.subr.mxu0 0.0
      %1167 = vmatpush1.msra.mxu0 0.0
      %1168 = vmatprep.subr.mxu0 0.0
      %1169 = vmatpush1.msra.mxu0 0.0
      %1170 = vmatprep.subr.mxu0 0.0
      %1171 = vmatpush1.msra.mxu0 0.0
      %1172 = vmatprep.subr.mxu0 0.0
      %1173 = vmatpush1.msra.mxu0 0.0
      %1174 = vmatprep.subr.mxu0 0.0
      %1175 = vmatpush1.msra.mxu0 0.0
      %1176 = vmatprep.subr.mxu0 0.0
      %1177 = vmatpush1.msra.mxu0 0.0
      %1178 = vmatprep.subr.mxu0 0.0
      %1179 = vmatpush1.msra.mxu0 0.0
      %1180 = vmatprep.subr.mxu0 0.0
      %1181 = vmatpush1.msra.mxu0 0.0
      %1182 = vmatprep.subr.mxu0 0.0
      %1183 = vmatpush1.msra.mxu0 0.0
      %1184 = vmatprep.subr.mxu0 0.0
      %1185 = vmatpush1.msra.mxu0 0.0
      %1186 = vmatprep.subr.mxu0 0.0
      %1187 = vmatpush1.msra.mxu0 0.0
      %1188 = vmatprep.subr.mxu0 0.0
      %1189 = vmatpush1.msra.mxu0 0.0
      %1190 = vmatprep.subr.mxu0 0.0
      %1191 = vmatpush1.msra.mxu0 0.0
      %1192 = vmatprep.subr.mxu0 0.0
      %1193 = vmatpush1.msra.mxu0 0.0
      %1194 = vmatprep.subr.mxu0 0.0
      %1195 = vmatpush1.msra.mxu0 0.0
      %1196 = vmatprep.subr.mxu0 0.0
      %1197 = vmatpush1.msra.mxu0 0.0
      %1198 = vmatprep.subr.mxu0 0.0
      %1199 = vmatpush1.msra.mxu0 0.0
      %1200 = vmatprep.subr.mxu0 0.0
      %1201 = vmatpush1.msra.mxu0 0.0
      %1202 = vmatprep.subr.mxu0 0.0
      %1203 = vmatpush1.msra.mxu0 0.0
      %1204 = vmatprep.subr.mxu0 0.0
      %1205 = vmatpush1.msra.mxu0 0.0
      %1206 = vmatprep.mubr.f32.mxu0 0.0
      %1207 = vmatmul.mubr.f32.gmra.mrb[0].mxu0 %v1044
      %v1208 = vpop.f32.mrb[0].mxu0
      %v1209 = vadd.f32 0.0, %v1208
      %v1210 = vpop.f32.mrb[0].mxu0
      %1211 = vmatprep.mubr.f32.mxu0 0.0
      %1212 = vmatmul.mubr.f32.gmra.mrb[0].mxu0 %v1047
      %v1213 = vpop.f32.mrb[0].mxu0
      %v1214 = vadd.f32 0.0, %v1213
      %v1215 = vpop.f32.mrb[0].mxu0
      %1216 = vmatprep.mubr.f32.mxu0 0.0
      %1217 = vmatmul.mubr.f32.gmra.mrb[0].mxu0 %v1050
      %v1218 = vpop.f32.mrb[0].mxu0
      %v1219 = vadd.f32 0.0, %v1218
      %v1220 = vpop.f32.mrb[0].mxu0
      %1221 = vmatprep.mubr.f32.mxu0 0.0
      %1222 = vmatmul.mubr.f32.gmra.mrb[0].mxu0 %v1053
      %v1223 = vpop.f32.mrb[0].mxu0
      %v1224 = vadd.f32 0.0, %v1223
      %v1225 = vpop.f32.mrb[0].mxu0
      %1226 = vmatprep.mubr.f32.mxu0 0.0
      %1227 = vmatmul.mubr.f32.gmra.mrb[0].mxu0 %v1056
      %v1228 = vpop.f32.mrb[0].mxu0
      %v1229 = vadd.f32 0.0, %v1228
      %v1230 = vpop.f32.mrb[0].mxu0
      %1231 = vmatprep.mubr.f32.mxu0 0.0
      %1232 = vmatmul.mubr.f32.gmra.mrb[0].mxu0 %v1059
      %v1233 = vpop.f32.mrb[0].mxu0
      %v1234 = vadd.f32 0.0, %v1233
      %v1235 = vpop.f32.mrb[0].mxu0
      %1236 = vmatprep.mubr.f32.mxu0 0.0
      %1237 = vmatmul.mubr.f32.gmra.mrb[0].mxu0 %v1062
      %v1238 = vpop.f32.mrb[0].mxu0
      %v1239 = vadd.f32 0.0, %v1238
      %v1240 = vpop.f32.mrb[0].mxu0
      %1241 = vmatprep.mubr.f32.mxu0 0.0
      %1242 = vmatmul.mubr.f32.gmra.mrb[0].mxu0 %v1065
      %v1243 = vpop.f32.mrb[0].mxu0
      %v1244 = vadd.f32 0.0, %v1243
      %v1245 = vpop.f32.mrb[0].mxu0
      %1246 = vmatprep.mubr.f32.mxu0 0.0
      %1247 = vmatmul.mubr.f32.gmra.mrb[0].mxu0 %v1068
      %v1248 = vpop.f32.mrb[0].mxu0
      %v1249 = vadd.f32 0.0, %v1248
      %v1250 = vpop.f32.mrb[0].mxu0
      %1251 = vmatprep.mubr.f32.mxu0 0.0
      %1252 = vmatmul.mubr.f32.gmra.mrb[0].mxu0 %v1071
      %v1253 = vpop.f32.mrb[0].mxu0
      %v1254 = vadd.f32 0.0, %v1253
      %v1255 = vpop.f32.mrb[0].mxu0
      %1256 = vmatprep.mubr.f32.mxu0 0.0
      %1257 = vmatmul.mubr.f32.gmra.mrb[0].mxu0 %v1074
      %v1258 = vpop.f32.mrb[0].mxu0
      %v1259 = vadd.f32 0.0, %v1258
      %v1260 = vpop.f32.mrb[0].mxu0
      %1261 = vmatprep.mubr.f32.mxu0 0.0
      %1262 = vmatmul.mubr.f32.gmra.mrb[0].mxu0 %v1077
      %v1263 = vpop.f32.mrb[0].mxu0
      %v1264 = vadd.f32 0.0, %v1263
      %v1265 = vpop.f32.mrb[0].mxu0
      %1266 = vmatprep.mubr.f32.mxu0 0.0
      %1267 = vmatmul.mubr.f32.gmra.mrb[0].mxu0 %v1080
      %v1268 = vpop.f32.mrb[0].mxu0
      %v1269 = vadd.f32 0.0, %v1268
      %v1270 = vpop.f32.mrb[0].mxu0
      %1271 = vmatprep.mubr.f32.mxu0 0.0
      %1272 = vmatmul.mubr.f32.gmra.mrb[0].mxu0 %v1083
      %v1273 = vpop.f32.mrb[0].mxu0
      %v1274 = vadd.f32 0.0, %v1273
      %v1275 = vpop.f32.mrb[0].mxu0
      %1276 = vmatprep.mubr.f32.mxu0 0.0
      %1277 = vmatmul.mubr.f32.gmra.mrb[0].mxu0 %v1086
      %v1278 = vpop.f32.mrb[0].mxu0
      %v1279 = vadd.f32 0.0, %v1278
      %v1280 = vpop.f32.mrb[0].mxu0
      %1281 = vmatprep.mubr.f32.mxu0 0.0
      %1282 = vmatmul.mubr.f32.gmra.mrb[0].mxu0 %v1089
      %v1283 = vpop.f32.mrb[0].mxu0
      %v1284 = vadd.f32 0.0, %v1283
      %v1285 = vpop.f32.mrb[0].mxu0
      %1286 = vmatprep.mubr.f32.mxu0 0.0
      %1287 = vmatmul.mubr.f32.gmra.mrb[0].mxu0 %v1092
      %v1288 = vpop.f32.mrb[0].mxu0
      %v1289 = vadd.f32 0.0, %v1288
      %v1290 = vpop.f32.mrb[0].mxu0
      %1291 = vmatprep.mubr.f32.mxu0 0.0
      %1292 = vmatmul.mubr.f32.gmra.mrb[0].mxu0 %v1095
      %v1293 = vpop.f32.mrb[0].mxu0
      %v1294 = vadd.f32 0.0, %v1293
      %v1295 = vpop.f32.mrb[0].mxu0
      %1296 = vmatprep.mubr.f32.mxu0 0.0
      %1297 = vmatmul.mubr.f32.gmra.mrb[0].mxu0 %v1098
      %v1298 = vpop.f32.mrb[0].mxu0
      %v1299 = vadd.f32 0.0, %v1298
      %v1300 = vpop.f32.mrb[0].mxu0
      %1301 = vmatprep.mubr.f32.mxu0 0.0
      %1302 = vmatmul.mubr.f32.gmra.mrb[0].mxu0 %v1101
      %v1303 = vpop.f32.mrb[0].mxu0
      %v1304 = vadd.f32 0.0, %v1303
      %v1305 = vpop.f32.mrb[0].mxu0
      %1306 = vmatprep.mubr.f32.mxu0 0.0
      %1307 = vmatmul.mubr.f32.gmra.mrb[0].mxu0 %v1104
      %v1308 = vpop.f32.mrb[0].mxu0
      %v1309 = vadd.f32 0.0, %v1308
      %v1310 = vpop.f32.mrb[0].mxu0
      %1311 = vmatprep.mubr.f32.mxu0 0.0
      %1312 = vmatmul.mubr.f32.gmra.mrb[0].mxu0 %v1107
      %v1313 = vpop.f32.mrb[0].mxu0
      %v1314 = vadd.f32 0.0, %v1313
      %v1315 = vpop.f32.mrb[0].mxu0
      %1316 = vmatprep.mubr.f32.mxu0 0.0
      %1317 = vmatmul.mubr.f32.gmra.mrb[0].mxu0 %v1110
      %v1318 = vpop.f32.mrb[0].mxu0
      %v1319 = vadd.f32 0.0, %v1318
      %v1320 = vpop.f32.mrb[0].mxu0
      %1321 = vmatprep.mubr.f32.mxu0 0.0
      %1322 = vmatmul.mubr.f32.gmra.mrb[0].mxu0 %v1113
      %v1323 = vpop.f32.mrb[0].mxu0
      %v1324 = vadd.f32 0.0, %v1323
      %v1325 = vpop.f32.mrb[0].mxu0
      %1326 = vmatprep.mubr.f32.mxu0 0.0
      %1327 = vmatmul.mubr.f32.gmra.mrb[0].mxu0 %v1116
      %v1328 = vpop.f32.mrb[0].mxu0
      %v1329 = vadd.f32 0.0, %v1328
      %v1330 = vpop.f32.mrb[0].mxu0
      %1331 = vmatprep.mubr.f32.mxu0 0.0
      %1332 = vmatmul.mubr.f32.gmra.mrb[0].mxu0 %v1119
      %v1333 = vpop.f32.mrb[0].mxu0
      %v1334 = vadd.f32 0.0, %v1333
      %v1335 = vpop.f32.mrb[0].mxu0
      %1336 = vmatprep.mubr.f32.mxu0 0.0
      %1337 = vmatmul.mubr.f32.gmra.mrb[0].mxu0 %v1122
      %v1338 = vpop.f32.mrb[0].mxu0
      %v1339 = vadd.f32 0.0, %v1338
      %v1340 = vpop.f32.mrb[0].mxu0
      %1341 = vmatprep.mubr.f32.mxu0 0.0
      %1342 = vmatmul.mubr.f32.gmra.mrb[0].mxu0 %v1125
      %v1343 = vpop.f32.mrb[0].mxu0
      %v1344 = vadd.f32 0.0, %v1343
      %v1345 = vpop.f32.mrb[0].mxu0
      %1346 = vmatprep.mubr.f32.mxu0 0.0
      %1347 = vmatmul.mubr.f32.gmra.mrb[0].mxu0 %v1128
      %v1348 = vpop.f32.mrb[0].mxu0
      %v1349 = vadd.f32 0.0, %v1348
      %v1350 = vpop.f32.mrb[0].mxu0
      %1351 = vmatprep.mubr.f32.mxu0 0.0
      %1352 = vmatmul.mubr.f32.gmra.mrb[0].mxu0 %v1131
      %v1353 = vpop.f32.mrb[0].mxu0
      %v1354 = vadd.f32 0.0, %v1353
      %v1355 = vpop.f32.mrb[0].mxu0
      %1356 = vmatprep.mubr.f32.mxu0 0.0
      %1357 = vmatmul.mubr.f32.gmra.mrb[0].mxu0 %v1134
      %v1358 = vpop.f32.mrb[0].mxu0
      %v1359 = vadd.f32 0.0, %v1358
      %v1360 = vpop.f32.mrb[0].mxu0
      %1361 = vmatprep.mubr.f32.mxu0 0.0
      %1362 = vmatmul.mubr.f32.gmra.mrb[0].mxu0 %v1137
      %v1363 = vpop.f32.mrb[0].mxu0
      %v1364 = vadd.f32 0.0, %v1363
      %v1365 = vpop.f32.mrb[0].mxu0
      %1366 = vdwg.mxu0
      %v1367 = vadd.f32 %v851, %v1209
      %v1368 = vadd.f32 %v856, %v1214
      %v1369 = vadd.f32 %v861, %v1219
      %v1370 = vadd.f32 %v866, %v1224
      %v1371 = vadd.f32 %v871, %v1229
      %v1372 = vadd.f32 %v876, %v1234
      %v1373 = vadd.f32 %v881, %v1239
      %v1374 = vadd.f32 %v886, %v1244
      %v1375 = vadd.f32 %v891, %v1249
      %v1376 = vadd.f32 %v896, %v1254
      %v1377 = vadd.f32 %v901, %v1259
      %v1378 = vadd.f32 %v906, %v1264
      %v1379 = vadd.f32 %v911, %v1269
      %v1380 = vadd.f32 %v916, %v1274
      %v1381 = vadd.f32 %v921, %v1279
      %v1382 = vadd.f32 %v926, %v1284
      %v1383 = vadd.f32 %v931, %v1289
      %v1384 = vadd.f32 %v936, %v1294
      %v1385 = vadd.f32 %v941, %v1299
      %v1386 = vadd.f32 %v946, %v1304
      %v1387 = vadd.f32 %v951, %v1309
      %v1388 = vadd.f32 %v956, %v1314
      %v1389 = vadd.f32 %v961, %v1319
      %v1390 = vadd.f32 %v966, %v1324
      %v1391 = vadd.f32 %v971, %v1329
      %v1392 = vadd.f32 %v976, %v1334
      %v1393 = vadd.f32 %v981, %v1339
      %v1394 = vadd.f32 %v986, %v1344
      %v1395 = vadd.f32 %v991, %v1349
      %v1396 = vadd.f32 %v996, %v1354
      %v1397 = vadd.f32 %v1001, %v1359
      %v1398 = vadd.f32 %v1006, %v1364
      %v1399 = vld [vmem:[%s260] sm:$0xff]
      %v1400 = vld [vmem:[%s260 + $0x8] sm:$0xff]
      %v1401 = vld [vmem:[%s260 + $0x18] sm:$0xff]
      %v1402 = vld [vmem:[%s260 + $0x20] sm:$0xff]
      %v1403 = vld [vmem:[%s260 + $0x30] sm:$0xff]
      %v1404 = vld [vmem:[%s260 + $0x38] sm:$0xff]
      %v1405 = vld [vmem:[%s260 + $0x48] sm:$0xff]
      %v1406 = vld [vmem:[%s260 + $0x50] sm:$0xff]
      %v1407 = vld [vmem:[%s260 + $0x60] sm:$0xff]
      %v1408 = vld [vmem:[%s260 + $0x68] sm:$0xff]
      %v1409 = vld [vmem:[%s260 + $0x78] sm:$0xff]
      %v1410 = vld [vmem:[%s260 + $0x80] sm:$0xff]
      %v1411 = vld [vmem:[%s260 + $0x90] sm:$0xff]
      %v1412 = vld [vmem:[%s260 + $0x98] sm:$0xff]
      %v1413 = vld [vmem:[%s260 + $0xa8] sm:$0xff]
      %v1414 = vld [vmem:[%s260 + $0xb0] sm:$0xff]
      %v1415 = vld [vmem:[%s260 + $0xc0] sm:$0xff]
      %v1416 = vld [vmem:[%s260 + $0xc8] sm:$0xff]
      %v1417 = vld [vmem:[%s260 + $0xd8] sm:$0xff]
      %v1418 = vld [vmem:[%s260 + $0xe0] sm:$0xff]
      %v1419 = vld [vmem:[%s260 + $0xf0] sm:$0xff]
      %v1420 = vld [vmem:[%s260 + $0xf8] sm:$0xff]
      %v1421 = vld [vmem:[%s260 + $0x108] sm:$0xff]
      %v1422 = vld [vmem:[%s260 + $0x110] sm:$0xff]
      %v1423 = vld [vmem:[%s260 + $0x120] sm:$0xff]
      %v1424 = vld [vmem:[%s260 + $0x128] sm:$0xff]
      %v1425 = vld [vmem:[%s260 + $0x138] sm:$0xff]
      %v1426 = vld [vmem:[%s260 + $0x140] sm:$0xff]
      %v1427 = vld [vmem:[%s260 + $0x150] sm:$0xff]
      %v1428 = vld [vmem:[%s260 + $0x158] sm:$0xff]
      %v1429 = vld [vmem:[%s260 + $0x168] sm:$0xff]
      %v1430 = vld [vmem:[%s260 + $0x170] sm:$0xff]
      %s1431 = scalar_lea.vmem %s1, 12
      %v1432 = vld [vmem:[%s1431] sm:$0xf]
      %v1434 = vsel %vm182, %v1399, 0
      %v1437 = vsel %vm182, %v1400, 0
      %v1440 = vsel %vm182, %v1401, 0
      %v1443 = vsel %vm182, %v1402, 0
      %v1446 = vsel %vm182, %v1403, 0
      %v1449 = vsel %vm182, %v1404, 0
      %v1452 = vsel %vm182, %v1405, 0
      %v1455 = vsel %vm182, %v1406, 0
      %v1458 = vsel %vm182, %v1407, 0
      %v1461 = vsel %vm182, %v1408, 0
      %v1464 = vsel %vm182, %v1409, 0
      %v1467 = vsel %vm182, %v1410, 0
      %v1470 = vsel %vm182, %v1411, 0
      %v1473 = vsel %vm182, %v1412, 0
      %v1476 = vsel %vm182, %v1413, 0
      %v1479 = vsel %vm182, %v1414, 0
      %v1482 = vsel %vm182, %v1415, 0
      %v1485 = vsel %vm182, %v1416, 0
      %v1488 = vsel %vm182, %v1417, 0
      %v1491 = vsel %vm182, %v1418, 0
      %v1494 = vsel %vm182, %v1419, 0
      %v1497 = vsel %vm182, %v1420, 0
      %v1500 = vsel %vm182, %v1421, 0
      %v1503 = vsel %vm182, %v1422, 0
      %v1506 = vsel %vm182, %v1423, 0
      %v1509 = vsel %vm182, %v1424, 0
      %v1512 = vsel %vm182, %v1425, 0
      %v1515 = vsel %vm182, %v1426, 0
      %v1518 = vsel %vm182, %v1427, 0
      %v1521 = vsel %vm182, %v1428, 0
      %v1524 = vsel %vm182, %v1429, 0
      %v1527 = vsel %vm182, %v1430, 0
      %v1530 = vsel %vm456, %v1432, 0
      %1532 = vmatprep.subr.mxu0 0.0
      %1533 = vmatpush1.msra.mxu0 %v1530
      %1534 = vmatprep.subr.mxu0 0.0
      %1535 = vmatpush1.msra.mxu0 0.0
      %1536 = vmatprep.subr.mxu0 0.0
      %1537 = vmatpush1.msra.mxu0 0.0
      %1538 = vmatprep.subr.mxu0 0.0
      %1539 = vmatpush1.msra.mxu0 0.0
      %1540 = vmatprep.subr.mxu0 0.0
      %1541 = vmatpush1.msra.mxu0 0.0
      %1542 = vmatprep.subr.mxu0 0.0
      %1543 = vmatpush1.msra.mxu0 0.0
      %1544 = vmatprep.subr.mxu0 0.0
      %1545 = vmatpush1.msra.mxu0 0.0
      %1546 = vmatprep.subr.mxu0 0.0
      %1547 = vmatpush1.msra.mxu0 0.0
      %1548 = vmatprep.subr.mxu0 0.0
      %1549 = vmatpush1.msra.mxu0 0.0
      %1550 = vmatprep.subr.mxu0 0.0
      %1551 = vmatpush1.msra.mxu0 0.0
      %1552 = vmatprep.subr.mxu0 0.0
      %1553 = vmatpush1.msra.mxu0 0.0
      %1554 = vmatprep.subr.mxu0 0.0
      %1555 = vmatpush1.msra.mxu0 0.0
      %1556 = vmatprep.subr.mxu0 0.0
      %1557 = vmatpush1.msra.mxu0 0.0
      %1558 = vmatprep.subr.mxu0 0.0
      %1559 = vmatpush1.msra.mxu0 0.0
      %1560 = vmatprep.subr.mxu0 0.0
      %1561 = vmatpush1.msra.mxu0 0.0
      %1562 = vmatprep.subr.mxu0 0.0
      %1563 = vmatpush1.msra.mxu0 0.0
      %1564 = vmatprep.subr.mxu0 0.0
      %1565 = vmatpush1.msra.mxu0 0.0
      %1566 = vmatprep.subr.mxu0 0.0
      %1567 = vmatpush1.msra.mxu0 0.0
      %1568 = vmatprep.subr.mxu0 0.0
      %1569 = vmatpush1.msra.mxu0 0.0
      %1570 = vmatprep.subr.mxu0 0.0
      %1571 = vmatpush1.msra.mxu0 0.0
      %1572 = vmatprep.subr.mxu0 0.0
      %1573 = vmatpush1.msra.mxu0 0.0
      %1574 = vmatprep.subr.mxu0 0.0
      %1575 = vmatpush1.msra.mxu0 0.0
      %1576 = vmatprep.subr.mxu0 0.0
      %1577 = vmatpush1.msra.mxu0 0.0
      %1578 = vmatprep.subr.mxu0 0.0
      %1579 = vmatpush1.msra.mxu0 0.0
      %1580 = vmatprep.subr.mxu0 0.0
      %1581 = vmatpush1.msra.mxu0 0.0
      %1582 = vmatprep.subr.mxu0 0.0
      %1583 = vmatpush1.msra.mxu0 0.0
      %1584 = vmatprep.subr.mxu0 0.0
      %1585 = vmatpush1.msra.mxu0 0.0
      %1586 = vmatprep.subr.mxu0 0.0
      %1587 = vmatpush1.msra.mxu0 0.0
      %1588 = vmatprep.subr.mxu0 0.0
      %1589 = vmatpush1.msra.mxu0 0.0
      %1590 = vmatprep.subr.mxu0 0.0
      %1591 = vmatpush1.msra.mxu0 0.0
      %1592 = vmatprep.subr.mxu0 0.0
      %1593 = vmatpush1.msra.mxu0 0.0
      %1594 = vmatprep.subr.mxu0 0.0
      %1595 = vmatpush1.msra.mxu0 0.0
      %1596 = vmatprep.mubr.f32.mxu0 0.0
      %1597 = vmatmul.mubr.f32.gmra.mrb[0].mxu0 %v1434
      %v1598 = vpop.f32.mrb[0].mxu0
      %v1599 = vadd.f32 0.0, %v1598
      %v1600 = vpop.f32.mrb[0].mxu0
      %1601 = vmatprep.mubr.f32.mxu0 0.0
      %1602 = vmatmul.mubr.f32.gmra.mrb[0].mxu0 %v1437
      %v1603 = vpop.f32.mrb[0].mxu0
      %v1604 = vadd.f32 0.0, %v1603
      %v1605 = vpop.f32.mrb[0].mxu0
      %1606 = vmatprep.mubr.f32.mxu0 0.0
      %1607 = vmatmul.mubr.f32.gmra.mrb[0].mxu0 %v1440
      %v1608 = vpop.f32.mrb[0].mxu0
      %v1609 = vadd.f32 0.0, %v1608
      %v1610 = vpop.f32.mrb[0].mxu0
      %1611 = vmatprep.mubr.f32.mxu0 0.0
      %1612 = vmatmul.mubr.f32.gmra.mrb[0].mxu0 %v1443
      %v1613 = vpop.f32.mrb[0].mxu0
      %v1614 = vadd.f32 0.0, %v1613
      %v1615 = vpop.f32.mrb[0].mxu0
      %1616 = vmatprep.mubr.f32.mxu0 0.0
      %1617 = vmatmul.mubr.f32.gmra.mrb[0].mxu0 %v1446
      %v1618 = vpop.f32.mrb[0].mxu0
      %v1619 = vadd.f32 0.0, %v1618
      %v1620 = vpop.f32.mrb[0].mxu0
      %1621 = vmatprep.mubr.f32.mxu0 0.0
      %1622 = vmatmul.mubr.f32.gmra.mrb[0].mxu0 %v1449
      %v1623 = vpop.f32.mrb[0].mxu0
      %v1624 = vadd.f32 0.0, %v1623
      %v1625 = vpop.f32.mrb[0].mxu0
      %1626 = vmatprep.mubr.f32.mxu0 0.0
      %1627 = vmatmul.mubr.f32.gmra.mrb[0].mxu0 %v1452
      %v1628 = vpop.f32.mrb[0].mxu0
      %v1629 = vadd.f32 0.0, %v1628
      %v1630 = vpop.f32.mrb[0].mxu0
      %1631 = vmatprep.mubr.f32.mxu0 0.0
      %1632 = vmatmul.mubr.f32.gmra.mrb[0].mxu0 %v1455
      %v1633 = vpop.f32.mrb[0].mxu0
      %v1634 = vadd.f32 0.0, %v1633
      %v1635 = vpop.f32.mrb[0].mxu0
      %1636 = vmatprep.mubr.f32.mxu0 0.0
      %1637 = vmatmul.mubr.f32.gmra.mrb[0].mxu0 %v1458
      %v1638 = vpop.f32.mrb[0].mxu0
      %v1639 = vadd.f32 0.0, %v1638
      %v1640 = vpop.f32.mrb[0].mxu0
      %1641 = vmatprep.mubr.f32.mxu0 0.0
      %1642 = vmatmul.mubr.f32.gmra.mrb[0].mxu0 %v1461
      %v1643 = vpop.f32.mrb[0].mxu0
      %v1644 = vadd.f32 0.0, %v1643
      %v1645 = vpop.f32.mrb[0].mxu0
      %1646 = vmatprep.mubr.f32.mxu0 0.0
      %1647 = vmatmul.mubr.f32.gmra.mrb[0].mxu0 %v1464
      %v1648 = vpop.f32.mrb[0].mxu0
      %v1649 = vadd.f32 0.0, %v1648
      %v1650 = vpop.f32.mrb[0].mxu0
      %1651 = vmatprep.mubr.f32.mxu0 0.0
      %1652 = vmatmul.mubr.f32.gmra.mrb[0].mxu0 %v1467
      %v1653 = vpop.f32.mrb[0].mxu0
      %v1654 = vadd.f32 0.0, %v1653
      %v1655 = vpop.f32.mrb[0].mxu0
      %1656 = vmatprep.mubr.f32.mxu0 0.0
      %1657 = vmatmul.mubr.f32.gmra.mrb[0].mxu0 %v1470
      %v1658 = vpop.f32.mrb[0].mxu0
      %v1659 = vadd.f32 0.0, %v1658
      %v1660 = vpop.f32.mrb[0].mxu0
      %1661 = vmatprep.mubr.f32.mxu0 0.0
      %1662 = vmatmul.mubr.f32.gmra.mrb[0].mxu0 %v1473
      %v1663 = vpop.f32.mrb[0].mxu0
      %v1664 = vadd.f32 0.0, %v1663
      %v1665 = vpop.f32.mrb[0].mxu0
      %1666 = vmatprep.mubr.f32.mxu0 0.0
      %1667 = vmatmul.mubr.f32.gmra.mrb[0].mxu0 %v1476
      %v1668 = vpop.f32.mrb[0].mxu0
      %v1669 = vadd.f32 0.0, %v1668
      %v1670 = vpop.f32.mrb[0].mxu0
      %1671 = vmatprep.mubr.f32.mxu0 0.0
      %1672 = vmatmul.mubr.f32.gmra.mrb[0].mxu0 %v1479
      %v1673 = vpop.f32.mrb[0].mxu0
      %v1674 = vadd.f32 0.0, %v1673
      %v1675 = vpop.f32.mrb[0].mxu0
      %1676 = vmatprep.mubr.f32.mxu0 0.0
      %1677 = vmatmul.mubr.f32.gmra.mrb[0].mxu0 %v1482
      %v1678 = vpop.f32.mrb[0].mxu0
      %v1679 = vadd.f32 0.0, %v1678
      %v1680 = vpop.f32.mrb[0].mxu0
      %1681 = vmatprep.mubr.f32.mxu0 0.0
      %1682 = vmatmul.mubr.f32.gmra.mrb[0].mxu0 %v1485
      %v1683 = vpop.f32.mrb[0].mxu0
      %v1684 = vadd.f32 0.0, %v1683
      %v1685 = vpop.f32.mrb[0].mxu0
      %1686 = vmatprep.mubr.f32.mxu0 0.0
      %1687 = vmatmul.mubr.f32.gmra.mrb[0].mxu0 %v1488
      %v1688 = vpop.f32.mrb[0].mxu0
      %v1689 = vadd.f32 0.0, %v1688
      %v1690 = vpop.f32.mrb[0].mxu0
      %1691 = vmatprep.mubr.f32.mxu0 0.0
      %1692 = vmatmul.mubr.f32.gmra.mrb[0].mxu0 %v1491
      %v1693 = vpop.f32.mrb[0].mxu0
      %v1694 = vadd.f32 0.0, %v1693
      %v1695 = vpop.f32.mrb[0].mxu0
      %1696 = vmatprep.mubr.f32.mxu0 0.0
      %1697 = vmatmul.mubr.f32.gmra.mrb[0].mxu0 %v1494
      %v1698 = vpop.f32.mrb[0].mxu0
      %v1699 = vadd.f32 0.0, %v1698
      %v1700 = vpop.f32.mrb[0].mxu0
      %1701 = vmatprep.mubr.f32.mxu0 0.0
      %1702 = vmatmul.mubr.f32.gmra.mrb[0].mxu0 %v1497
      %v1703 = vpop.f32.mrb[0].mxu0
      %v1704 = vadd.f32 0.0, %v1703
      %v1705 = vpop.f32.mrb[0].mxu0
      %1706 = vmatprep.mubr.f32.mxu0 0.0
      %1707 = vmatmul.mubr.f32.gmra.mrb[0].mxu0 %v1500
      %v1708 = vpop.f32.mrb[0].mxu0
      %v1709 = vadd.f32 0.0, %v1708
      %v1710 = vpop.f32.mrb[0].mxu0
      %1711 = vmatprep.mubr.f32.mxu0 0.0
      %1712 = vmatmul.mubr.f32.gmra.mrb[0].mxu0 %v1503
      %v1713 = vpop.f32.mrb[0].mxu0
      %v1714 = vadd.f32 0.0, %v1713
      %v1715 = vpop.f32.mrb[0].mxu0
      %1716 = vmatprep.mubr.f32.mxu0 0.0
      %1717 = vmatmul.mubr.f32.gmra.mrb[0].mxu0 %v1506
      %v1718 = vpop.f32.mrb[0].mxu0
      %v1719 = vadd.f32 0.0, %v1718
      %v1720 = vpop.f32.mrb[0].mxu0
      %1721 = vmatprep.mubr.f32.mxu0 0.0
      %1722 = vmatmul.mubr.f32.gmra.mrb[0].mxu0 %v1509
      %v1723 = vpop.f32.mrb[0].mxu0
      %v1724 = vadd.f32 0.0, %v1723
      %v1725 = vpop.f32.mrb[0].mxu0
      %1726 = vmatprep.mubr.f32.mxu0 0.0
      %1727 = vmatmul.mubr.f32.gmra.mrb[0].mxu0 %v1512
      %v1728 = vpop.f32.mrb[0].mxu0
      %v1729 = vadd.f32 0.0, %v1728
      %v1730 = vpop.f32.mrb[0].mxu0
      %1731 = vmatprep.mubr.f32.mxu0 0.0
      %1732 = vmatmul.mubr.f32.gmra.mrb[0].mxu0 %v1515
      %v1733 = vpop.f32.mrb[0].mxu0
      %v1734 = vadd.f32 0.0, %v1733
      %v1735 = vpop.f32.mrb[0].mxu0
      %1736 = vmatprep.mubr.f32.mxu0 0.0
      %1737 = vmatmul.mubr.f32.gmra.mrb[0].mxu0 %v1518
      %v1738 = vpop.f32.mrb[0].mxu0
      %v1739 = vadd.f32 0.0, %v1738
      %v1740 = vpop.f32.mrb[0].mxu0
      %1741 = vmatprep.mubr.f32.mxu0 0.0
      %1742 = vmatmul.mubr.f32.gmra.mrb[0].mxu0 %v1521
      %v1743 = vpop.f32.mrb[0].mxu0
      %v1744 = vadd.f32 0.0, %v1743
      %v1745 = vpop.f32.mrb[0].mxu0
      %1746 = vmatprep.mubr.f32.mxu0 0.0
      %1747 = vmatmul.mubr.f32.gmra.mrb[0].mxu0 %v1524
      %v1748 = vpop.f32.mrb[0].mxu0
      %v1749 = vadd.f32 0.0, %v1748
      %v1750 = vpop.f32.mrb[0].mxu0
      %1751 = vmatprep.mubr.f32.mxu0 0.0
      %1752 = vmatmul.mubr.f32.gmra.mrb[0].mxu0 %v1527
      %v1753 = vpop.f32.mrb[0].mxu0
      %v1754 = vadd.f32 0.0, %v1753
      %v1755 = vpop.f32.mrb[0].mxu0
      %1756 = vdwg.mxu0
      %v1757 = vadd.f32 %v1367, %v1599
      %v1758 = vadd.f32 %v1368, %v1604
      %v1759 = vadd.f32 %v1369, %v1609
      %v1760 = vadd.f32 %v1370, %v1614
      %v1761 = vadd.f32 %v1371, %v1619
      %v1762 = vadd.f32 %v1372, %v1624
      %v1763 = vadd.f32 %v1373, %v1629
      %v1764 = vadd.f32 %v1374, %v1634
      %v1765 = vadd.f32 %v1375, %v1639
      %v1766 = vadd.f32 %v1376, %v1644
      %v1767 = vadd.f32 %v1377, %v1649
      %v1768 = vadd.f32 %v1378, %v1654
      %v1769 = vadd.f32 %v1379, %v1659
      %v1770 = vadd.f32 %v1380, %v1664
      %v1771 = vadd.f32 %v1381, %v1669
      %v1772 = vadd.f32 %v1382, %v1674
      %v1773 = vadd.f32 %v1383, %v1679
      %v1774 = vadd.f32 %v1384, %v1684
      %v1775 = vadd.f32 %v1385, %v1689
      %v1776 = vadd.f32 %v1386, %v1694
      %v1777 = vadd.f32 %v1387, %v1699
      %v1778 = vadd.f32 %v1388, %v1704
      %v1779 = vadd.f32 %v1389, %v1709
      %v1780 = vadd.f32 %v1390, %v1714
      %v1781 = vadd.f32 %v1391, %v1719
      %v1782 = vadd.f32 %v1392, %v1724
      %v1783 = vadd.f32 %v1393, %v1729
      %v1784 = vadd.f32 %v1394, %v1734
      %v1785 = vadd.f32 %v1395, %v1739
      %v1786 = vadd.f32 %v1396, %v1744
      %v1787 = vadd.f32 %v1397, %v1749
      %v1788 = vadd.f32 %v1398, %v1754
      %v1789 = vld [vmem:[%s260 + $0x1] sm:$0xff]
      %v1790 = vld [vmem:[%s260 + $0x9] sm:$0xff]
      %v1791 = vld [vmem:[%s260 + $0x19] sm:$0xff]
      %v1792 = vld [vmem:[%s260 + $0x21] sm:$0xff]
      %v1793 = vld [vmem:[%s260 + $0x31] sm:$0xff]
      %v1794 = vld [vmem:[%s260 + $0x39] sm:$0xff]
      %v1795 = vld [vmem:[%s260 + $0x49] sm:$0xff]
      %v1796 = vld [vmem:[%s260 + $0x51] sm:$0xff]
      %v1797 = vld [vmem:[%s260 + $0x61] sm:$0xff]
      %v1798 = vld [vmem:[%s260 + $0x69] sm:$0xff]
      %v1799 = vld [vmem:[%s260 + $0x79] sm:$0xff]
      %v1800 = vld [vmem:[%s260 + $0x81] sm:$0xff]
      %v1801 = vld [vmem:[%s260 + $0x91] sm:$0xff]
      %v1802 = vld [vmem:[%s260 + $0x99] sm:$0xff]
      %v1803 = vld [vmem:[%s260 + $0xa9] sm:$0xff]
      %v1804 = vld [vmem:[%s260 + $0xb1] sm:$0xff]
      %v1805 = vld [vmem:[%s260 + $0xc1] sm:$0xff]
      %v1806 = vld [vmem:[%s260 + $0xc9] sm:$0xff]
      %v1807 = vld [vmem:[%s260 + $0xd9] sm:$0xff]
      %v1808 = vld [vmem:[%s260 + $0xe1] sm:$0xff]
      %v1809 = vld [vmem:[%s260 + $0xf1] sm:$0xff]
      %v1810 = vld [vmem:[%s260 + $0xf9] sm:$0xff]
      %v1811 = vld [vmem:[%s260 + $0x109] sm:$0xff]
      %v1812 = vld [vmem:[%s260 + $0x111] sm:$0xff]
      %v1813 = vld [vmem:[%s260 + $0x121] sm:$0xff]
      %v1814 = vld [vmem:[%s260 + $0x129] sm:$0xff]
      %v1815 = vld [vmem:[%s260 + $0x139] sm:$0xff]
      %v1816 = vld [vmem:[%s260 + $0x141] sm:$0xff]
      %v1817 = vld [vmem:[%s260 + $0x151] sm:$0xff]
      %v1818 = vld [vmem:[%s260 + $0x159] sm:$0xff]
      %v1819 = vld [vmem:[%s260 + $0x169] sm:$0xff]
      %v1820 = vld [vmem:[%s260 + $0x171] sm:$0xff]
      %s1821 = scalar_lea.vmem %s1, 16
      %v1822 = vld [vmem:[%s1821] sm:$0xf]
      %v1824 = vsel %vm182, %v1789, 0
      %v1827 = vsel %vm182, %v1790, 0
      %v1830 = vsel %vm182, %v1791, 0
      %v1833 = vsel %vm182, %v1792, 0
      %v1836 = vsel %vm182, %v1793, 0
      %v1839 = vsel %vm182, %v1794, 0
      %v1842 = vsel %vm182, %v1795, 0
      %v1845 = vsel %vm182, %v1796, 0
      %v1848 = vsel %vm182, %v1797, 0
      %v1851 = vsel %vm182, %v1798, 0
      %v1854 = vsel %vm182, %v1799, 0
      %v1857 = vsel %vm182, %v1800, 0
      %v1860 = vsel %vm182, %v1801, 0
      %v1863 = vsel %vm182, %v1802, 0
      %v1866 = vsel %vm182, %v1803, 0
      %v1869 = vsel %vm182, %v1804, 0
      %v1872 = vsel %vm182, %v1805, 0
      %v1875 = vsel %vm182, %v1806, 0
      %v1878 = vsel %vm182, %v1807, 0
      %v1881 = vsel %vm182, %v1808, 0
      %v1884 = vsel %vm182, %v1809, 0
      %v1887 = vsel %vm182, %v1810, 0
      %v1890 = vsel %vm182, %v1811, 0
      %v1893 = vsel %vm182, %v1812, 0
      %v1896 = vsel %vm182, %v1813, 0
      %v1899 = vsel %vm182, %v1814, 0
      %v1902 = vsel %vm182, %v1815, 0
      %v1905 = vsel %vm182, %v1816, 0
      %v1908 = vsel %vm182, %v1817, 0
      %v1911 = vsel %vm182, %v1818, 0
      %v1914 = vsel %vm182, %v1819, 0
      %v1917 = vsel %vm182, %v1820, 0
      %v1920 = vsel %vm456, %v1822, 0
      %1922 = vmatprep.subr.mxu0 0.0
      %1923 = vmatpush1.msra.mxu0 %v1920
      %1924 = vmatprep.subr.mxu0 0.0
      %1925 = vmatpush1.msra.mxu0 0.0
      %1926 = vmatprep.subr.mxu0 0.0
      %1927 = vmatpush1.msra.mxu0 0.0
      %1928 = vmatprep.subr.mxu0 0.0
      %1929 = vmatpush1.msra.mxu0 0.0
      %1930 = vmatprep.subr.mxu0 0.0
      %1931 = vmatpush1.msra.mxu0 0.0
      %1932 = vmatprep.subr.mxu0 0.0
      %1933 = vmatpush1.msra.mxu0 0.0
      %1934 = vmatprep.subr.mxu0 0.0
      %1935 = vmatpush1.msra.mxu0 0.0
      %1936 = vmatprep.subr.mxu0 0.0
      %1937 = vmatpush1.msra.mxu0 0.0
      %1938 = vmatprep.subr.mxu0 0.0
      %1939 = vmatpush1.msra.mxu0 0.0
      %1940 = vmatprep.subr.mxu0 0.0
      %1941 = vmatpush1.msra.mxu0 0.0
      %1942 = vmatprep.subr.mxu0 0.0
      %1943 = vmatpush1.msra.mxu0 0.0
      %1944 = vmatprep.subr.mxu0 0.0
      %1945 = vmatpush1.msra.mxu0 0.0
      %1946 = vmatprep.subr.mxu0 0.0
      %1947 = vmatpush1.msra.mxu0 0.0
      %1948 = vmatprep.subr.mxu0 0.0
      %1949 = vmatpush1.msra.mxu0 0.0
      %1950 = vmatprep.subr.mxu0 0.0
      %1951 = vmatpush1.msra.mxu0 0.0
      %1952 = vmatprep.subr.mxu0 0.0
      %1953 = vmatpush1.msra.mxu0 0.0
      %1954 = vmatprep.subr.mxu0 0.0
      %1955 = vmatpush1.msra.mxu0 0.0
      %1956 = vmatprep.subr.mxu0 0.0
      %1957 = vmatpush1.msra.mxu0 0.0
      %1958 = vmatprep.subr.mxu0 0.0
      %1959 = vmatpush1.msra.mxu0 0.0
      %1960 = vmatprep.subr.mxu0 0.0
      %1961 = vmatpush1.msra.mxu0 0.0
      %1962 = vmatprep.subr.mxu0 0.0
      %1963 = vmatpush1.msra.mxu0 0.0
      %1964 = vmatprep.subr.mxu0 0.0
      %1965 = vmatpush1.msra.mxu0 0.0
      %1966 = vmatprep.subr.mxu0 0.0
      %1967 = vmatpush1.msra.mxu0 0.0
      %1968 = vmatprep.subr.mxu0 0.0
      %1969 = vmatpush1.msra.mxu0 0.0
      %1970 = vmatprep.subr.mxu0 0.0
      %1971 = vmatpush1.msra.mxu0 0.0
      %1972 = vmatprep.subr.mxu0 0.0
      %1973 = vmatpush1.msra.mxu0 0.0
      %1974 = vmatprep.subr.mxu0 0.0
      %1975 = vmatpush1.msra.mxu0 0.0
      %1976 = vmatprep.subr.mxu0 0.0
      %1977 = vmatpush1.msra.mxu0 0.0
      %1978 = vmatprep.subr.mxu0 0.0
      %1979 = vmatpush1.msra.mxu0 0.0
      %1980 = vmatprep.subr.mxu0 0.0
      %1981 = vmatpush1.msra.mxu0 0.0
      %1982 = vmatprep.subr.mxu0 0.0
      %1983 = vmatpush1.msra.mxu0 0.0
      %1984 = vmatprep.subr.mxu0 0.0
      %1985 = vmatpush1.msra.mxu0 0.0
      %1986 = vmatprep.mubr.f32.mxu0 0.0
      %1987 = vmatmul.mubr.f32.gmra.mrb[0].mxu0 %v1824
      %v1988 = vpop.f32.mrb[0].mxu0
      %v1989 = vadd.f32 0.0, %v1988
      %v1990 = vpop.f32.mrb[0].mxu0
      %1991 = vmatprep.mubr.f32.mxu0 0.0
      %1992 = vmatmul.mubr.f32.gmra.mrb[0].mxu0 %v1827
      %v1993 = vpop.f32.mrb[0].mxu0
      %v1994 = vadd.f32 0.0, %v1993
      %v1995 = vpop.f32.mrb[0].mxu0
      %1996 = vmatprep.mubr.f32.mxu0 0.0
      %1997 = vmatmul.mubr.f32.gmra.mrb[0].mxu0 %v1830
      %v1998 = vpop.f32.mrb[0].mxu0
      %v1999 = vadd.f32 0.0, %v1998
      %v2000 = vpop.f32.mrb[0].mxu0
      %2001 = vmatprep.mubr.f32.mxu0 0.0
      %2002 = vmatmul.mubr.f32.gmra.mrb[0].mxu0 %v1833
      %v2003 = vpop.f32.mrb[0].mxu0
      %v2004 = vadd.f32 0.0, %v2003
      %v2005 = vpop.f32.mrb[0].mxu0
      %2006 = vmatprep.mubr.f32.mxu0 0.0
      %2007 = vmatmul.mubr.f32.gmra.mrb[0].mxu0 %v1836
      %v2008 = vpop.f32.mrb[0].mxu0
      %v2009 = vadd.f32 0.0, %v2008
      %v2010 = vpop.f32.mrb[0].mxu0
      %2011 = vmatprep.mubr.f32.mxu0 0.0
      %2012 = vmatmul.mubr.f32.gmra.mrb[0].mxu0 %v1839
      %v2013 = vpop.f32.mrb[0].mxu0
      %v2014 = vadd.f32 0.0, %v2013
      %v2015 = vpop.f32.mrb[0].mxu0
      %2016 = vmatprep.mubr.f32.mxu0 0.0
      %2017 = vmatmul.mubr.f32.gmra.mrb[0].mxu0 %v1842
      %v2018 = vpop.f32.mrb[0].mxu0
      %v2019 = vadd.f32 0.0, %v2018
      %v2020 = vpop.f32.mrb[0].mxu0
      %2021 = vmatprep.mubr.f32.mxu0 0.0
      %2022 = vmatmul.mubr.f32.gmra.mrb[0].mxu0 %v1845
      %v2023 = vpop.f32.mrb[0].mxu0
      %v2024 = vadd.f32 0.0, %v2023
      %v2025 = vpop.f32.mrb[0].mxu0
      %2026 = vmatprep.mubr.f32.mxu0 0.0
      %2027 = vmatmul.mubr.f32.gmra.mrb[0].mxu0 %v1848
      %v2028 = vpop.f32.mrb[0].mxu0
      %v2029 = vadd.f32 0.0, %v2028
      %v2030 = vpop.f32.mrb[0].mxu0
      %2031 = vmatprep.mubr.f32.mxu0 0.0
      %2032 = vmatmul.mubr.f32.gmra.mrb[0].mxu0 %v1851
      %v2033 = vpop.f32.mrb[0].mxu0
      %v2034 = vadd.f32 0.0, %v2033
      %v2035 = vpop.f32.mrb[0].mxu0
      %2036 = vmatprep.mubr.f32.mxu0 0.0
      %2037 = vmatmul.mubr.f32.gmra.mrb[0].mxu0 %v1854
      %v2038 = vpop.f32.mrb[0].mxu0
      %v2039 = vadd.f32 0.0, %v2038
      %v2040 = vpop.f32.mrb[0].mxu0
      %2041 = vmatprep.mubr.f32.mxu0 0.0
      %2042 = vmatmul.mubr.f32.gmra.mrb[0].mxu0 %v1857
      %v2043 = vpop.f32.mrb[0].mxu0
      %v2044 = vadd.f32 0.0, %v2043
      %v2045 = vpop.f32.mrb[0].mxu0
      %2046 = vmatprep.mubr.f32.mxu0 0.0
      %2047 = vmatmul.mubr.f32.gmra.mrb[0].mxu0 %v1860
      %v2048 = vpop.f32.mrb[0].mxu0
      %v2049 = vadd.f32 0.0, %v2048
      %v2050 = vpop.f32.mrb[0].mxu0
      %2051 = vmatprep.mubr.f32.mxu0 0.0
      %2052 = vmatmul.mubr.f32.gmra.mrb[0].mxu0 %v1863
      %v2053 = vpop.f32.mrb[0].mxu0
      %v2054 = vadd.f32 0.0, %v2053
      %v2055 = vpop.f32.mrb[0].mxu0
      %2056 = vmatprep.mubr.f32.mxu0 0.0
      %2057 = vmatmul.mubr.f32.gmra.mrb[0].mxu0 %v1866
      %v2058 = vpop.f32.mrb[0].mxu0
      %v2059 = vadd.f32 0.0, %v2058
      %v2060 = vpop.f32.mrb[0].mxu0
      %2061 = vmatprep.mubr.f32.mxu0 0.0
      %2062 = vmatmul.mubr.f32.gmra.mrb[0].mxu0 %v1869
      %v2063 = vpop.f32.mrb[0].mxu0
      %v2064 = vadd.f32 0.0, %v2063
      %v2065 = vpop.f32.mrb[0].mxu0
      %2066 = vmatprep.mubr.f32.mxu0 0.0
      %2067 = vmatmul.mubr.f32.gmra.mrb[0].mxu0 %v1872
      %v2068 = vpop.f32.mrb[0].mxu0
      %v2069 = vadd.f32 0.0, %v2068
      %v2070 = vpop.f32.mrb[0].mxu0
      %2071 = vmatprep.mubr.f32.mxu0 0.0
      %2072 = vmatmul.mubr.f32.gmra.mrb[0].mxu0 %v1875
      %v2073 = vpop.f32.mrb[0].mxu0
      %v2074 = vadd.f32 0.0, %v2073
      %v2075 = vpop.f32.mrb[0].mxu0
      %2076 = vmatprep.mubr.f32.mxu0 0.0
      %2077 = vmatmul.mubr.f32.gmra.mrb[0].mxu0 %v1878
      %v2078 = vpop.f32.mrb[0].mxu0
      %v2079 = vadd.f32 0.0, %v2078
      %v2080 = vpop.f32.mrb[0].mxu0
      %2081 = vmatprep.mubr.f32.mxu0 0.0
      %2082 = vmatmul.mubr.f32.gmra.mrb[0].mxu0 %v1881
      %v2083 = vpop.f32.mrb[0].mxu0
      %v2084 = vadd.f32 0.0, %v2083
      %v2085 = vpop.f32.mrb[0].mxu0
      %2086 = vmatprep.mubr.f32.mxu0 0.0
      %2087 = vmatmul.mubr.f32.gmra.mrb[0].mxu0 %v1884
      %v2088 = vpop.f32.mrb[0].mxu0
      %v2089 = vadd.f32 0.0, %v2088
      %v2090 = vpop.f32.mrb[0].mxu0
      %2091 = vmatprep.mubr.f32.mxu0 0.0
      %2092 = vmatmul.mubr.f32.gmra.mrb[0].mxu0 %v1887
      %v2093 = vpop.f32.mrb[0].mxu0
      %v2094 = vadd.f32 0.0, %v2093
      %v2095 = vpop.f32.mrb[0].mxu0
      %2096 = vmatprep.mubr.f32.mxu0 0.0
      %2097 = vmatmul.mubr.f32.gmra.mrb[0].mxu0 %v1890
      %v2098 = vpop.f32.mrb[0].mxu0
      %v2099 = vadd.f32 0.0, %v2098
      %v2100 = vpop.f32.mrb[0].mxu0
      %2101 = vmatprep.mubr.f32.mxu0 0.0
      %2102 = vmatmul.mubr.f32.gmra.mrb[0].mxu0 %v1893
      %v2103 = vpop.f32.mrb[0].mxu0
      %v2104 = vadd.f32 0.0, %v2103
      %v2105 = vpop.f32.mrb[0].mxu0
      %2106 = vmatprep.mubr.f32.mxu0 0.0
      %2107 = vmatmul.mubr.f32.gmra.mrb[0].mxu0 %v1896
      %v2108 = vpop.f32.mrb[0].mxu0
      %v2109 = vadd.f32 0.0, %v2108
      %v2110 = vpop.f32.mrb[0].mxu0
      %2111 = vmatprep.mubr.f32.mxu0 0.0
      %2112 = vmatmul.mubr.f32.gmra.mrb[0].mxu0 %v1899
      %v2113 = vpop.f32.mrb[0].mxu0
      %v2114 = vadd.f32 0.0, %v2113
      %v2115 = vpop.f32.mrb[0].mxu0
      %2116 = vmatprep.mubr.f32.mxu0 0.0
      %2117 = vmatmul.mubr.f32.gmra.mrb[0].mxu0 %v1902
      %v2118 = vpop.f32.mrb[0].mxu0
      %v2119 = vadd.f32 0.0, %v2118
      %v2120 = vpop.f32.mrb[0].mxu0
      %2121 = vmatprep.mubr.f32.mxu0 0.0
      %2122 = vmatmul.mubr.f32.gmra.mrb[0].mxu0 %v1905
      %v2123 = vpop.f32.mrb[0].mxu0
      %v2124 = vadd.f32 0.0, %v2123
      %v2125 = vpop.f32.mrb[0].mxu0
      %2126 = vmatprep.mubr.f32.mxu0 0.0
      %2127 = vmatmul.mubr.f32.gmra.mrb[0].mxu0 %v1908
      %v2128 = vpop.f32.mrb[0].mxu0
      %v2129 = vadd.f32 0.0, %v2128
      %v2130 = vpop.f32.mrb[0].mxu0
      %2131 = vmatprep.mubr.f32.mxu0 0.0
      %2132 = vmatmul.mubr.f32.gmra.mrb[0].mxu0 %v1911
      %v2133 = vpop.f32.mrb[0].mxu0
      %v2134 = vadd.f32 0.0, %v2133
      %v2135 = vpop.f32.mrb[0].mxu0
      %2136 = vmatprep.mubr.f32.mxu0 0.0
      %2137 = vmatmul.mubr.f32.gmra.mrb[0].mxu0 %v1914
      %v2138 = vpop.f32.mrb[0].mxu0
      %v2139 = vadd.f32 0.0, %v2138
      %v2140 = vpop.f32.mrb[0].mxu0
      %2141 = vmatprep.mubr.f32.mxu0 0.0
      %2142 = vmatmul.mubr.f32.gmra.mrb[0].mxu0 %v1917
      %v2143 = vpop.f32.mrb[0].mxu0
      %v2144 = vadd.f32 0.0, %v2143
      %v2145 = vpop.f32.mrb[0].mxu0
      %2146 = vdwg.mxu0
      %v2147 = vadd.f32 %v1757, %v1989
      %v2148 = vadd.f32 %v1758, %v1994
      %v2149 = vadd.f32 %v1759, %v1999
      %v2150 = vadd.f32 %v1760, %v2004
      %v2151 = vadd.f32 %v1761, %v2009
      %v2152 = vadd.f32 %v1762, %v2014
      %v2153 = vadd.f32 %v1763, %v2019
      %v2154 = vadd.f32 %v1764, %v2024
      %v2155 = vadd.f32 %v1765, %v2029
      %v2156 = vadd.f32 %v1766, %v2034
      %v2157 = vadd.f32 %v1767, %v2039
      %v2158 = vadd.f32 %v1768, %v2044
      %v2159 = vadd.f32 %v1769, %v2049
      %v2160 = vadd.f32 %v1770, %v2054
      %v2161 = vadd.f32 %v1771, %v2059
      %v2162 = vadd.f32 %v1772, %v2064
      %v2163 = vadd.f32 %v1773, %v2069
      %v2164 = vadd.f32 %v1774, %v2074
      %v2165 = vadd.f32 %v1775, %v2079
      %v2166 = vadd.f32 %v1776, %v2084
      %v2167 = vadd.f32 %v1777, %v2089
      %v2168 = vadd.f32 %v1778, %v2094
      %v2169 = vadd.f32 %v1779, %v2099
      %v2170 = vadd.f32 %v1780, %v2104
      %v2171 = vadd.f32 %v1781, %v2109
      %v2172 = vadd.f32 %v1782, %v2114
      %v2173 = vadd.f32 %v1783, %v2119
      %v2174 = vadd.f32 %v1784, %v2124
      %v2175 = vadd.f32 %v1785, %v2129
      %v2176 = vadd.f32 %v1786, %v2134
      %v2177 = vadd.f32 %v1787, %v2139
      %v2178 = vadd.f32 %v1788, %v2144
      %v2179 = vld [vmem:[%s260 + $0x2] sm:$0xff]
      %v2180 = vld [vmem:[%s260 + $0xa] sm:$0xff]
      %v2181 = vld [vmem:[%s260 + $0x1a] sm:$0xff]
      %v2182 = vld [vmem:[%s260 + $0x22] sm:$0xff]
      %v2183 = vld [vmem:[%s260 + $0x32] sm:$0xff]
      %v2184 = vld [vmem:[%s260 + $0x3a] sm:$0xff]
      %v2185 = vld [vmem:[%s260 + $0x4a] sm:$0xff]
      %v2186 = vld [vmem:[%s260 + $0x52] sm:$0xff]
      %v2187 = vld [vmem:[%s260 + $0x62] sm:$0xff]
      %v2188 = vld [vmem:[%s260 + $0x6a] sm:$0xff]
      %v2189 = vld [vmem:[%s260 + $0x7a] sm:$0xff]
      %v2190 = vld [vmem:[%s260 + $0x82] sm:$0xff]
      %v2191 = vld [vmem:[%s260 + $0x92] sm:$0xff]
      %v2192 = vld [vmem:[%s260 + $0x9a] sm:$0xff]
      %v2193 = vld [vmem:[%s260 + $0xaa] sm:$0xff]
      %v2194 = vld [vmem:[%s260 + $0xb2] sm:$0xff]
      %v2195 = vld [vmem:[%s260 + $0xc2] sm:$0xff]
      %v2196 = vld [vmem:[%s260 + $0xca] sm:$0xff]
      %v2197 = vld [vmem:[%s260 + $0xda] sm:$0xff]
      %v2198 = vld [vmem:[%s260 + $0xe2] sm:$0xff]
      %v2199 = vld [vmem:[%s260 + $0xf2] sm:$0xff]
      %v2200 = vld [vmem:[%s260 + $0xfa] sm:$0xff]
      %v2201 = vld [vmem:[%s260 + $0x10a] sm:$0xff]
      %v2202 = vld [vmem:[%s260 + $0x112] sm:$0xff]
      %v2203 = vld [vmem:[%s260 + $0x122] sm:$0xff]
      %v2204 = vld [vmem:[%s260 + $0x12a] sm:$0xff]
      %v2205 = vld [vmem:[%s260 + $0x13a] sm:$0xff]
      %v2206 = vld [vmem:[%s260 + $0x142] sm:$0xff]
      %v2207 = vld [vmem:[%s260 + $0x152] sm:$0xff]
      %v2208 = vld [vmem:[%s260 + $0x15a] sm:$0xff]
      %v2209 = vld [vmem:[%s260 + $0x16a] sm:$0xff]
      %v2210 = vld [vmem:[%s260 + $0x172] sm:$0xff]
      %s2211 = scalar_lea.vmem %s1, 20
      %v2212 = vld [vmem:[%s2211] sm:$0xf]
      %v2214 = vsel %vm182, %v2179, 0
      %v2217 = vsel %vm182, %v2180, 0
      %v2220 = vsel %vm182, %v2181, 0
      %v2223 = vsel %vm182, %v2182, 0
      %v2226 = vsel %vm182, %v2183, 0
      %v2229 = vsel %vm182, %v2184, 0
      %v2232 = vsel %vm182, %v2185, 0
      %v2235 = vsel %vm182, %v2186, 0
      %v2238 = vsel %vm182, %v2187, 0
      %v2241 = vsel %vm182, %v2188, 0
      %v2244 = vsel %vm182, %v2189, 0
      %v2247 = vsel %vm182, %v2190, 0
      %v2250 = vsel %vm182, %v2191, 0
      %v2253 = vsel %vm182, %v2192, 0
      %v2256 = vsel %vm182, %v2193, 0
      %v2259 = vsel %vm182, %v2194, 0
      %v2262 = vsel %vm182, %v2195, 0
      %v2265 = vsel %vm182, %v2196, 0
      %v2268 = vsel %vm182, %v2197, 0
      %v2271 = vsel %vm182, %v2198, 0
      %v2274 = vsel %vm182, %v2199, 0
      %v2277 = vsel %vm182, %v2200, 0
      %v2280 = vsel %vm182, %v2201, 0
      %v2283 = vsel %vm182, %v2202, 0
      %v2286 = vsel %vm182, %v2203, 0
      %v2289 = vsel %vm182, %v2204, 0
      %v2292 = vsel %vm182, %v2205, 0
      %v2295 = vsel %vm182, %v2206, 0
      %v2298 = vsel %vm182, %v2207, 0
      %v2301 = vsel %vm182, %v2208, 0
      %v2304 = vsel %vm182, %v2209, 0
      %v2307 = vsel %vm182, %v2210, 0
      %v2310 = vsel %vm456, %v2212, 0
      %2312 = vmatprep.subr.mxu0 0.0
      %2313 = vmatpush1.msra.mxu0 %v2310
      %2314 = vmatprep.subr.mxu0 0.0
      %2315 = vmatpush1.msra.mxu0 0.0
      %2316 = vmatprep.subr.mxu0 0.0
      %2317 = vmatpush1.msra.mxu0 0.0
      %2318 = vmatprep.subr.mxu0 0.0
      %2319 = vmatpush1.msra.mxu0 0.0
      %2320 = vmatprep.subr.mxu0 0.0
      %2321 = vmatpush1.msra.mxu0 0.0
      %2322 = vmatprep.subr.mxu0 0.0
      %2323 = vmatpush1.msra.mxu0 0.0
      %2324 = vmatprep.subr.mxu0 0.0
      %2325 = vmatpush1.msra.mxu0 0.0
      %2326 = vmatprep.subr.mxu0 0.0
      %2327 = vmatpush1.msra.mxu0 0.0
      %2328 = vmatprep.subr.mxu0 0.0
      %2329 = vmatpush1.msra.mxu0 0.0
      %2330 = vmatprep.subr.mxu0 0.0
      %2331 = vmatpush1.msra.mxu0 0.0
      %2332 = vmatprep.subr.mxu0 0.0
      %2333 = vmatpush1.msra.mxu0 0.0
      %2334 = vmatprep.subr.mxu0 0.0
      %2335 = vmatpush1.msra.mxu0 0.0
      %2336 = vmatprep.subr.mxu0 0.0
      %2337 = vmatpush1.msra.mxu0 0.0
      %2338 = vmatprep.subr.mxu0 0.0
      %2339 = vmatpush1.msra.mxu0 0.0
      %2340 = vmatprep.subr.mxu0 0.0
      %2341 = vmatpush1.msra.mxu0 0.0
      %2342 = vmatprep.subr.mxu0 0.0
      %2343 = vmatpush1.msra.mxu0 0.0
      %2344 = vmatprep.subr.mxu0 0.0
      %2345 = vmatpush1.msra.mxu0 0.0
      %2346 = vmatprep.subr.mxu0 0.0
      %2347 = vmatpush1.msra.mxu0 0.0
      %2348 = vmatprep.subr.mxu0 0.0
      %2349 = vmatpush1.msra.mxu0 0.0
      %2350 = vmatprep.subr.mxu0 0.0
      %2351 = vmatpush1.msra.mxu0 0.0
      %2352 = vmatprep.subr.mxu0 0.0
      %2353 = vmatpush1.msra.mxu0 0.0
      %2354 = vmatprep.subr.mxu0 0.0
      %2355 = vmatpush1.msra.mxu0 0.0
      %2356 = vmatprep.subr.mxu0 0.0
      %2357 = vmatpush1.msra.mxu0 0.0
      %2358 = vmatprep.subr.mxu0 0.0
      %2359 = vmatpush1.msra.mxu0 0.0
      %2360 = vmatprep.subr.mxu0 0.0
      %2361 = vmatpush1.msra.mxu0 0.0
      %2362 = vmatprep.subr.mxu0 0.0
      %2363 = vmatpush1.msra.mxu0 0.0
      %2364 = vmatprep.subr.mxu0 0.0
      %2365 = vmatpush1.msra.mxu0 0.0
      %2366 = vmatprep.subr.mxu0 0.0
      %2367 = vmatpush1.msra.mxu0 0.0
      %2368 = vmatprep.subr.mxu0 0.0
      %2369 = vmatpush1.msra.mxu0 0.0
      %2370 = vmatprep.subr.mxu0 0.0
      %2371 = vmatpush1.msra.mxu0 0.0
      %2372 = vmatprep.subr.mxu0 0.0
      %2373 = vmatpush1.msra.mxu0 0.0
      %2374 = vmatprep.subr.mxu0 0.0
      %2375 = vmatpush1.msra.mxu0 0.0
      %2376 = vmatprep.mubr.f32.mxu0 0.0
      %2377 = vmatmul.mubr.f32.gmra.mrb[0].mxu0 %v2214
      %v2378 = vpop.f32.mrb[0].mxu0
      %v2379 = vadd.f32 0.0, %v2378
      %v2380 = vpop.f32.mrb[0].mxu0
      %2381 = vmatprep.mubr.f32.mxu0 0.0
      %2382 = vmatmul.mubr.f32.gmra.mrb[0].mxu0 %v2217
      %v2383 = vpop.f32.mrb[0].mxu0
      %v2384 = vadd.f32 0.0, %v2383
      %v2385 = vpop.f32.mrb[0].mxu0
      %2386 = vmatprep.mubr.f32.mxu0 0.0
      %2387 = vmatmul.mubr.f32.gmra.mrb[0].mxu0 %v2220
      %v2388 = vpop.f32.mrb[0].mxu0
      %v2389 = vadd.f32 0.0, %v2388
      %v2390 = vpop.f32.mrb[0].mxu0
      %2391 = vmatprep.mubr.f32.mxu0 0.0
      %2392 = vmatmul.mubr.f32.gmra.mrb[0].mxu0 %v2223
      %v2393 = vpop.f32.mrb[0].mxu0
      %v2394 = vadd.f32 0.0, %v2393
      %v2395 = vpop.f32.mrb[0].mxu0
      %2396 = vmatprep.mubr.f32.mxu0 0.0
      %2397 = vmatmul.mubr.f32.gmra.mrb[0].mxu0 %v2226
      %v2398 = vpop.f32.mrb[0].mxu0
      %v2399 = vadd.f32 0.0, %v2398
      %v2400 = vpop.f32.mrb[0].mxu0
      %2401 = vmatprep.mubr.f32.mxu0 0.0
      %2402 = vmatmul.mubr.f32.gmra.mrb[0].mxu0 %v2229
      %v2403 = vpop.f32.mrb[0].mxu0
      %v2404 = vadd.f32 0.0, %v2403
      %v2405 = vpop.f32.mrb[0].mxu0
      %2406 = vmatprep.mubr.f32.mxu0 0.0
      %2407 = vmatmul.mubr.f32.gmra.mrb[0].mxu0 %v2232
      %v2408 = vpop.f32.mrb[0].mxu0
      %v2409 = vadd.f32 0.0, %v2408
      %v2410 = vpop.f32.mrb[0].mxu0
      %2411 = vmatprep.mubr.f32.mxu0 0.0
      %2412 = vmatmul.mubr.f32.gmra.mrb[0].mxu0 %v2235
      %v2413 = vpop.f32.mrb[0].mxu0
      %v2414 = vadd.f32 0.0, %v2413
      %v2415 = vpop.f32.mrb[0].mxu0
      %2416 = vmatprep.mubr.f32.mxu0 0.0
      %2417 = vmatmul.mubr.f32.gmra.mrb[0].mxu0 %v2238
      %v2418 = vpop.f32.mrb[0].mxu0
      %v2419 = vadd.f32 0.0, %v2418
      %v2420 = vpop.f32.mrb[0].mxu0
      %2421 = vmatprep.mubr.f32.mxu0 0.0
      %2422 = vmatmul.mubr.f32.gmra.mrb[0].mxu0 %v2241
      %v2423 = vpop.f32.mrb[0].mxu0
      %v2424 = vadd.f32 0.0, %v2423
      %v2425 = vpop.f32.mrb[0].mxu0
      %2426 = vmatprep.mubr.f32.mxu0 0.0
      %2427 = vmatmul.mubr.f32.gmra.mrb[0].mxu0 %v2244
      %v2428 = vpop.f32.mrb[0].mxu0
      %v2429 = vadd.f32 0.0, %v2428
      %v2430 = vpop.f32.mrb[0].mxu0
      %2431 = vmatprep.mubr.f32.mxu0 0.0
      %2432 = vmatmul.mubr.f32.gmra.mrb[0].mxu0 %v2247
      %v2433 = vpop.f32.mrb[0].mxu0
      %v2434 = vadd.f32 0.0, %v2433
      %v2435 = vpop.f32.mrb[0].mxu0
      %2436 = vmatprep.mubr.f32.mxu0 0.0
      %2437 = vmatmul.mubr.f32.gmra.mrb[0].mxu0 %v2250
      %v2438 = vpop.f32.mrb[0].mxu0
      %v2439 = vadd.f32 0.0, %v2438
      %v2440 = vpop.f32.mrb[0].mxu0
      %2441 = vmatprep.mubr.f32.mxu0 0.0
      %2442 = vmatmul.mubr.f32.gmra.mrb[0].mxu0 %v2253
      %v2443 = vpop.f32.mrb[0].mxu0
      %v2444 = vadd.f32 0.0, %v2443
      %v2445 = vpop.f32.mrb[0].mxu0
      %2446 = vmatprep.mubr.f32.mxu0 0.0
      %2447 = vmatmul.mubr.f32.gmra.mrb[0].mxu0 %v2256
      %v2448 = vpop.f32.mrb[0].mxu0
      %v2449 = vadd.f32 0.0, %v2448
      %v2450 = vpop.f32.mrb[0].mxu0
      %2451 = vmatprep.mubr.f32.mxu0 0.0
      %2452 = vmatmul.mubr.f32.gmra.mrb[0].mxu0 %v2259
      %v2453 = vpop.f32.mrb[0].mxu0
      %v2454 = vadd.f32 0.0, %v2453
      %v2455 = vpop.f32.mrb[0].mxu0
      %2456 = vmatprep.mubr.f32.mxu0 0.0
      %2457 = vmatmul.mubr.f32.gmra.mrb[0].mxu0 %v2262
      %v2458 = vpop.f32.mrb[0].mxu0
      %v2459 = vadd.f32 0.0, %v2458
      %v2460 = vpop.f32.mrb[0].mxu0
      %2461 = vmatprep.mubr.f32.mxu0 0.0
      %2462 = vmatmul.mubr.f32.gmra.mrb[0].mxu0 %v2265
      %v2463 = vpop.f32.mrb[0].mxu0
      %v2464 = vadd.f32 0.0, %v2463
      %v2465 = vpop.f32.mrb[0].mxu0
      %2466 = vmatprep.mubr.f32.mxu0 0.0
      %2467 = vmatmul.mubr.f32.gmra.mrb[0].mxu0 %v2268
      %v2468 = vpop.f32.mrb[0].mxu0
      %v2469 = vadd.f32 0.0, %v2468
      %v2470 = vpop.f32.mrb[0].mxu0
      %2471 = vmatprep.mubr.f32.mxu0 0.0
      %2472 = vmatmul.mubr.f32.gmra.mrb[0].mxu0 %v2271
      %v2473 = vpop.f32.mrb[0].mxu0
      %v2474 = vadd.f32 0.0, %v2473
      %v2475 = vpop.f32.mrb[0].mxu0
      %2476 = vmatprep.mubr.f32.mxu0 0.0
      %2477 = vmatmul.mubr.f32.gmra.mrb[0].mxu0 %v2274
      %v2478 = vpop.f32.mrb[0].mxu0
      %v2479 = vadd.f32 0.0, %v2478
      %v2480 = vpop.f32.mrb[0].mxu0
      %2481 = vmatprep.mubr.f32.mxu0 0.0
      %2482 = vmatmul.mubr.f32.gmra.mrb[0].mxu0 %v2277
      %v2483 = vpop.f32.mrb[0].mxu0
      %v2484 = vadd.f32 0.0, %v2483
      %v2485 = vpop.f32.mrb[0].mxu0
      %2486 = vmatprep.mubr.f32.mxu0 0.0
      %2487 = vmatmul.mubr.f32.gmra.mrb[0].mxu0 %v2280
      %v2488 = vpop.f32.mrb[0].mxu0
      %v2489 = vadd.f32 0.0, %v2488
      %v2490 = vpop.f32.mrb[0].mxu0
      %2491 = vmatprep.mubr.f32.mxu0 0.0
      %2492 = vmatmul.mubr.f32.gmra.mrb[0].mxu0 %v2283
      %v2493 = vpop.f32.mrb[0].mxu0
      %v2494 = vadd.f32 0.0, %v2493
      %v2495 = vpop.f32.mrb[0].mxu0
      %2496 = vmatprep.mubr.f32.mxu0 0.0
      %2497 = vmatmul.mubr.f32.gmra.mrb[0].mxu0 %v2286
      %v2498 = vpop.f32.mrb[0].mxu0
      %v2499 = vadd.f32 0.0, %v2498
      %v2500 = vpop.f32.mrb[0].mxu0
      %2501 = vmatprep.mubr.f32.mxu0 0.0
      %2502 = vmatmul.mubr.f32.gmra.mrb[0].mxu0 %v2289
      %v2503 = vpop.f32.mrb[0].mxu0
      %v2504 = vadd.f32 0.0, %v2503
      %v2505 = vpop.f32.mrb[0].mxu0
      %2506 = vmatprep.mubr.f32.mxu0 0.0
      %2507 = vmatmul.mubr.f32.gmra.mrb[0].mxu0 %v2292
      %v2508 = vpop.f32.mrb[0].mxu0
      %v2509 = vadd.f32 0.0, %v2508
      %v2510 = vpop.f32.mrb[0].mxu0
      %2511 = vmatprep.mubr.f32.mxu0 0.0
      %2512 = vmatmul.mubr.f32.gmra.mrb[0].mxu0 %v2295
      %v2513 = vpop.f32.mrb[0].mxu0
      %v2514 = vadd.f32 0.0, %v2513
      %v2515 = vpop.f32.mrb[0].mxu0
      %2516 = vmatprep.mubr.f32.mxu0 0.0
      %2517 = vmatmul.mubr.f32.gmra.mrb[0].mxu0 %v2298
      %v2518 = vpop.f32.mrb[0].mxu0
      %v2519 = vadd.f32 0.0, %v2518
      %v2520 = vpop.f32.mrb[0].mxu0
      %2521 = vmatprep.mubr.f32.mxu0 0.0
      %2522 = vmatmul.mubr.f32.gmra.mrb[0].mxu0 %v2301
      %v2523 = vpop.f32.mrb[0].mxu0
      %v2524 = vadd.f32 0.0, %v2523
      %v2525 = vpop.f32.mrb[0].mxu0
      %2526 = vmatprep.mubr.f32.mxu0 0.0
      %2527 = vmatmul.mubr.f32.gmra.mrb[0].mxu0 %v2304
      %v2528 = vpop.f32.mrb[0].mxu0
      %v2529 = vadd.f32 0.0, %v2528
      %v2530 = vpop.f32.mrb[0].mxu0
      %2531 = vmatprep.mubr.f32.mxu0 0.0
      %2532 = vmatmul.mubr.f32.gmra.mrb[0].mxu0 %v2307
      %v2533 = vpop.f32.mrb[0].mxu0
      %v2534 = vadd.f32 0.0, %v2533
      %v2535 = vpop.f32.mrb[0].mxu0
      %2536 = vdwg.mxu0
      %v2537 = vadd.f32 %v2147, %v2379
      %v2538 = vadd.f32 %v2148, %v2384
      %v2539 = vadd.f32 %v2149, %v2389
      %v2540 = vadd.f32 %v2150, %v2394
      %v2541 = vadd.f32 %v2151, %v2399
      %v2542 = vadd.f32 %v2152, %v2404
      %v2543 = vadd.f32 %v2153, %v2409
      %v2544 = vadd.f32 %v2154, %v2414
      %v2545 = vadd.f32 %v2155, %v2419
      %v2546 = vadd.f32 %v2156, %v2424
      %v2547 = vadd.f32 %v2157, %v2429
      %v2548 = vadd.f32 %v2158, %v2434
      %v2549 = vadd.f32 %v2159, %v2439
      %v2550 = vadd.f32 %v2160, %v2444
      %v2551 = vadd.f32 %v2161, %v2449
      %v2552 = vadd.f32 %v2162, %v2454
      %v2553 = vadd.f32 %v2163, %v2459
      %v2554 = vadd.f32 %v2164, %v2464
      %v2555 = vadd.f32 %v2165, %v2469
      %v2556 = vadd.f32 %v2166, %v2474
      %v2557 = vadd.f32 %v2167, %v2479
      %v2558 = vadd.f32 %v2168, %v2484
      %v2559 = vadd.f32 %v2169, %v2489
      %v2560 = vadd.f32 %v2170, %v2494
      %v2561 = vadd.f32 %v2171, %v2499
      %v2562 = vadd.f32 %v2172, %v2504
      %v2563 = vadd.f32 %v2173, %v2509
      %v2564 = vadd.f32 %v2174, %v2514
      %v2565 = vadd.f32 %v2175, %v2519
      %v2566 = vadd.f32 %v2176, %v2524
      %v2567 = vadd.f32 %v2177, %v2529
      %v2568 = vadd.f32 %v2178, %v2534
      %s2569 = scalar_lea.vmem [#allocation2], 48
      %v2570 = vld [vmem:[%s2569] sm:$0xff]
      %v2571 = vld [vmem:[%s2569 + $0x8] sm:$0xff]
      %v2572 = vld [vmem:[%s2569 + $0x18] sm:$0xff]
      %v2573 = vld [vmem:[%s2569 + $0x20] sm:$0xff]
      %v2574 = vld [vmem:[%s2569 + $0x30] sm:$0xff]
      %v2575 = vld [vmem:[%s2569 + $0x38] sm:$0xff]
      %v2576 = vld [vmem:[%s2569 + $0x48] sm:$0xff]
      %v2577 = vld [vmem:[%s2569 + $0x50] sm:$0xff]
      %v2578 = vld [vmem:[%s2569 + $0x60] sm:$0xff]
      %v2579 = vld [vmem:[%s2569 + $0x68] sm:$0xff]
      %v2580 = vld [vmem:[%s2569 + $0x78] sm:$0xff]
      %v2581 = vld [vmem:[%s2569 + $0x80] sm:$0xff]
      %v2582 = vld [vmem:[%s2569 + $0x90] sm:$0xff]
      %v2583 = vld [vmem:[%s2569 + $0x98] sm:$0xff]
      %v2584 = vld [vmem:[%s2569 + $0xa8] sm:$0xff]
      %v2585 = vld [vmem:[%s2569 + $0xb0] sm:$0xff]
      %v2586 = vld [vmem:[%s2569 + $0xc0] sm:$0xff]
      %v2587 = vld [vmem:[%s2569 + $0xc8] sm:$0xff]
      %v2588 = vld [vmem:[%s2569 + $0xd8] sm:$0xff]
      %v2589 = vld [vmem:[%s2569 + $0xe0] sm:$0xff]
      %v2590 = vld [vmem:[%s2569 + $0xf0] sm:$0xff]
      %v2591 = vld [vmem:[%s2569 + $0xf8] sm:$0xff]
      %v2592 = vld [vmem:[%s2569 + $0x108] sm:$0xff]
      %v2593 = vld [vmem:[%s2569 + $0x110] sm:$0xff]
      %v2594 = vld [vmem:[%s2569 + $0x120] sm:$0xff]
      %v2595 = vld [vmem:[%s2569 + $0x128] sm:$0xff]
      %v2596 = vld [vmem:[%s2569 + $0x138] sm:$0xff]
      %v2597 = vld [vmem:[%s2569 + $0x140] sm:$0xff]
      %v2598 = vld [vmem:[%s2569 + $0x150] sm:$0xff]
      %v2599 = vld [vmem:[%s2569 + $0x158] sm:$0xff]
      %v2600 = vld [vmem:[%s2569 + $0x168] sm:$0xff]
      %v2601 = vld [vmem:[%s2569 + $0x170] sm:$0xff]
      %s2602 = scalar_lea.vmem %s1, 24
      %v2603 = vld [vmem:[%s2602] sm:$0xf]
      %v2605 = vsel %vm182, %v2570, 0
      %v2608 = vsel %vm182, %v2571, 0
      %v2611 = vsel %vm182, %v2572, 0
      %v2614 = vsel %vm182, %v2573, 0
      %v2617 = vsel %vm182, %v2574, 0
      %v2620 = vsel %vm182, %v2575, 0
      %v2623 = vsel %vm182, %v2576, 0
      %v2626 = vsel %vm182, %v2577, 0
      %v2629 = vsel %vm182, %v2578, 0
      %v2632 = vsel %vm182, %v2579, 0
      %v2635 = vsel %vm182, %v2580, 0
      %v2638 = vsel %vm182, %v2581, 0
      %v2641 = vsel %vm182, %v2582, 0
      %v2644 = vsel %vm182, %v2583, 0
      %v2647 = vsel %vm182, %v2584, 0
      %v2650 = vsel %vm182, %v2585, 0
      %v2653 = vsel %vm182, %v2586, 0
      %v2656 = vsel %vm182, %v2587, 0
      %v2659 = vsel %vm182, %v2588, 0
      %v2662 = vsel %vm182, %v2589, 0
      %v2665 = vsel %vm182, %v2590, 0
      %v2668 = vsel %vm182, %v2591, 0
      %v2671 = vsel %vm182, %v2592, 0
      %v2674 = vsel %vm182, %v2593, 0
      %v2677 = vsel %vm182, %v2594, 0
      %v2680 = vsel %vm182, %v2595, 0
      %v2683 = vsel %vm182, %v2596, 0
      %v2686 = vsel %vm182, %v2597, 0
      %v2689 = vsel %vm182, %v2598, 0
      %v2692 = vsel %vm182, %v2599, 0
      %v2695 = vsel %vm182, %v2600, 0
      %v2698 = vsel %vm182, %v2601, 0
      %v2701 = vsel %vm456, %v2603, 0
      %2703 = vmatprep.subr.mxu0 0.0
      %2704 = vmatpush1.msra.mxu0 %v2701
      %2705 = vmatprep.subr.mxu0 0.0
      %2706 = vmatpush1.msra.mxu0 0.0
      %2707 = vmatprep.subr.mxu0 0.0
      %2708 = vmatpush1.msra.mxu0 0.0
      %2709 = vmatprep.subr.mxu0 0.0
      %2710 = vmatpush1.msra.mxu0 0.0
      %2711 = vmatprep.subr.mxu0 0.0
      %2712 = vmatpush1.msra.mxu0 0.0
      %2713 = vmatprep.subr.mxu0 0.0
      %2714 = vmatpush1.msra.mxu0 0.0
      %2715 = vmatprep.subr.mxu0 0.0
      %2716 = vmatpush1.msra.mxu0 0.0
      %2717 = vmatprep.subr.mxu0 0.0
      %2718 = vmatpush1.msra.mxu0 0.0
      %2719 = vmatprep.subr.mxu0 0.0
      %2720 = vmatpush1.msra.mxu0 0.0
      %2721 = vmatprep.subr.mxu0 0.0
      %2722 = vmatpush1.msra.mxu0 0.0
      %2723 = vmatprep.subr.mxu0 0.0
      %2724 = vmatpush1.msra.mxu0 0.0
      %2725 = vmatprep.subr.mxu0 0.0
      %2726 = vmatpush1.msra.mxu0 0.0
      %2727 = vmatprep.subr.mxu0 0.0
      %2728 = vmatpush1.msra.mxu0 0.0
      %2729 = vmatprep.subr.mxu0 0.0
      %2730 = vmatpush1.msra.mxu0 0.0
      %2731 = vmatprep.subr.mxu0 0.0
      %2732 = vmatpush1.msra.mxu0 0.0
      %2733 = vmatprep.subr.mxu0 0.0
      %2734 = vmatpush1.msra.mxu0 0.0
      %2735 = vmatprep.subr.mxu0 0.0
      %2736 = vmatpush1.msra.mxu0 0.0
      %2737 = vmatprep.subr.mxu0 0.0
      %2738 = vmatpush1.msra.mxu0 0.0
      %2739 = vmatprep.subr.mxu0 0.0
      %2740 = vmatpush1.msra.mxu0 0.0
      %2741 = vmatprep.subr.mxu0 0.0
      %2742 = vmatpush1.msra.mxu0 0.0
      %2743 = vmatprep.subr.mxu0 0.0
      %2744 = vmatpush1.msra.mxu0 0.0
      %2745 = vmatprep.subr.mxu0 0.0
      %2746 = vmatpush1.msra.mxu0 0.0
      %2747 = vmatprep.subr.mxu0 0.0
      %2748 = vmatpush1.msra.mxu0 0.0
      %2749 = vmatprep.subr.mxu0 0.0
      %2750 = vmatpush1.msra.mxu0 0.0
      %2751 = vmatprep.subr.mxu0 0.0
      %2752 = vmatpush1.msra.mxu0 0.0
      %2753 = vmatprep.subr.mxu0 0.0
      %2754 = vmatpush1.msra.mxu0 0.0
      %2755 = vmatprep.subr.mxu0 0.0
      %2756 = vmatpush1.msra.mxu0 0.0
      %2757 = vmatprep.subr.mxu0 0.0
      %2758 = vmatpush1.msra.mxu0 0.0
      %2759 = vmatprep.subr.mxu0 0.0
      %2760 = vmatpush1.msra.mxu0 0.0
      %2761 = vmatprep.subr.mxu0 0.0
      %2762 = vmatpush1.msra.mxu0 0.0
      %2763 = vmatprep.subr.mxu0 0.0
      %2764 = vmatpush1.msra.mxu0 0.0
      %2765 = vmatprep.subr.mxu0 0.0
      %2766 = vmatpush1.msra.mxu0 0.0
      %2767 = vmatprep.mubr.f32.mxu0 0.0
      %2768 = vmatmul.mubr.f32.gmra.mrb[0].mxu0 %v2605
      %v2769 = vpop.f32.mrb[0].mxu0
      %v2770 = vadd.f32 0.0, %v2769
      %v2771 = vpop.f32.mrb[0].mxu0
      %2772 = vmatprep.mubr.f32.mxu0 0.0
      %2773 = vmatmul.mubr.f32.gmra.mrb[0].mxu0 %v2608
      %v2774 = vpop.f32.mrb[0].mxu0
      %v2775 = vadd.f32 0.0, %v2774
      %v2776 = vpop.f32.mrb[0].mxu0
      %2777 = vmatprep.mubr.f32.mxu0 0.0
      %2778 = vmatmul.mubr.f32.gmra.mrb[0].mxu0 %v2611
      %v2779 = vpop.f32.mrb[0].mxu0
      %v2780 = vadd.f32 0.0, %v2779
      %v2781 = vpop.f32.mrb[0].mxu0
      %2782 = vmatprep.mubr.f32.mxu0 0.0
      %2783 = vmatmul.mubr.f32.gmra.mrb[0].mxu0 %v2614
      %v2784 = vpop.f32.mrb[0].mxu0
      %v2785 = vadd.f32 0.0, %v2784
      %v2786 = vpop.f32.mrb[0].mxu0
      %2787 = vmatprep.mubr.f32.mxu0 0.0
      %2788 = vmatmul.mubr.f32.gmra.mrb[0].mxu0 %v2617
      %v2789 = vpop.f32.mrb[0].mxu0
      %v2790 = vadd.f32 0.0, %v2789
      %v2791 = vpop.f32.mrb[0].mxu0
      %2792 = vmatprep.mubr.f32.mxu0 0.0
      %2793 = vmatmul.mubr.f32.gmra.mrb[0].mxu0 %v2620
      %v2794 = vpop.f32.mrb[0].mxu0
      %v2795 = vadd.f32 0.0, %v2794
      %v2796 = vpop.f32.mrb[0].mxu0
      %2797 = vmatprep.mubr.f32.mxu0 0.0
      %2798 = vmatmul.mubr.f32.gmra.mrb[0].mxu0 %v2623
      %v2799 = vpop.f32.mrb[0].mxu0
      %v2800 = vadd.f32 0.0, %v2799
      %v2801 = vpop.f32.mrb[0].mxu0
      %2802 = vmatprep.mubr.f32.mxu0 0.0
      %2803 = vmatmul.mubr.f32.gmra.mrb[0].mxu0 %v2626
      %v2804 = vpop.f32.mrb[0].mxu0
      %v2805 = vadd.f32 0.0, %v2804
      %v2806 = vpop.f32.mrb[0].mxu0
      %2807 = vmatprep.mubr.f32.mxu0 0.0
      %2808 = vmatmul.mubr.f32.gmra.mrb[0].mxu0 %v2629
      %v2809 = vpop.f32.mrb[0].mxu0
      %v2810 = vadd.f32 0.0, %v2809
      %v2811 = vpop.f32.mrb[0].mxu0
      %2812 = vmatprep.mubr.f32.mxu0 0.0
      %2813 = vmatmul.mubr.f32.gmra.mrb[0].mxu0 %v2632
      %v2814 = vpop.f32.mrb[0].mxu0
      %v2815 = vadd.f32 0.0, %v2814
      %v2816 = vpop.f32.mrb[0].mxu0
      %2817 = vmatprep.mubr.f32.mxu0 0.0
      %2818 = vmatmul.mubr.f32.gmra.mrb[0].mxu0 %v2635
      %v2819 = vpop.f32.mrb[0].mxu0
      %v2820 = vadd.f32 0.0, %v2819
      %v2821 = vpop.f32.mrb[0].mxu0
      %2822 = vmatprep.mubr.f32.mxu0 0.0
      %2823 = vmatmul.mubr.f32.gmra.mrb[0].mxu0 %v2638
      %v2824 = vpop.f32.mrb[0].mxu0
      %v2825 = vadd.f32 0.0, %v2824
      %v2826 = vpop.f32.mrb[0].mxu0
      %2827 = vmatprep.mubr.f32.mxu0 0.0
      %2828 = vmatmul.mubr.f32.gmra.mrb[0].mxu0 %v2641
      %v2829 = vpop.f32.mrb[0].mxu0
      %v2830 = vadd.f32 0.0, %v2829
      %v2831 = vpop.f32.mrb[0].mxu0
      %2832 = vmatprep.mubr.f32.mxu0 0.0
      %2833 = vmatmul.mubr.f32.gmra.mrb[0].mxu0 %v2644
      %v2834 = vpop.f32.mrb[0].mxu0
      %v2835 = vadd.f32 0.0, %v2834
      %v2836 = vpop.f32.mrb[0].mxu0
      %2837 = vmatprep.mubr.f32.mxu0 0.0
      %2838 = vmatmul.mubr.f32.gmra.mrb[0].mxu0 %v2647
      %v2839 = vpop.f32.mrb[0].mxu0
      %v2840 = vadd.f32 0.0, %v2839
      %v2841 = vpop.f32.mrb[0].mxu0
      %2842 = vmatprep.mubr.f32.mxu0 0.0
      %2843 = vmatmul.mubr.f32.gmra.mrb[0].mxu0 %v2650
      %v2844 = vpop.f32.mrb[0].mxu0
      %v2845 = vadd.f32 0.0, %v2844
      %v2846 = vpop.f32.mrb[0].mxu0
      %2847 = vmatprep.mubr.f32.mxu0 0.0
      %2848 = vmatmul.mubr.f32.gmra.mrb[0].mxu0 %v2653
      %v2849 = vpop.f32.mrb[0].mxu0
      %v2850 = vadd.f32 0.0, %v2849
      %v2851 = vpop.f32.mrb[0].mxu0
      %2852 = vmatprep.mubr.f32.mxu0 0.0
      %2853 = vmatmul.mubr.f32.gmra.mrb[0].mxu0 %v2656
      %v2854 = vpop.f32.mrb[0].mxu0
      %v2855 = vadd.f32 0.0, %v2854
      %v2856 = vpop.f32.mrb[0].mxu0
      %2857 = vmatprep.mubr.f32.mxu0 0.0
      %2858 = vmatmul.mubr.f32.gmra.mrb[0].mxu0 %v2659
      %v2859 = vpop.f32.mrb[0].mxu0
      %v2860 = vadd.f32 0.0, %v2859
      %v2861 = vpop.f32.mrb[0].mxu0
      %2862 = vmatprep.mubr.f32.mxu0 0.0
      %2863 = vmatmul.mubr.f32.gmra.mrb[0].mxu0 %v2662
      %v2864 = vpop.f32.mrb[0].mxu0
      %v2865 = vadd.f32 0.0, %v2864
      %v2866 = vpop.f32.mrb[0].mxu0
      %2867 = vmatprep.mubr.f32.mxu0 0.0
      %2868 = vmatmul.mubr.f32.gmra.mrb[0].mxu0 %v2665
      %v2869 = vpop.f32.mrb[0].mxu0
      %v2870 = vadd.f32 0.0, %v2869
      %v2871 = vpop.f32.mrb[0].mxu0
      %2872 = vmatprep.mubr.f32.mxu0 0.0
      %2873 = vmatmul.mubr.f32.gmra.mrb[0].mxu0 %v2668
      %v2874 = vpop.f32.mrb[0].mxu0
      %v2875 = vadd.f32 0.0, %v2874
      %v2876 = vpop.f32.mrb[0].mxu0
      %2877 = vmatprep.mubr.f32.mxu0 0.0
      %2878 = vmatmul.mubr.f32.gmra.mrb[0].mxu0 %v2671
      %v2879 = vpop.f32.mrb[0].mxu0
      %v2880 = vadd.f32 0.0, %v2879
      %v2881 = vpop.f32.mrb[0].mxu0
      %2882 = vmatprep.mubr.f32.mxu0 0.0
      %2883 = vmatmul.mubr.f32.gmra.mrb[0].mxu0 %v2674
      %v2884 = vpop.f32.mrb[0].mxu0
      %v2885 = vadd.f32 0.0, %v2884
      %v2886 = vpop.f32.mrb[0].mxu0
      %2887 = vmatprep.mubr.f32.mxu0 0.0
      %2888 = vmatmul.mubr.f32.gmra.mrb[0].mxu0 %v2677
      %v2889 = vpop.f32.mrb[0].mxu0
      %v2890 = vadd.f32 0.0, %v2889
      %v2891 = vpop.f32.mrb[0].mxu0
      %2892 = vmatprep.mubr.f32.mxu0 0.0
      %2893 = vmatmul.mubr.f32.gmra.mrb[0].mxu0 %v2680
      %v2894 = vpop.f32.mrb[0].mxu0
      %v2895 = vadd.f32 0.0, %v2894
      %v2896 = vpop.f32.mrb[0].mxu0
      %2897 = vmatprep.mubr.f32.mxu0 0.0
      %2898 = vmatmul.mubr.f32.gmra.mrb[0].mxu0 %v2683
      %v2899 = vpop.f32.mrb[0].mxu0
      %v2900 = vadd.f32 0.0, %v2899
      %v2901 = vpop.f32.mrb[0].mxu0
      %2902 = vmatprep.mubr.f32.mxu0 0.0
      %2903 = vmatmul.mubr.f32.gmra.mrb[0].mxu0 %v2686
      %v2904 = vpop.f32.mrb[0].mxu0
      %v2905 = vadd.f32 0.0, %v2904
      %v2906 = vpop.f32.mrb[0].mxu0
      %2907 = vmatprep.mubr.f32.mxu0 0.0
      %2908 = vmatmul.mubr.f32.gmra.mrb[0].mxu0 %v2689
      %v2909 = vpop.f32.mrb[0].mxu0
      %v2910 = vadd.f32 0.0, %v2909
      %v2911 = vpop.f32.mrb[0].mxu0
      %2912 = vmatprep.mubr.f32.mxu0 0.0
      %2913 = vmatmul.mubr.f32.gmra.mrb[0].mxu0 %v2692
      %v2914 = vpop.f32.mrb[0].mxu0
      %v2915 = vadd.f32 0.0, %v2914
      %v2916 = vpop.f32.mrb[0].mxu0
      %2917 = vmatprep.mubr.f32.mxu0 0.0
      %2918 = vmatmul.mubr.f32.gmra.mrb[0].mxu0 %v2695
      %v2919 = vpop.f32.mrb[0].mxu0
      %v2920 = vadd.f32 0.0, %v2919
      %v2921 = vpop.f32.mrb[0].mxu0
      %2922 = vmatprep.mubr.f32.mxu0 0.0
      %2923 = vmatmul.mubr.f32.gmra.mrb[0].mxu0 %v2698
      %v2924 = vpop.f32.mrb[0].mxu0
      %v2925 = vadd.f32 0.0, %v2924
      %v2926 = vpop.f32.mrb[0].mxu0
      %2927 = vdwg.mxu0
      %v2928 = vadd.f32 %v2537, %v2770
      %v2929 = vadd.f32 %v2538, %v2775
      %v2930 = vadd.f32 %v2539, %v2780
      %v2931 = vadd.f32 %v2540, %v2785
      %v2932 = vadd.f32 %v2541, %v2790
      %v2933 = vadd.f32 %v2542, %v2795
      %v2934 = vadd.f32 %v2543, %v2800
      %v2935 = vadd.f32 %v2544, %v2805
      %v2936 = vadd.f32 %v2545, %v2810
      %v2937 = vadd.f32 %v2546, %v2815
      %v2938 = vadd.f32 %v2547, %v2820
      %v2939 = vadd.f32 %v2548, %v2825
      %v2940 = vadd.f32 %v2549, %v2830
      %v2941 = vadd.f32 %v2550, %v2835
      %v2942 = vadd.f32 %v2551, %v2840
      %v2943 = vadd.f32 %v2552, %v2845
      %v2944 = vadd.f32 %v2553, %v2850
      %v2945 = vadd.f32 %v2554, %v2855
      %v2946 = vadd.f32 %v2555, %v2860
      %v2947 = vadd.f32 %v2556, %v2865
      %v2948 = vadd.f32 %v2557, %v2870
      %v2949 = vadd.f32 %v2558, %v2875
      %v2950 = vadd.f32 %v2559, %v2880
      %v2951 = vadd.f32 %v2560, %v2885
      %v2952 = vadd.f32 %v2561, %v2890
      %v2953 = vadd.f32 %v2562, %v2895
      %v2954 = vadd.f32 %v2563, %v2900
      %v2955 = vadd.f32 %v2564, %v2905
      %v2956 = vadd.f32 %v2565, %v2910
      %v2957 = vadd.f32 %v2566, %v2915
      %v2958 = vadd.f32 %v2567, %v2920
      %v2959 = vadd.f32 %v2568, %v2925
      %v2960 = vld [vmem:[%s2569 + $0x1] sm:$0xff]
      %v2961 = vld [vmem:[%s2569 + $0x9] sm:$0xff]
      %v2962 = vld [vmem:[%s2569 + $0x19] sm:$0xff]
      %v2963 = vld [vmem:[%s2569 + $0x21] sm:$0xff]
      %v2964 = vld [vmem:[%s2569 + $0x31] sm:$0xff]
      %v2965 = vld [vmem:[%s2569 + $0x39] sm:$0xff]
      %v2966 = vld [vmem:[%s2569 + $0x49] sm:$0xff]
      %v2967 = vld [vmem:[%s2569 + $0x51] sm:$0xff]
      %v2968 = vld [vmem:[%s2569 + $0x61] sm:$0xff]
      %v2969 = vld [vmem:[%s2569 + $0x69] sm:$0xff]
      %v2970 = vld [vmem:[%s2569 + $0x79] sm:$0xff]
      %v2971 = vld [vmem:[%s2569 + $0x81] sm:$0xff]
      %v2972 = vld [vmem:[%s2569 + $0x91] sm:$0xff]
      %v2973 = vld [vmem:[%s2569 + $0x99] sm:$0xff]
      %v2974 = vld [vmem:[%s2569 + $0xa9] sm:$0xff]
      %v2975 = vld [vmem:[%s2569 + $0xb1] sm:$0xff]
      %v2976 = vld [vmem:[%s2569 + $0xc1] sm:$0xff]
      %v2977 = vld [vmem:[%s2569 + $0xc9] sm:$0xff]
      %v2978 = vld [vmem:[%s2569 + $0xd9] sm:$0xff]
      %v2979 = vld [vmem:[%s2569 + $0xe1] sm:$0xff]
      %v2980 = vld [vmem:[%s2569 + $0xf1] sm:$0xff]
      %v2981 = vld [vmem:[%s2569 + $0xf9] sm:$0xff]
      %v2982 = vld [vmem:[%s2569 + $0x109] sm:$0xff]
      %v2983 = vld [vmem:[%s2569 + $0x111] sm:$0xff]
      %v2984 = vld [vmem:[%s2569 + $0x121] sm:$0xff]
      %v2985 = vld [vmem:[%s2569 + $0x129] sm:$0xff]
      %v2986 = vld [vmem:[%s2569 + $0x139] sm:$0xff]
      %v2987 = vld [vmem:[%s2569 + $0x141] sm:$0xff]
      %v2988 = vld [vmem:[%s2569 + $0x151] sm:$0xff]
      %v2989 = vld [vmem:[%s2569 + $0x159] sm:$0xff]
      %v2990 = vld [vmem:[%s2569 + $0x169] sm:$0xff]
      %v2991 = vld [vmem:[%s2569 + $0x171] sm:$0xff]
      %s2992 = scalar_lea.vmem %s1, 28
      %v2993 = vld [vmem:[%s2992] sm:$0xf]
      %v2995 = vsel %vm182, %v2960, 0
      %v2998 = vsel %vm182, %v2961, 0
      %v3001 = vsel %vm182, %v2962, 0
      %v3004 = vsel %vm182, %v2963, 0
      %v3007 = vsel %vm182, %v2964, 0
      %v3010 = vsel %vm182, %v2965, 0
      %v3013 = vsel %vm182, %v2966, 0
      %v3016 = vsel %vm182, %v2967, 0
      %v3019 = vsel %vm182, %v2968, 0
      %v3022 = vsel %vm182, %v2969, 0
      %v3025 = vsel %vm182, %v2970, 0
      %v3028 = vsel %vm182, %v2971, 0
      %v3031 = vsel %vm182, %v2972, 0
      %v3034 = vsel %vm182, %v2973, 0
      %v3037 = vsel %vm182, %v2974, 0
      %v3040 = vsel %vm182, %v2975, 0
      %v3043 = vsel %vm182, %v2976, 0
      %v3046 = vsel %vm182, %v2977, 0
      %v3049 = vsel %vm182, %v2978, 0
      %v3052 = vsel %vm182, %v2979, 0
      %v3055 = vsel %vm182, %v2980, 0
      %v3058 = vsel %vm182, %v2981, 0
      %v3061 = vsel %vm182, %v2982, 0
      %v3064 = vsel %vm182, %v2983, 0
      %v3067 = vsel %vm182, %v2984, 0
      %v3070 = vsel %vm182, %v2985, 0
      %v3073 = vsel %vm182, %v2986, 0
      %v3076 = vsel %vm182, %v2987, 0
      %v3079 = vsel %vm182, %v2988, 0
      %v3082 = vsel %vm182, %v2989, 0
      %v3085 = vsel %vm182, %v2990, 0
      %v3088 = vsel %vm182, %v2991, 0
      %v3091 = vsel %vm456, %v2993, 0
      %3093 = vmatprep.subr.mxu0 0.0
      %3094 = vmatpush1.msra.mxu0 %v3091
      %3095 = vmatprep.subr.mxu0 0.0
      %3096 = vmatpush1.msra.mxu0 0.0
      %3097 = vmatprep.subr.mxu0 0.0
      %3098 = vmatpush1.msra.mxu0 0.0
      %3099 = vmatprep.subr.mxu0 0.0
      %3100 = vmatpush1.msra.mxu0 0.0
      %3101 = vmatprep.subr.mxu0 0.0
      %3102 = vmatpush1.msra.mxu0 0.0
      %3103 = vmatprep.subr.mxu0 0.0
      %3104 = vmatpush1.msra.mxu0 0.0
      %3105 = vmatprep.subr.mxu0 0.0
      %3106 = vmatpush1.msra.mxu0 0.0
      %3107 = vmatprep.subr.mxu0 0.0
      %3108 = vmatpush1.msra.mxu0 0.0
      %3109 = vmatprep.subr.mxu0 0.0
      %3110 = vmatpush1.msra.mxu0 0.0
      %3111 = vmatprep.subr.mxu0 0.0
      %3112 = vmatpush1.msra.mxu0 0.0
      %3113 = vmatprep.subr.mxu0 0.0
      %3114 = vmatpush1.msra.mxu0 0.0
      %3115 = vmatprep.subr.mxu0 0.0
      %3116 = vmatpush1.msra.mxu0 0.0
      %3117 = vmatprep.subr.mxu0 0.0
      %3118 = vmatpush1.msra.mxu0 0.0
      %3119 = vmatprep.subr.mxu0 0.0
      %3120 = vmatpush1.msra.mxu0 0.0
      %3121 = vmatprep.subr.mxu0 0.0
      %3122 = vmatpush1.msra.mxu0 0.0
      %3123 = vmatprep.subr.mxu0 0.0
      %3124 = vmatpush1.msra.mxu0 0.0
      %3125 = vmatprep.subr.mxu0 0.0
      %3126 = vmatpush1.msra.mxu0 0.0
      %3127 = vmatprep.subr.mxu0 0.0
      %3128 = vmatpush1.msra.mxu0 0.0
      %3129 = vmatprep.subr.mxu0 0.0
      %3130 = vmatpush1.msra.mxu0 0.0
      %3131 = vmatprep.subr.mxu0 0.0
      %3132 = vmatpush1.msra.mxu0 0.0
      %3133 = vmatprep.subr.mxu0 0.0
      %3134 = vmatpush1.msra.mxu0 0.0
      %3135 = vmatprep.subr.mxu0 0.0
      %3136 = vmatpush1.msra.mxu0 0.0
      %3137 = vmatprep.subr.mxu0 0.0
      %3138 = vmatpush1.msra.mxu0 0.0
      %3139 = vmatprep.subr.mxu0 0.0
      %3140 = vmatpush1.msra.mxu0 0.0
      %3141 = vmatprep.subr.mxu0 0.0
      %3142 = vmatpush1.msra.mxu0 0.0
      %3143 = vmatprep.subr.mxu0 0.0
      %3144 = vmatpush1.msra.mxu0 0.0
      %3145 = vmatprep.subr.mxu0 0.0
      %3146 = vmatpush1.msra.mxu0 0.0
      %3147 = vmatprep.subr.mxu0 0.0
      %3148 = vmatpush1.msra.mxu0 0.0
      %3149 = vmatprep.subr.mxu0 0.0
      %3150 = vmatpush1.msra.mxu0 0.0
      %3151 = vmatprep.subr.mxu0 0.0
      %3152 = vmatpush1.msra.mxu0 0.0
      %3153 = vmatprep.subr.mxu0 0.0
      %3154 = vmatpush1.msra.mxu0 0.0
      %3155 = vmatprep.subr.mxu0 0.0
      %3156 = vmatpush1.msra.mxu0 0.0
      %3157 = vmatprep.mubr.f32.mxu0 0.0
      %3158 = vmatmul.mubr.f32.gmra.mrb[0].mxu0 %v2995
      %v3159 = vpop.f32.mrb[0].mxu0
      %v3160 = vadd.f32 0.0, %v3159
      %v3161 = vpop.f32.mrb[0].mxu0
      %3162 = vmatprep.mubr.f32.mxu0 0.0
      %3163 = vmatmul.mubr.f32.gmra.mrb[0].mxu0 %v2998
      %v3164 = vpop.f32.mrb[0].mxu0
      %v3165 = vadd.f32 0.0, %v3164
      %v3166 = vpop.f32.mrb[0].mxu0
      %3167 = vmatprep.mubr.f32.mxu0 0.0
      %3168 = vmatmul.mubr.f32.gmra.mrb[0].mxu0 %v3001
      %v3169 = vpop.f32.mrb[0].mxu0
      %v3170 = vadd.f32 0.0, %v3169
      %v3171 = vpop.f32.mrb[0].mxu0
      %3172 = vmatprep.mubr.f32.mxu0 0.0
      %3173 = vmatmul.mubr.f32.gmra.mrb[0].mxu0 %v3004
      %v3174 = vpop.f32.mrb[0].mxu0
      %v3175 = vadd.f32 0.0, %v3174
      %v3176 = vpop.f32.mrb[0].mxu0
      %3177 = vmatprep.mubr.f32.mxu0 0.0
      %3178 = vmatmul.mubr.f32.gmra.mrb[0].mxu0 %v3007
      %v3179 = vpop.f32.mrb[0].mxu0
      %v3180 = vadd.f32 0.0, %v3179
      %v3181 = vpop.f32.mrb[0].mxu0
      %3182 = vmatprep.mubr.f32.mxu0 0.0
      %3183 = vmatmul.mubr.f32.gmra.mrb[0].mxu0 %v3010
      %v3184 = vpop.f32.mrb[0].mxu0
      %v3185 = vadd.f32 0.0, %v3184
      %v3186 = vpop.f32.mrb[0].mxu0
      %3187 = vmatprep.mubr.f32.mxu0 0.0
      %3188 = vmatmul.mubr.f32.gmra.mrb[0].mxu0 %v3013
      %v3189 = vpop.f32.mrb[0].mxu0
      %v3190 = vadd.f32 0.0, %v3189
      %v3191 = vpop.f32.mrb[0].mxu0
      %3192 = vmatprep.mubr.f32.mxu0 0.0
      %3193 = vmatmul.mubr.f32.gmra.mrb[0].mxu0 %v3016
      %v3194 = vpop.f32.mrb[0].mxu0
      %v3195 = vadd.f32 0.0, %v3194
      %v3196 = vpop.f32.mrb[0].mxu0
      %3197 = vmatprep.mubr.f32.mxu0 0.0
      %3198 = vmatmul.mubr.f32.gmra.mrb[0].mxu0 %v3019
      %v3199 = vpop.f32.mrb[0].mxu0
      %v3200 = vadd.f32 0.0, %v3199
      %v3201 = vpop.f32.mrb[0].mxu0
      %3202 = vmatprep.mubr.f32.mxu0 0.0
      %3203 = vmatmul.mubr.f32.gmra.mrb[0].mxu0 %v3022
      %v3204 = vpop.f32.mrb[0].mxu0
      %v3205 = vadd.f32 0.0, %v3204
      %v3206 = vpop.f32.mrb[0].mxu0
      %3207 = vmatprep.mubr.f32.mxu0 0.0
      %3208 = vmatmul.mubr.f32.gmra.mrb[0].mxu0 %v3025
      %v3209 = vpop.f32.mrb[0].mxu0
      %v3210 = vadd.f32 0.0, %v3209
      %v3211 = vpop.f32.mrb[0].mxu0
      %3212 = vmatprep.mubr.f32.mxu0 0.0
      %3213 = vmatmul.mubr.f32.gmra.mrb[0].mxu0 %v3028
      %v3214 = vpop.f32.mrb[0].mxu0
      %v3215 = vadd.f32 0.0, %v3214
      %v3216 = vpop.f32.mrb[0].mxu0
      %3217 = vmatprep.mubr.f32.mxu0 0.0
      %3218 = vmatmul.mubr.f32.gmra.mrb[0].mxu0 %v3031
      %v3219 = vpop.f32.mrb[0].mxu0
      %v3220 = vadd.f32 0.0, %v3219
      %v3221 = vpop.f32.mrb[0].mxu0
      %3222 = vmatprep.mubr.f32.mxu0 0.0
      %3223 = vmatmul.mubr.f32.gmra.mrb[0].mxu0 %v3034
      %v3224 = vpop.f32.mrb[0].mxu0
      %v3225 = vadd.f32 0.0, %v3224
      %v3226 = vpop.f32.mrb[0].mxu0
      %3227 = vmatprep.mubr.f32.mxu0 0.0
      %3228 = vmatmul.mubr.f32.gmra.mrb[0].mxu0 %v3037
      %v3229 = vpop.f32.mrb[0].mxu0
      %v3230 = vadd.f32 0.0, %v3229
      %v3231 = vpop.f32.mrb[0].mxu0
      %3232 = vmatprep.mubr.f32.mxu0 0.0
      %3233 = vmatmul.mubr.f32.gmra.mrb[0].mxu0 %v3040
      %v3234 = vpop.f32.mrb[0].mxu0
      %v3235 = vadd.f32 0.0, %v3234
      %v3236 = vpop.f32.mrb[0].mxu0
      %3237 = vmatprep.mubr.f32.mxu0 0.0
      %3238 = vmatmul.mubr.f32.gmra.mrb[0].mxu0 %v3043
      %v3239 = vpop.f32.mrb[0].mxu0
      %v3240 = vadd.f32 0.0, %v3239
      %v3241 = vpop.f32.mrb[0].mxu0
      %3242 = vmatprep.mubr.f32.mxu0 0.0
      %3243 = vmatmul.mubr.f32.gmra.mrb[0].mxu0 %v3046
      %v3244 = vpop.f32.mrb[0].mxu0
      %v3245 = vadd.f32 0.0, %v3244
      %v3246 = vpop.f32.mrb[0].mxu0
      %3247 = vmatprep.mubr.f32.mxu0 0.0
      %3248 = vmatmul.mubr.f32.gmra.mrb[0].mxu0 %v3049
      %v3249 = vpop.f32.mrb[0].mxu0
      %v3250 = vadd.f32 0.0, %v3249
      %v3251 = vpop.f32.mrb[0].mxu0
      %3252 = vmatprep.mubr.f32.mxu0 0.0
      %3253 = vmatmul.mubr.f32.gmra.mrb[0].mxu0 %v3052
      %v3254 = vpop.f32.mrb[0].mxu0
      %v3255 = vadd.f32 0.0, %v3254
      %v3256 = vpop.f32.mrb[0].mxu0
      %3257 = vmatprep.mubr.f32.mxu0 0.0
      %3258 = vmatmul.mubr.f32.gmra.mrb[0].mxu0 %v3055
      %v3259 = vpop.f32.mrb[0].mxu0
      %v3260 = vadd.f32 0.0, %v3259
      %v3261 = vpop.f32.mrb[0].mxu0
      %3262 = vmatprep.mubr.f32.mxu0 0.0
      %3263 = vmatmul.mubr.f32.gmra.mrb[0].mxu0 %v3058
      %v3264 = vpop.f32.mrb[0].mxu0
      %v3265 = vadd.f32 0.0, %v3264
      %v3266 = vpop.f32.mrb[0].mxu0
      %3267 = vmatprep.mubr.f32.mxu0 0.0
      %3268 = vmatmul.mubr.f32.gmra.mrb[0].mxu0 %v3061
      %v3269 = vpop.f32.mrb[0].mxu0
      %v3270 = vadd.f32 0.0, %v3269
      %v3271 = vpop.f32.mrb[0].mxu0
      %3272 = vmatprep.mubr.f32.mxu0 0.0
      %3273 = vmatmul.mubr.f32.gmra.mrb[0].mxu0 %v3064
      %v3274 = vpop.f32.mrb[0].mxu0
      %v3275 = vadd.f32 0.0, %v3274
      %v3276 = vpop.f32.mrb[0].mxu0
      %3277 = vmatprep.mubr.f32.mxu0 0.0
      %3278 = vmatmul.mubr.f32.gmra.mrb[0].mxu0 %v3067
      %v3279 = vpop.f32.mrb[0].mxu0
      %v3280 = vadd.f32 0.0, %v3279
      %v3281 = vpop.f32.mrb[0].mxu0
      %3282 = vmatprep.mubr.f32.mxu0 0.0
      %3283 = vmatmul.mubr.f32.gmra.mrb[0].mxu0 %v3070
      %v3284 = vpop.f32.mrb[0].mxu0
      %v3285 = vadd.f32 0.0, %v3284
      %v3286 = vpop.f32.mrb[0].mxu0
      %3287 = vmatprep.mubr.f32.mxu0 0.0
      %3288 = vmatmul.mubr.f32.gmra.mrb[0].mxu0 %v3073
      %v3289 = vpop.f32.mrb[0].mxu0
      %v3290 = vadd.f32 0.0, %v3289
      %v3291 = vpop.f32.mrb[0].mxu0
      %3292 = vmatprep.mubr.f32.mxu0 0.0
      %3293 = vmatmul.mubr.f32.gmra.mrb[0].mxu0 %v3076
      %v3294 = vpop.f32.mrb[0].mxu0
      %v3295 = vadd.f32 0.0, %v3294
      %v3296 = vpop.f32.mrb[0].mxu0
      %3297 = vmatprep.mubr.f32.mxu0 0.0
      %3298 = vmatmul.mubr.f32.gmra.mrb[0].mxu0 %v3079
      %v3299 = vpop.f32.mrb[0].mxu0
      %v3300 = vadd.f32 0.0, %v3299
      %v3301 = vpop.f32.mrb[0].mxu0
      %3302 = vmatprep.mubr.f32.mxu0 0.0
      %3303 = vmatmul.mubr.f32.gmra.mrb[0].mxu0 %v3082
      %v3304 = vpop.f32.mrb[0].mxu0
      %v3305 = vadd.f32 0.0, %v3304
      %v3306 = vpop.f32.mrb[0].mxu0
      %3307 = vmatprep.mubr.f32.mxu0 0.0
      %3308 = vmatmul.mubr.f32.gmra.mrb[0].mxu0 %v3085
      %v3309 = vpop.f32.mrb[0].mxu0
      %v3310 = vadd.f32 0.0, %v3309
      %v3311 = vpop.f32.mrb[0].mxu0
      %3312 = vmatprep.mubr.f32.mxu0 0.0
      %3313 = vmatmul.mubr.f32.gmra.mrb[0].mxu0 %v3088
      %v3314 = vpop.f32.mrb[0].mxu0
      %v3315 = vadd.f32 0.0, %v3314
      %v3316 = vpop.f32.mrb[0].mxu0
      %3317 = vdwg.mxu0
      %v3318 = vadd.f32 %v2928, %v3160
      %v3319 = vadd.f32 %v2929, %v3165
      %v3320 = vadd.f32 %v2930, %v3170
      %v3321 = vadd.f32 %v2931, %v3175
      %v3322 = vadd.f32 %v2932, %v3180
      %v3323 = vadd.f32 %v2933, %v3185
      %v3324 = vadd.f32 %v2934, %v3190
      %v3325 = vadd.f32 %v2935, %v3195
      %v3326 = vadd.f32 %v2936, %v3200
      %v3327 = vadd.f32 %v2937, %v3205
      %v3328 = vadd.f32 %v2938, %v3210
      %v3329 = vadd.f32 %v2939, %v3215
      %v3330 = vadd.f32 %v2940, %v3220
      %v3331 = vadd.f32 %v2941, %v3225
      %v3332 = vadd.f32 %v2942, %v3230
      %v3333 = vadd.f32 %v2943, %v3235
      %v3334 = vadd.f32 %v2944, %v3240
      %v3335 = vadd.f32 %v2945, %v3245
      %v3336 = vadd.f32 %v2946, %v3250
      %v3337 = vadd.f32 %v2947, %v3255
      %v3338 = vadd.f32 %v2948, %v3260
      %v3339 = vadd.f32 %v2949, %v3265
      %v3340 = vadd.f32 %v2950, %v3270
      %v3341 = vadd.f32 %v2951, %v3275
      %v3342 = vadd.f32 %v2952, %v3280
      %v3343 = vadd.f32 %v2953, %v3285
      %v3344 = vadd.f32 %v2954, %v3290
      %v3345 = vadd.f32 %v2955, %v3295
      %v3346 = vadd.f32 %v2956, %v3300
      %v3347 = vadd.f32 %v2957, %v3305
      %v3348 = vadd.f32 %v2958, %v3310
      %v3349 = vadd.f32 %v2959, %v3315
      %v3350 = vld [vmem:[%s2569 + $0x2] sm:$0xff]
      %v3351 = vld [vmem:[%s2569 + $0xa] sm:$0xff]
      %v3352 = vld [vmem:[%s2569 + $0x1a] sm:$0xff]
      %v3353 = vld [vmem:[%s2569 + $0x22] sm:$0xff]
      %v3354 = vld [vmem:[%s2569 + $0x32] sm:$0xff]
      %v3355 = vld [vmem:[%s2569 + $0x3a] sm:$0xff]
      %v3356 = vld [vmem:[%s2569 + $0x4a] sm:$0xff]
      %v3357 = vld [vmem:[%s2569 + $0x52] sm:$0xff]
      %v3358 = vld [vmem:[%s2569 + $0x62] sm:$0xff]
      %v3359 = vld [vmem:[%s2569 + $0x6a] sm:$0xff]
      %v3360 = vld [vmem:[%s2569 + $0x7a] sm:$0xff]
      %v3361 = vld [vmem:[%s2569 + $0x82] sm:$0xff]
      %v3362 = vld [vmem:[%s2569 + $0x92] sm:$0xff]
      %v3363 = vld [vmem:[%s2569 + $0x9a] sm:$0xff]
      %v3364 = vld [vmem:[%s2569 + $0xaa] sm:$0xff]
      %v3365 = vld [vmem:[%s2569 + $0xb2] sm:$0xff]
      %v3366 = vld [vmem:[%s2569 + $0xc2] sm:$0xff]
      %v3367 = vld [vmem:[%s2569 + $0xca] sm:$0xff]
      %v3368 = vld [vmem:[%s2569 + $0xda] sm:$0xff]
      %v3369 = vld [vmem:[%s2569 + $0xe2] sm:$0xff]
      %v3370 = vld [vmem:[%s2569 + $0xf2] sm:$0xff]
      %v3371 = vld [vmem:[%s2569 + $0xfa] sm:$0xff]
      %v3372 = vld [vmem:[%s2569 + $0x10a] sm:$0xff]
      %v3373 = vld [vmem:[%s2569 + $0x112] sm:$0xff]
      %v3374 = vld [vmem:[%s2569 + $0x122] sm:$0xff]
      %v3375 = vld [vmem:[%s2569 + $0x12a] sm:$0xff]
      %v3376 = vld [vmem:[%s2569 + $0x13a] sm:$0xff]
      %v3377 = vld [vmem:[%s2569 + $0x142] sm:$0xff]
      %v3378 = vld [vmem:[%s2569 + $0x152] sm:$0xff]
      %v3379 = vld [vmem:[%s2569 + $0x15a] sm:$0xff]
      %v3380 = vld [vmem:[%s2569 + $0x16a] sm:$0xff]
      %v3381 = vld [vmem:[%s2569 + $0x172] sm:$0xff]
      %s3382 = scalar_lea.vmem %s1, 32
      %v3383 = vld [vmem:[%s3382] sm:$0xf]
      %v3385 = vsel %vm182, %v3350, 0
      %v3388 = vsel %vm182, %v3351, 0
      %v3391 = vsel %vm182, %v3352, 0
      %v3394 = vsel %vm182, %v3353, 0
      %v3397 = vsel %vm182, %v3354, 0
      %v3400 = vsel %vm182, %v3355, 0
      %v3403 = vsel %vm182, %v3356, 0
      %v3406 = vsel %vm182, %v3357, 0
      %v3409 = vsel %vm182, %v3358, 0
      %v3412 = vsel %vm182, %v3359, 0
      %v3415 = vsel %vm182, %v3360, 0
      %v3418 = vsel %vm182, %v3361, 0
      %v3421 = vsel %vm182, %v3362, 0
      %v3424 = vsel %vm182, %v3363, 0
      %v3427 = vsel %vm182, %v3364, 0
      %v3430 = vsel %vm182, %v3365, 0
      %v3433 = vsel %vm182, %v3366, 0
      %v3436 = vsel %vm182, %v3367, 0
      %v3439 = vsel %vm182, %v3368, 0
      %v3442 = vsel %vm182, %v3369, 0
      %v3445 = vsel %vm182, %v3370, 0
      %v3448 = vsel %vm182, %v3371, 0
      %v3451 = vsel %vm182, %v3372, 0
      %v3454 = vsel %vm182, %v3373, 0
      %v3457 = vsel %vm182, %v3374, 0
      %v3460 = vsel %vm182, %v3375, 0
      %v3463 = vsel %vm182, %v3376, 0
      %v3466 = vsel %vm182, %v3377, 0
      %v3469 = vsel %vm182, %v3378, 0
      %v3472 = vsel %vm182, %v3379, 0
      %v3475 = vsel %vm182, %v3380, 0
      %v3478 = vsel %vm182, %v3381, 0
      %v3481 = vsel %vm456, %v3383, 0
      %3483 = vmatprep.subr.mxu0 0.0
      %3484 = vmatpush1.msra.mxu0 %v3481
      %3485 = vmatprep.subr.mxu0 0.0
      %3486 = vmatpush1.msra.mxu0 0.0
      %3487 = vmatprep.subr.mxu0 0.0
      %3488 = vmatpush1.msra.mxu0 0.0
      %3489 = vmatprep.subr.mxu0 0.0
      %3490 = vmatpush1.msra.mxu0 0.0
      %3491 = vmatprep.subr.mxu0 0.0
      %3492 = vmatpush1.msra.mxu0 0.0
      %3493 = vmatprep.subr.mxu0 0.0
      %3494 = vmatpush1.msra.mxu0 0.0
      %3495 = vmatprep.subr.mxu0 0.0
      %3496 = vmatpush1.msra.mxu0 0.0
      %3497 = vmatprep.subr.mxu0 0.0
      %3498 = vmatpush1.msra.mxu0 0.0
      %3499 = vmatprep.subr.mxu0 0.0
      %3500 = vmatpush1.msra.mxu0 0.0
      %3501 = vmatprep.subr.mxu0 0.0
      %3502 = vmatpush1.msra.mxu0 0.0
      %3503 = vmatprep.subr.mxu0 0.0
      %3504 = vmatpush1.msra.mxu0 0.0
      %3505 = vmatprep.subr.mxu0 0.0
      %3506 = vmatpush1.msra.mxu0 0.0
      %3507 = vmatprep.subr.mxu0 0.0
      %3508 = vmatpush1.msra.mxu0 0.0
      %3509 = vmatprep.subr.mxu0 0.0
      %3510 = vmatpush1.msra.mxu0 0.0
      %3511 = vmatprep.subr.mxu0 0.0
      %3512 = vmatpush1.msra.mxu0 0.0
      %3513 = vmatprep.subr.mxu0 0.0
      %3514 = vmatpush1.msra.mxu0 0.0
      %3515 = vmatprep.subr.mxu0 0.0
      %3516 = vmatpush1.msra.mxu0 0.0
      %3517 = vmatprep.subr.mxu0 0.0
      %3518 = vmatpush1.msra.mxu0 0.0
      %3519 = vmatprep.subr.mxu0 0.0
      %3520 = vmatpush1.msra.mxu0 0.0
      %3521 = vmatprep.subr.mxu0 0.0
      %3522 = vmatpush1.msra.mxu0 0.0
      %3523 = vmatprep.subr.mxu0 0.0
      %3524 = vmatpush1.msra.mxu0 0.0
      %3525 = vmatprep.subr.mxu0 0.0
      %3526 = vmatpush1.msra.mxu0 0.0
      %3527 = vmatprep.subr.mxu0 0.0
      %3528 = vmatpush1.msra.mxu0 0.0
      %3529 = vmatprep.subr.mxu0 0.0
      %3530 = vmatpush1.msra.mxu0 0.0
      %3531 = vmatprep.subr.mxu0 0.0
      %3532 = vmatpush1.msra.mxu0 0.0
      %3533 = vmatprep.subr.mxu0 0.0
      %3534 = vmatpush1.msra.mxu0 0.0
      %3535 = vmatprep.subr.mxu0 0.0
      %3536 = vmatpush1.msra.mxu0 0.0
      %3537 = vmatprep.subr.mxu0 0.0
      %3538 = vmatpush1.msra.mxu0 0.0
      %3539 = vmatprep.subr.mxu0 0.0
      %3540 = vmatpush1.msra.mxu0 0.0
      %3541 = vmatprep.subr.mxu0 0.0
      %3542 = vmatpush1.msra.mxu0 0.0
      %3543 = vmatprep.subr.mxu0 0.0
      %3544 = vmatpush1.msra.mxu0 0.0
      %3545 = vmatprep.subr.mxu0 0.0
      %3546 = vmatpush1.msra.mxu0 0.0
      %3547 = vmatprep.mubr.f32.mxu0 0.0
      %3548 = vmatmul.mubr.f32.gmra.mrb[0].mxu0 %v3385
      %v3549 = vpop.f32.mrb[0].mxu0
      %v3550 = vadd.f32 0.0, %v3549
      %v3551 = vpop.f32.mrb[0].mxu0
      %3552 = vmatprep.mubr.f32.mxu0 0.0
      %3553 = vmatmul.mubr.f32.gmra.mrb[0].mxu0 %v3388
      %v3554 = vpop.f32.mrb[0].mxu0
      %v3555 = vadd.f32 0.0, %v3554
      %v3556 = vpop.f32.mrb[0].mxu0
      %3557 = vmatprep.mubr.f32.mxu0 0.0
      %3558 = vmatmul.mubr.f32.gmra.mrb[0].mxu0 %v3391
      %v3559 = vpop.f32.mrb[0].mxu0
      %v3560 = vadd.f32 0.0, %v3559
      %v3561 = vpop.f32.mrb[0].mxu0
      %3562 = vmatprep.mubr.f32.mxu0 0.0
      %3563 = vmatmul.mubr.f32.gmra.mrb[0].mxu0 %v3394
      %v3564 = vpop.f32.mrb[0].mxu0
      %v3565 = vadd.f32 0.0, %v3564
      %v3566 = vpop.f32.mrb[0].mxu0
      %3567 = vmatprep.mubr.f32.mxu0 0.0
      %3568 = vmatmul.mubr.f32.gmra.mrb[0].mxu0 %v3397
      %v3569 = vpop.f32.mrb[0].mxu0
      %v3570 = vadd.f32 0.0, %v3569
      %v3571 = vpop.f32.mrb[0].mxu0
      %3572 = vmatprep.mubr.f32.mxu0 0.0
      %3573 = vmatmul.mubr.f32.gmra.mrb[0].mxu0 %v3400
      %v3574 = vpop.f32.mrb[0].mxu0
      %v3575 = vadd.f32 0.0, %v3574
      %v3576 = vpop.f32.mrb[0].mxu0
      %3577 = vmatprep.mubr.f32.mxu0 0.0
      %3578 = vmatmul.mubr.f32.gmra.mrb[0].mxu0 %v3403
      %v3579 = vpop.f32.mrb[0].mxu0
      %v3580 = vadd.f32 0.0, %v3579
      %v3581 = vpop.f32.mrb[0].mxu0
      %3582 = vmatprep.mubr.f32.mxu0 0.0
      %3583 = vmatmul.mubr.f32.gmra.mrb[0].mxu0 %v3406
      %v3584 = vpop.f32.mrb[0].mxu0
      %v3585 = vadd.f32 0.0, %v3584
      %v3586 = vpop.f32.mrb[0].mxu0
      %3587 = vmatprep.mubr.f32.mxu0 0.0
      %3588 = vmatmul.mubr.f32.gmra.mrb[0].mxu0 %v3409
      %v3589 = vpop.f32.mrb[0].mxu0
      %v3590 = vadd.f32 0.0, %v3589
      %v3591 = vpop.f32.mrb[0].mxu0
      %3592 = vmatprep.mubr.f32.mxu0 0.0
      %3593 = vmatmul.mubr.f32.gmra.mrb[0].mxu0 %v3412
      %v3594 = vpop.f32.mrb[0].mxu0
      %v3595 = vadd.f32 0.0, %v3594
      %v3596 = vpop.f32.mrb[0].mxu0
      %3597 = vmatprep.mubr.f32.mxu0 0.0
      %3598 = vmatmul.mubr.f32.gmra.mrb[0].mxu0 %v3415
      %v3599 = vpop.f32.mrb[0].mxu0
      %v3600 = vadd.f32 0.0, %v3599
      %v3601 = vpop.f32.mrb[0].mxu0
      %3602 = vmatprep.mubr.f32.mxu0 0.0
      %3603 = vmatmul.mubr.f32.gmra.mrb[0].mxu0 %v3418
      %v3604 = vpop.f32.mrb[0].mxu0
      %v3605 = vadd.f32 0.0, %v3604
      %v3606 = vpop.f32.mrb[0].mxu0
      %3607 = vmatprep.mubr.f32.mxu0 0.0
      %3608 = vmatmul.mubr.f32.gmra.mrb[0].mxu0 %v3421
      %v3609 = vpop.f32.mrb[0].mxu0
      %v3610 = vadd.f32 0.0, %v3609
      %v3611 = vpop.f32.mrb[0].mxu0
      %3612 = vmatprep.mubr.f32.mxu0 0.0
      %3613 = vmatmul.mubr.f32.gmra.mrb[0].mxu0 %v3424
      %v3614 = vpop.f32.mrb[0].mxu0
      %v3615 = vadd.f32 0.0, %v3614
      %v3616 = vpop.f32.mrb[0].mxu0
      %3617 = vmatprep.mubr.f32.mxu0 0.0
      %3618 = vmatmul.mubr.f32.gmra.mrb[0].mxu0 %v3427
      %v3619 = vpop.f32.mrb[0].mxu0
      %v3620 = vadd.f32 0.0, %v3619
      %v3621 = vpop.f32.mrb[0].mxu0
      %3622 = vmatprep.mubr.f32.mxu0 0.0
      %3623 = vmatmul.mubr.f32.gmra.mrb[0].mxu0 %v3430
      %v3624 = vpop.f32.mrb[0].mxu0
      %v3625 = vadd.f32 0.0, %v3624
      %v3626 = vpop.f32.mrb[0].mxu0
      %3627 = vmatprep.mubr.f32.mxu0 0.0
      %3628 = vmatmul.mubr.f32.gmra.mrb[0].mxu0 %v3433
      %v3629 = vpop.f32.mrb[0].mxu0
      %v3630 = vadd.f32 0.0, %v3629
      %v3631 = vpop.f32.mrb[0].mxu0
      %3632 = vmatprep.mubr.f32.mxu0 0.0
      %3633 = vmatmul.mubr.f32.gmra.mrb[0].mxu0 %v3436
      %v3634 = vpop.f32.mrb[0].mxu0
      %v3635 = vadd.f32 0.0, %v3634
      %v3636 = vpop.f32.mrb[0].mxu0
      %3637 = vmatprep.mubr.f32.mxu0 0.0
      %3638 = vmatmul.mubr.f32.gmra.mrb[0].mxu0 %v3439
      %v3639 = vpop.f32.mrb[0].mxu0
      %v3640 = vadd.f32 0.0, %v3639
      %v3641 = vpop.f32.mrb[0].mxu0
      %3642 = vmatprep.mubr.f32.mxu0 0.0
      %3643 = vmatmul.mubr.f32.gmra.mrb[0].mxu0 %v3442
      %v3644 = vpop.f32.mrb[0].mxu0
      %v3645 = vadd.f32 0.0, %v3644
      %v3646 = vpop.f32.mrb[0].mxu0
      %3647 = vmatprep.mubr.f32.mxu0 0.0
      %3648 = vmatmul.mubr.f32.gmra.mrb[0].mxu0 %v3445
      %v3649 = vpop.f32.mrb[0].mxu0
      %v3650 = vadd.f32 0.0, %v3649
      %v3651 = vpop.f32.mrb[0].mxu0
      %3652 = vmatprep.mubr.f32.mxu0 0.0
      %3653 = vmatmul.mubr.f32.gmra.mrb[0].mxu0 %v3448
      %v3654 = vpop.f32.mrb[0].mxu0
      %v3655 = vadd.f32 0.0, %v3654
      %v3656 = vpop.f32.mrb[0].mxu0
      %3657 = vmatprep.mubr.f32.mxu0 0.0
      %3658 = vmatmul.mubr.f32.gmra.mrb[0].mxu0 %v3451
      %v3659 = vpop.f32.mrb[0].mxu0
      %v3660 = vadd.f32 0.0, %v3659
      %v3661 = vpop.f32.mrb[0].mxu0
      %3662 = vmatprep.mubr.f32.mxu0 0.0
      %3663 = vmatmul.mubr.f32.gmra.mrb[0].mxu0 %v3454
      %v3664 = vpop.f32.mrb[0].mxu0
      %v3665 = vadd.f32 0.0, %v3664
      %v3666 = vpop.f32.mrb[0].mxu0
      %3667 = vmatprep.mubr.f32.mxu0 0.0
      %3668 = vmatmul.mubr.f32.gmra.mrb[0].mxu0 %v3457
      %v3669 = vpop.f32.mrb[0].mxu0
      %v3670 = vadd.f32 0.0, %v3669
      %v3671 = vpop.f32.mrb[0].mxu0
      %3672 = vmatprep.mubr.f32.mxu0 0.0
      %3673 = vmatmul.mubr.f32.gmra.mrb[0].mxu0 %v3460
      %v3674 = vpop.f32.mrb[0].mxu0
      %v3675 = vadd.f32 0.0, %v3674
      %v3676 = vpop.f32.mrb[0].mxu0
      %3677 = vmatprep.mubr.f32.mxu0 0.0
      %3678 = vmatmul.mubr.f32.gmra.mrb[0].mxu0 %v3463
      %v3679 = vpop.f32.mrb[0].mxu0
      %v3680 = vadd.f32 0.0, %v3679
      %v3681 = vpop.f32.mrb[0].mxu0
      %3682 = vmatprep.mubr.f32.mxu0 0.0
      %3683 = vmatmul.mubr.f32.gmra.mrb[0].mxu0 %v3466
      %v3684 = vpop.f32.mrb[0].mxu0
      %v3685 = vadd.f32 0.0, %v3684
      %v3686 = vpop.f32.mrb[0].mxu0
      %3687 = vmatprep.mubr.f32.mxu0 0.0
      %3688 = vmatmul.mubr.f32.gmra.mrb[0].mxu0 %v3469
      %v3689 = vpop.f32.mrb[0].mxu0
      %v3690 = vadd.f32 0.0, %v3689
      %v3691 = vpop.f32.mrb[0].mxu0
      %3692 = vmatprep.mubr.f32.mxu0 0.0
      %3693 = vmatmul.mubr.f32.gmra.mrb[0].mxu0 %v3472
      %v3694 = vpop.f32.mrb[0].mxu0
      %v3695 = vadd.f32 0.0, %v3694
      %v3696 = vpop.f32.mrb[0].mxu0
      %3697 = vmatprep.mubr.f32.mxu0 0.0
      %3698 = vmatmul.mubr.f32.gmra.mrb[0].mxu0 %v3475
      %v3699 = vpop.f32.mrb[0].mxu0
      %v3700 = vadd.f32 0.0, %v3699
      %v3701 = vpop.f32.mrb[0].mxu0
      %3702 = vmatprep.mubr.f32.mxu0 0.0
      %3703 = vmatmul.mubr.f32.gmra.mrb[0].mxu0 %v3478
      %v3704 = vpop.f32.mrb[0].mxu0
      %v3705 = vadd.f32 0.0, %v3704
      %v3706 = vpop.f32.mrb[0].mxu0
      %3707 = vdwg.mxu0
      %v3708 = vadd.f32 %v3318, %v3550
      %v3709 = vadd.f32 %v3319, %v3555
      %v3710 = vadd.f32 %v3320, %v3560
      %v3711 = vadd.f32 %v3321, %v3565
      %v3712 = vadd.f32 %v3322, %v3570
      %v3713 = vadd.f32 %v3323, %v3575
      %v3714 = vadd.f32 %v3324, %v3580
      %v3715 = vadd.f32 %v3325, %v3585
      %v3716 = vadd.f32 %v3326, %v3590
      %v3717 = vadd.f32 %v3327, %v3595
      %v3718 = vadd.f32 %v3328, %v3600
      %v3719 = vadd.f32 %v3329, %v3605
      %v3720 = vadd.f32 %v3330, %v3610
      %v3721 = vadd.f32 %v3331, %v3615
      %v3722 = vadd.f32 %v3332, %v3620
      %v3723 = vadd.f32 %v3333, %v3625
      %v3724 = vadd.f32 %v3334, %v3630
      %v3725 = vadd.f32 %v3335, %v3635
      %v3726 = vadd.f32 %v3336, %v3640
      %v3727 = vadd.f32 %v3337, %v3645
      %v3728 = vadd.f32 %v3338, %v3650
      %v3729 = vadd.f32 %v3339, %v3655
      %v3730 = vadd.f32 %v3340, %v3660
      %v3731 = vadd.f32 %v3341, %v3665
      %v3732 = vadd.f32 %v3342, %v3670
      %v3733 = vadd.f32 %v3343, %v3675
      %v3734 = vadd.f32 %v3344, %v3680
      %v3735 = vadd.f32 %v3345, %v3685
      %v3736 = vadd.f32 %v3346, %v3690
      %v3737 = vadd.f32 %v3347, %v3695
      %v3738 = vadd.f32 %v3348, %v3700
      %v3739 = vadd.f32 %v3349, %v3705
      %vm3740 = vcmask 64512
      %3741 = vst.msk [vmem:[%s177] sm:$0xff] %vm3740, %v3708
      %3742 = vst.msk [vmem:[%s177 + $0x8] sm:$0xff] %vm3740, %v3709
      %3743 = vst.msk [vmem:[%s177 + $0x10] sm:$0xff] %vm3740, %v3710
      %3744 = vst.msk [vmem:[%s177 + $0x18] sm:$0xff] %vm3740, %v3711
      %3745 = vst.msk [vmem:[%s177 + $0x20] sm:$0xff] %vm3740, %v3712
      %3746 = vst.msk [vmem:[%s177 + $0x28] sm:$0xff] %vm3740, %v3713
      %3747 = vst.msk [vmem:[%s177 + $0x30] sm:$0xff] %vm3740, %v3714
      %3748 = vst.msk [vmem:[%s177 + $0x38] sm:$0xff] %vm3740, %v3715
      %3749 = vst.msk [vmem:[%s177 + $0x40] sm:$0xff] %vm3740, %v3716
      %3750 = vst.msk [vmem:[%s177 + $0x48] sm:$0xff] %vm3740, %v3717
      %3751 = vst.msk [vmem:[%s177 + $0x50] sm:$0xff] %vm3740, %v3718
      %3752 = vst.msk [vmem:[%s177 + $0x58] sm:$0xff] %vm3740, %v3719
      %3753 = vst.msk [vmem:[%s177 + $0x60] sm:$0xff] %vm3740, %v3720
      %3754 = vst.msk [vmem:[%s177 + $0x68] sm:$0xff] %vm3740, %v3721
      %3755 = vst.msk [vmem:[%s177 + $0x70] sm:$0xff] %vm3740, %v3722
      %3756 = vst.msk [vmem:[%s177 + $0x78] sm:$0xff] %vm3740, %v3723
      %3757 = vst.msk [vmem:[%s177 + $0x80] sm:$0xff] %vm3740, %v3724
      %3758 = vst.msk [vmem:[%s177 + $0x88] sm:$0xff] %vm3740, %v3725
      %3759 = vst.msk [vmem:[%s177 + $0x90] sm:$0xff] %vm3740, %v3726
      %3760 = vst.msk [vmem:[%s177 + $0x98] sm:$0xff] %vm3740, %v3727
      %3761 = vst.msk [vmem:[%s177 + $0xa0] sm:$0xff] %vm3740, %v3728
      %3762 = vst.msk [vmem:[%s177 + $0xa8] sm:$0xff] %vm3740, %v3729
      %3763 = vst.msk [vmem:[%s177 + $0xb0] sm:$0xff] %vm3740, %v3730
      %3764 = vst.msk [vmem:[%s177 + $0xb8] sm:$0xff] %vm3740, %v3731
      %3765 = vst.msk [vmem:[%s177 + $0xc0] sm:$0xff] %vm3740, %v3732
      %3766 = vst.msk [vmem:[%s177 + $0xc8] sm:$0xff] %vm3740, %v3733
      %3767 = vst.msk [vmem:[%s177 + $0xd0] sm:$0xff] %vm3740, %v3734
      %3768 = vst.msk [vmem:[%s177 + $0xd8] sm:$0xff] %vm3740, %v3735
      %3769 = vst.msk [vmem:[%s177 + $0xe0] sm:$0xff] %vm3740, %v3736
      %3770 = vst.msk [vmem:[%s177 + $0xe8] sm:$0xff] %vm3740, %v3737
      %3771 = vst.msk [vmem:[%s177 + $0xf0] sm:$0xff] %vm3740, %v3738
      %3772 = vst.msk [vmem:[%s177 + $0xf8] sm:$0xff] %vm3740, %v3739
      %v3773 = vld [vmem:[%s172] sm:$0xff]
      %v3774 = vld [vmem:[%s172 + $0x8] sm:$0xff]
      %v3775 = vld [vmem:[%s172 + $0x10] sm:$0xff]
      %v3776 = vld [vmem:[%s172 + $0x18] sm:$0xff]
      %v3777 = vld [vmem:[%s172 + $0x20] sm:$0xff]
      %v3778 = vld [vmem:[%s172 + $0x28] sm:$0xff]
      %v3779 = vld [vmem:[%s172 + $0x30] sm:$0xff]
      %v3780 = vld [vmem:[%s172 + $0x38] sm:$0xff]
      %v3781 = vld [vmem:[%s172 + $0x40] sm:$0xff]
      %v3782 = vld [vmem:[%s172 + $0x48] sm:$0xff]
      %v3783 = vld [vmem:[%s172 + $0x50] sm:$0xff]
      %v3784 = vld [vmem:[%s172 + $0x58] sm:$0xff]
      %v3785 = vld [vmem:[%s172 + $0x60] sm:$0xff]
      %v3786 = vld [vmem:[%s172 + $0x68] sm:$0xff]
      %v3787 = vld [vmem:[%s172 + $0x70] sm:$0xff]
      %v3788 = vld [vmem:[%s172 + $0x78] sm:$0xff]
      %v3789 = vld [vmem:[%s172 + $0x80] sm:$0xff]
      %v3790 = vld [vmem:[%s172 + $0x88] sm:$0xff]
      %v3791 = vld [vmem:[%s172 + $0x90] sm:$0xff]
      %v3792 = vld [vmem:[%s172 + $0x98] sm:$0xff]
      %v3793 = vld [vmem:[%s172 + $0xa0] sm:$0xff]
      %v3794 = vld [vmem:[%s172 + $0xa8] sm:$0xff]
      %v3795 = vld [vmem:[%s172 + $0xb0] sm:$0xff]
      %v3796 = vld [vmem:[%s172 + $0xb8] sm:$0xff]
      %v3797 = vld [vmem:[%s172 + $0xc0] sm:$0xff]
      %v3798 = vld [vmem:[%s172 + $0xc8] sm:$0xff]
      %v3799 = vld [vmem:[%s172 + $0xd0] sm:$0xff]
      %v3800 = vld [vmem:[%s172 + $0xd8] sm:$0xff]
      %v3801 = vld [vmem:[%s172 + $0xe0] sm:$0xff]
      %v3802 = vld [vmem:[%s172 + $0xe8] sm:$0xff]
      %v3803 = vld [vmem:[%s172 + $0xf0] sm:$0xff]
      %v3804 = vld [vmem:[%s172 + $0xf8] sm:$0xff]
      %v3805 = vsel %vm182, %v3773, 0.0
      %v3806 = vsel %vm182, %v3774, 0.0
      %v3807 = vadd.f32 %v3805, %v3806
      %v3808 = vsel %vm182, %v3775, 0.0
      %v3809 = vadd.f32 %v3807, %v3808
      %v3810 = vsel %vm182, %v3776, 0.0
      %v3811 = vadd.f32 %v3809, %v3810
      %v3812 = vsel %vm182, %v3777, 0.0
      %v3813 = vadd.f32 %v3811, %v3812
      %v3814 = vsel %vm182, %v3778, 0.0
      %v3815 = vadd.f32 %v3813, %v3814
      %v3816 = vsel %vm182, %v3779, 0.0
      %v3817 = vadd.f32 %v3815, %v3816
      %v3818 = vsel %vm182, %v3780, 0.0
      %v3819 = vadd.f32 %v3817, %v3818
      %v3820 = vsel %vm182, %v3781, 0.0
      %v3821 = vadd.f32 %v3819, %v3820
      %v3822 = vsel %vm182, %v3782, 0.0
      %v3823 = vadd.f32 %v3821, %v3822
      %v3824 = vsel %vm182, %v3783, 0.0
      %v3825 = vadd.f32 %v3823, %v3824
      %v3826 = vsel %vm182, %v3784, 0.0
      %v3827 = vadd.f32 %v3825, %v3826
      %v3828 = vsel %vm182, %v3785, 0.0
      %v3829 = vadd.f32 %v3827, %v3828
      %v3830 = vsel %vm182, %v3786, 0.0
      %v3831 = vadd.f32 %v3829, %v3830
      %v3832 = vsel %vm182, %v3787, 0.0
      %v3833 = vadd.f32 %v3831, %v3832
      %v3834 = vsel %vm182, %v3788, 0.0
      %v3835 = vadd.f32 %v3833, %v3834
      %v3836 = vsel %vm182, %v3789, 0.0
      %v3837 = vadd.f32 %v3835, %v3836
      %v3838 = vsel %vm182, %v3790, 0.0
      %v3839 = vadd.f32 %v3837, %v3838
      %v3840 = vsel %vm182, %v3791, 0.0
      %v3841 = vadd.f32 %v3839, %v3840
      %v3842 = vsel %vm182, %v3792, 0.0
      %v3843 = vadd.f32 %v3841, %v3842
      %v3844 = vsel %vm182, %v3793, 0.0
      %v3845 = vadd.f32 %v3843, %v3844
      %v3846 = vsel %vm182, %v3794, 0.0
      %v3847 = vadd.f32 %v3845, %v3846
      %v3848 = vsel %vm182, %v3795, 0.0
      %v3849 = vadd.f32 %v3847, %v3848
      %v3850 = vsel %vm182, %v3796, 0.0
      %v3851 = vadd.f32 %v3849, %v3850
      %v3852 = vsel %vm182, %v3797, 0.0
      %v3853 = vadd.f32 %v3851, %v3852
      %v3854 = vsel %vm182, %v3798, 0.0
      %v3855 = vadd.f32 %v3853, %v3854
      %v3856 = vsel %vm182, %v3799, 0.0
      %v3857 = vadd.f32 %v3855, %v3856
      %v3858 = vsel %vm182, %v3800, 0.0
      %v3859 = vadd.f32 %v3857, %v3858
      %v3860 = vsel %vm182, %v3801, 0.0
      %v3861 = vadd.f32 %v3859, %v3860
      %v3862 = vsel %vm182, %v3802, 0.0
      %v3863 = vadd.f32 %v3861, %v3862
      %v3864 = vsel %vm182, %v3803, 0.0
      %v3865 = vadd.f32 %v3863, %v3864
      %v3866 = vsel %vm182, %v3804, 0.0
      %v3867 = vadd.f32 %v3865, %v3866
      %v3868 = vrot.slane %v3867, 4
      %v3869 = vadd.f32 %v3867, %v3868
      %v3870 = vrot.slane %v3869, 2
      %v3871 = vadd.f32 %v3869, %v3870
      %v3872 = vrot.slane %v3871, 1
      %v3873 = vadd.f32 %v3871, %v3872
      %v3874 = vrcp.pop 256.0
      %v3875 = vmul.f32 %v3873, %v3874
      %v3876 = vsub.f32 %v3773, %v3875
      %v3877 = vsub.f32 %v3774, %v3875
      %v3878 = vsub.f32 %v3775, %v3875
      %v3879 = vsub.f32 %v3776, %v3875
      %v3880 = vsub.f32 %v3777, %v3875
      %v3881 = vsub.f32 %v3778, %v3875
      %v3882 = vsub.f32 %v3779, %v3875
      %v3883 = vsub.f32 %v3780, %v3875
      %v3884 = vsub.f32 %v3781, %v3875
      %v3885 = vsub.f32 %v3782, %v3875
      %v3886 = vsub.f32 %v3783, %v3875
      %v3887 = vsub.f32 %v3784, %v3875
      %v3888 = vsub.f32 %v3785, %v3875
      %v3889 = vsub.f32 %v3786, %v3875
      %v3890 = vsub.f32 %v3787, %v3875
      %v3891 = vsub.f32 %v3788, %v3875
      %v3892 = vsub.f32 %v3789, %v3875
      %v3893 = vsub.f32 %v3790, %v3875
      %v3894 = vsub.f32 %v3791, %v3875
      %v3895 = vsub.f32 %v3792, %v3875
      %v3896 = vsub.f32 %v3793, %v3875
      %v3897 = vsub.f32 %v3794, %v3875
      %v3898 = vsub.f32 %v3795, %v3875
      %v3899 = vsub.f32 %v3796, %v3875
      %v3900 = vsub.f32 %v3797, %v3875
      %v3901 = vsub.f32 %v3798, %v3875
      %v3902 = vsub.f32 %v3799, %v3875
      %v3903 = vsub.f32 %v3800, %v3875
      %v3904 = vsub.f32 %v3801, %v3875
      %v3905 = vsub.f32 %v3802, %v3875
      %v3906 = vsub.f32 %v3803, %v3875
      %v3907 = vsub.f32 %v3804, %v3875
      %v3908 = vmul.f32 %v3876, %v3876
      %v3909 = vmul.f32 %v3877, %v3877
      %v3910 = vmul.f32 %v3878, %v3878
      %v3911 = vmul.f32 %v3879, %v3879
      %v3912 = vmul.f32 %v3880, %v3880
      %v3913 = vmul.f32 %v3881, %v3881
      %v3914 = vmul.f32 %v3882, %v3882
      %v3915 = vmul.f32 %v3883, %v3883
      %v3916 = vmul.f32 %v3884, %v3884
      %v3917 = vmul.f32 %v3885, %v3885
      %v3918 = vmul.f32 %v3886, %v3886
      %v3919 = vmul.f32 %v3887, %v3887
      %v3920 = vmul.f32 %v3888, %v3888
      %v3921 = vmul.f32 %v3889, %v3889
      %v3922 = vmul.f32 %v3890, %v3890
      %v3923 = vmul.f32 %v3891, %v3891
      %v3924 = vmul.f32 %v3892, %v3892
      %v3925 = vmul.f32 %v3893, %v3893
      %v3926 = vmul.f32 %v3894, %v3894
      %v3927 = vmul.f32 %v3895, %v3895
      %v3928 = vmul.f32 %v3896, %v3896
      %v3929 = vmul.f32 %v3897, %v3897
      %v3930 = vmul.f32 %v3898, %v3898
      %v3931 = vmul.f32 %v3899, %v3899
      %v3932 = vmul.f32 %v3900, %v3900
      %v3933 = vmul.f32 %v3901, %v3901
      %v3934 = vmul.f32 %v3902, %v3902
      %v3935 = vmul.f32 %v3903, %v3903
      %v3936 = vmul.f32 %v3904, %v3904
      %v3937 = vmul.f32 %v3905, %v3905
      %v3938 = vmul.f32 %v3906, %v3906
      %v3939 = vmul.f32 %v3907, %v3907
      %v3940 = vsel %vm182, %v3908, 0.0
      %v3941 = vsel %vm182, %v3909, 0.0
      %v3942 = vadd.f32 %v3940, %v3941
      %v3943 = vsel %vm182, %v3910, 0.0
      %v3944 = vadd.f32 %v3942, %v3943
      %v3945 = vsel %vm182, %v3911, 0.0
      %v3946 = vadd.f32 %v3944, %v3945
      %v3947 = vsel %vm182, %v3912, 0.0
      %v3948 = vadd.f32 %v3946, %v3947
      %v3949 = vsel %vm182, %v3913, 0.0
      %v3950 = vadd.f32 %v3948, %v3949
      %v3951 = vsel %vm182, %v3914, 0.0
      %v3952 = vadd.f32 %v3950, %v3951
      %v3953 = vsel %vm182, %v3915, 0.0
      %v3954 = vadd.f32 %v3952, %v3953
      %v3955 = vsel %vm182, %v3916, 0.0
      %v3956 = vadd.f32 %v3954, %v3955
      %v3957 = vsel %vm182, %v3917, 0.0
      %v3958 = vadd.f32 %v3956, %v3957
      %v3959 = vsel %vm182, %v3918, 0.0
      %v3960 = vadd.f32 %v3958, %v3959
      %v3961 = vsel %vm182, %v3919, 0.0
      %v3962 = vadd.f32 %v3960, %v3961
      %v3963 = vsel %vm182, %v3920, 0.0
      %v3964 = vadd.f32 %v3962, %v3963
      %v3965 = vsel %vm182, %v3921, 0.0
      %v3966 = vadd.f32 %v3964, %v3965
      %v3967 = vsel %vm182, %v3922, 0.0
      %v3968 = vadd.f32 %v3966, %v3967
      %v3969 = vsel %vm182, %v3923, 0.0
      %v3970 = vadd.f32 %v3968, %v3969
      %v3971 = vsel %vm182, %v3924, 0.0
      %v3972 = vadd.f32 %v3970, %v3971
      %v3973 = vsel %vm182, %v3925, 0.0
      %v3974 = vadd.f32 %v3972, %v3973
      %v3975 = vsel %vm182, %v3926, 0.0
      %v3976 = vadd.f32 %v3974, %v3975
      %v3977 = vsel %vm182, %v3927, 0.0
      %v3978 = vadd.f32 %v3976, %v3977
      %v3979 = vsel %vm182, %v3928, 0.0
      %v3980 = vadd.f32 %v3978, %v3979
      %v3981 = vsel %vm182, %v3929, 0.0
      %v3982 = vadd.f32 %v3980, %v3981
      %v3983 = vsel %vm182, %v3930, 0.0
      %v3984 = vadd.f32 %v3982, %v3983
      %v3985 = vsel %vm182, %v3931, 0.0
      %v3986 = vadd.f32 %v3984, %v3985
      %v3987 = vsel %vm182, %v3932, 0.0
      %v3988 = vadd.f32 %v3986, %v3987
      %v3989 = vsel %vm182, %v3933, 0.0
      %v3990 = vadd.f32 %v3988, %v3989
      %v3991 = vsel %vm182, %v3934, 0.0
      %v3992 = vadd.f32 %v3990, %v3991
      %v3993 = vsel %vm182, %v3935, 0.0
      %v3994 = vadd.f32 %v3992, %v3993
      %v3995 = vsel %vm182, %v3936, 0.0
      %v3996 = vadd.f32 %v3994, %v3995
      %v3997 = vsel %vm182, %v3937, 0.0
      %v3998 = vadd.f32 %v3996, %v3997
      %v3999 = vsel %vm182, %v3938, 0.0
      %v4000 = vadd.f32 %v3998, %v3999
      %v4001 = vsel %vm182, %v3939, 0.0
      %v4002 = vadd.f32 %v4000, %v4001
      %v4003 = vrot.slane %v4002, 4
      %v4004 = vadd.f32 %v4002, %v4003
      %v4005 = vrot.slane %v4004, 2
      %v4006 = vadd.f32 %v4004, %v4005
      %v4007 = vrot.slane %v4006, 1
      %v4008 = vadd.f32 %v4006, %v4007
      %v4009 = vsel %vm3740, %v3708, 0.0
      %v4010 = vsel %vm3740, %v3709, 0.0
      %v4011 = vadd.f32 %v4009, %v4010
      %v4012 = vsel %vm3740, %v3710, 0.0
      %v4013 = vadd.f32 %v4011, %v4012
      %v4014 = vsel %vm3740, %v3711, 0.0
      %v4015 = vadd.f32 %v4013, %v4014
      %v4016 = vsel %vm3740, %v3712, 0.0
      %v4017 = vadd.f32 %v4015, %v4016
      %v4018 = vsel %vm3740, %v3713, 0.0
      %v4019 = vadd.f32 %v4017, %v4018
      %v4020 = vsel %vm3740, %v3714, 0.0
      %v4021 = vadd.f32 %v4019, %v4020
      %v4022 = vsel %vm3740, %v3715, 0.0
      %v4023 = vadd.f32 %v4021, %v4022
      %v4024 = vsel %vm3740, %v3716, 0.0
      %v4025 = vadd.f32 %v4023, %v4024
      %v4026 = vsel %vm3740, %v3717, 0.0
      %v4027 = vadd.f32 %v4025, %v4026
      %v4028 = vsel %vm3740, %v3718, 0.0
      %v4029 = vadd.f32 %v4027, %v4028
      %v4030 = vsel %vm3740, %v3719, 0.0
      %v4031 = vadd.f32 %v4029, %v4030
      %v4032 = vsel %vm3740, %v3720, 0.0
      %v4033 = vadd.f32 %v4031, %v4032
      %v4034 = vsel %vm3740, %v3721, 0.0
      %v4035 = vadd.f32 %v4033, %v4034
      %v4036 = vsel %vm3740, %v3722, 0.0
      %v4037 = vadd.f32 %v4035, %v4036
      %v4038 = vsel %vm3740, %v3723, 0.0
      %v4039 = vadd.f32 %v4037, %v4038
      %v4040 = vsel %vm3740, %v3724, 0.0
      %v4041 = vadd.f32 %v4039, %v4040
      %v4042 = vsel %vm3740, %v3725, 0.0
      %v4043 = vadd.f32 %v4041, %v4042
      %v4044 = vsel %vm3740, %v3726, 0.0
      %v4045 = vadd.f32 %v4043, %v4044
      %v4046 = vsel %vm3740, %v3727, 0.0
      %v4047 = vadd.f32 %v4045, %v4046
      %v4048 = vsel %vm3740, %v3728, 0.0
      %v4049 = vadd.f32 %v4047, %v4048
      %v4050 = vsel %vm3740, %v3729, 0.0
      %v4051 = vadd.f32 %v4049, %v4050
      %v4052 = vsel %vm3740, %v3730, 0.0
      %v4053 = vadd.f32 %v4051, %v4052
      %v4054 = vsel %vm3740, %v3731, 0.0
      %v4055 = vadd.f32 %v4053, %v4054
      %v4056 = vsel %vm3740, %v3732, 0.0
      %v4057 = vadd.f32 %v4055, %v4056
      %v4058 = vsel %vm3740, %v3733, 0.0
      %v4059 = vadd.f32 %v4057, %v4058
      %v4060 = vsel %vm3740, %v3734, 0.0
      %v4061 = vadd.f32 %v4059, %v4060
      %v4062 = vsel %vm3740, %v3735, 0.0
      %v4063 = vadd.f32 %v4061, %v4062
      %v4064 = vsel %vm3740, %v3736, 0.0
      %v4065 = vadd.f32 %v4063, %v4064
      %v4066 = vsel %vm3740, %v3737, 0.0
      %v4067 = vadd.f32 %v4065, %v4066
      %v4068 = vsel %vm3740, %v3738, 0.0
      %v4069 = vadd.f32 %v4067, %v4068
      %v4070 = vsel %vm3740, %v3739, 0.0
      %v4071 = vadd.f32 %v4069, %v4070
      %v4072 = vrot.slane %v4071, 4
      %v4073 = vadd.f32 %v4071, %v4072
      %v4074 = vrot.slane %v4073, 2
      %v4075 = vadd.f32 %v4073, %v4074
      %v4076 = vrot.slane %v4075, 1
      %v4077 = vadd.f32 %v4075, %v4076
      %v4078 = vmul.f32 %v4077, %v3874
      %v4079 = vsub.f32 %v3708, %v4078
      %v4080 = vsub.f32 %v3709, %v4078
      %v4081 = vsub.f32 %v3710, %v4078
      %v4082 = vsub.f32 %v3711, %v4078
      %v4083 = vsub.f32 %v3712, %v4078
      %v4084 = vsub.f32 %v3713, %v4078
      %v4085 = vsub.f32 %v3714, %v4078
      %v4086 = vsub.f32 %v3715, %v4078
      %v4087 = vsub.f32 %v3716, %v4078
      %v4088 = vsub.f32 %v3717, %v4078
      %v4089 = vsub.f32 %v3718, %v4078
      %v4090 = vsub.f32 %v3719, %v4078
      %v4091 = vsub.f32 %v3720, %v4078
      %v4092 = vsub.f32 %v3721, %v4078
      %v4093 = vsub.f32 %v3722, %v4078
      %v4094 = vsub.f32 %v3723, %v4078
      %v4095 = vsub.f32 %v3724, %v4078
      %v4096 = vsub.f32 %v3725, %v4078
      %v4097 = vsub.f32 %v3726, %v4078
      %v4098 = vsub.f32 %v3727, %v4078
      %v4099 = vsub.f32 %v3728, %v4078
      %v4100 = vsub.f32 %v3729, %v4078
      %v4101 = vsub.f32 %v3730, %v4078
      %v4102 = vsub.f32 %v3731, %v4078
      %v4103 = vsub.f32 %v3732, %v4078
      %v4104 = vsub.f32 %v3733, %v4078
      %v4105 = vsub.f32 %v3734, %v4078
      %v4106 = vsub.f32 %v3735, %v4078
      %v4107 = vsub.f32 %v3736, %v4078
      %v4108 = vsub.f32 %v3737, %v4078
      %v4109 = vsub.f32 %v3738, %v4078
      %v4110 = vsub.f32 %v3739, %v4078
      %v4111 = vmul.f32 %v4079, %v4079
      %v4112 = vmul.f32 %v4080, %v4080
      %v4113 = vmul.f32 %v4081, %v4081
      %v4114 = vmul.f32 %v4082, %v4082
      %v4115 = vmul.f32 %v4083, %v4083
      %v4116 = vmul.f32 %v4084, %v4084
      %v4117 = vmul.f32 %v4085, %v4085
      %v4118 = vmul.f32 %v4086, %v4086
      %v4119 = vmul.f32 %v4087, %v4087
      %v4120 = vmul.f32 %v4088, %v4088
      %v4121 = vmul.f32 %v4089, %v4089
      %v4122 = vmul.f32 %v4090, %v4090
      %v4123 = vmul.f32 %v4091, %v4091
      %v4124 = vmul.f32 %v4092, %v4092
      %v4125 = vmul.f32 %v4093, %v4093
      %v4126 = vmul.f32 %v4094, %v4094
      %v4127 = vmul.f32 %v4095, %v4095
      %v4128 = vmul.f32 %v4096, %v4096
      %v4129 = vmul.f32 %v4097, %v4097
      %v4130 = vmul.f32 %v4098, %v4098
      %v4131 = vmul.f32 %v4099, %v4099
      %v4132 = vmul.f32 %v4100, %v4100
      %v4133 = vmul.f32 %v4101, %v4101
      %v4134 = vmul.f32 %v4102, %v4102
      %v4135 = vmul.f32 %v4103, %v4103
      %v4136 = vmul.f32 %v4104, %v4104
      %v4137 = vmul.f32 %v4105, %v4105
      %v4138 = vmul.f32 %v4106, %v4106
      %v4139 = vmul.f32 %v4107, %v4107
      %v4140 = vmul.f32 %v4108, %v4108
      %v4141 = vmul.f32 %v4109, %v4109
      %v4142 = vmul.f32 %v4110, %v4110
      %v4143 = vsel %vm3740, %v4111, 0.0
      %v4144 = vsel %vm3740, %v4112, 0.0
      %v4145 = vadd.f32 %v4143, %v4144
      %v4146 = vsel %vm3740, %v4113, 0.0
      %v4147 = vadd.f32 %v4145, %v4146
      %v4148 = vsel %vm3740, %v4114, 0.0
      %v4149 = vadd.f32 %v4147, %v4148
      %v4150 = vsel %vm3740, %v4115, 0.0
      %v4151 = vadd.f32 %v4149, %v4150
      %v4152 = vsel %vm3740, %v4116, 0.0
      %v4153 = vadd.f32 %v4151, %v4152
      %v4154 = vsel %vm3740, %v4117, 0.0
      %v4155 = vadd.f32 %v4153, %v4154
      %v4156 = vsel %vm3740, %v4118, 0.0
      %v4157 = vadd.f32 %v4155, %v4156
      %v4158 = vsel %vm3740, %v4119, 0.0
      %v4159 = vadd.f32 %v4157, %v4158
      %v4160 = vsel %vm3740, %v4120, 0.0
      %v4161 = vadd.f32 %v4159, %v4160
      %v4162 = vsel %vm3740, %v4121, 0.0
      %v4163 = vadd.f32 %v4161, %v4162
      %v4164 = vsel %vm3740, %v4122, 0.0
      %v4165 = vadd.f32 %v4163, %v4164
      %v4166 = vsel %vm3740, %v4123, 0.0
      %v4167 = vadd.f32 %v4165, %v4166
      %v4168 = vsel %vm3740, %v4124, 0.0
      %v4169 = vadd.f32 %v4167, %v4168
      %v4170 = vsel %vm3740, %v4125, 0.0
      %v4171 = vadd.f32 %v4169, %v4170
      %v4172 = vsel %vm3740, %v4126, 0.0
      %v4173 = vadd.f32 %v4171, %v4172
      %v4174 = vsel %vm3740, %v4127, 0.0
      %v4175 = vadd.f32 %v4173, %v4174
      %v4176 = vsel %vm3740, %v4128, 0.0
      %v4177 = vadd.f32 %v4175, %v4176
      %v4178 = vsel %vm3740, %v4129, 0.0
      %v4179 = vadd.f32 %v4177, %v4178
      %v4180 = vsel %vm3740, %v4130, 0.0
      %v4181 = vadd.f32 %v4179, %v4180
      %v4182 = vsel %vm3740, %v4131, 0.0
      %v4183 = vadd.f32 %v4181, %v4182
      %v4184 = vsel %vm3740, %v4132, 0.0
      %v4185 = vadd.f32 %v4183, %v4184
      %v4186 = vsel %vm3740, %v4133, 0.0
      %v4187 = vadd.f32 %v4185, %v4186
      %v4188 = vsel %vm3740, %v4134, 0.0
      %v4189 = vadd.f32 %v4187, %v4188
      %v4190 = vsel %vm3740, %v4135, 0.0
      %v4191 = vadd.f32 %v4189, %v4190
      %v4192 = vsel %vm3740, %v4136, 0.0
      %v4193 = vadd.f32 %v4191, %v4192
      %v4194 = vsel %vm3740, %v4137, 0.0
      %v4195 = vadd.f32 %v4193, %v4194
      %v4196 = vsel %vm3740, %v4138, 0.0
      %v4197 = vadd.f32 %v4195, %v4196
      %v4198 = vsel %vm3740, %v4139, 0.0
      %v4199 = vadd.f32 %v4197, %v4198
      %v4200 = vsel %vm3740, %v4140, 0.0
      %v4201 = vadd.f32 %v4199, %v4200
      %v4202 = vsel %vm3740, %v4141, 0.0
      %v4203 = vadd.f32 %v4201, %v4202
      %v4204 = vsel %vm3740, %v4142, 0.0
      %v4205 = vadd.f32 %v4203, %v4204
      %v4206 = vrot.slane %v4205, 4
      %v4207 = vadd.f32 %v4205, %v4206
      %v4208 = vrot.slane %v4207, 2
      %v4209 = vadd.f32 %v4207, %v4208
      %v4210 = vrot.slane %v4209, 1
      %v4211 = vadd.f32 %v4209, %v4210
      %4212 = vst.msk [vmem:[%s181] sm:$0x1] %vm191, %v3875
      %4214 = vrot.lane.b32.xlu0 %v4078, 4
      %v4215 = vpop.permute.xlu0 %4214
      %vm4217 = vcmask 90144
      %4218 = vst.msk [vmem:[%s181] sm:$0x1] %vm4217, %v4215
      %4219 = vst.msk [vmem:[%s181 + $0x1] sm:$0x1] %vm191, %v4008
      %4221 = vrot.lane.b32.xlu0 %v4211, 4
      %v4222 = vpop.permute.xlu0 %4221
      %4224 = vst.msk [vmem:[%s181 + $0x1] sm:$0x1] %vm4217, %v4222
      %p4225 = scmp.lt.s32.totalorder %s15, 1
      %s4226 = scalar_select %p4225, %s15, 1
      %s4227 = smul.addr %s4226, 32
      %s4228 = smul.addr %s4227, 8
      %s4229 = scalar_lea.vmem %s2, %s4228
      %p4230 = scmp.lt.s32.totalorder %s15, 1
      %s4231 = scalar_select %p4230, %s15, 1
      %s4232 = smul.addr %s4231, 2
      %s4233 = scalar_lea.vmem %s3, %s4232
      // Predicated region
      $region29: #{conv_block_forward.2} parent=27 // pred_check
        %p4234 = pneg %p80
      $region30: #{conv_block_forward.2} parent=27 // pred_check_branch
        %4236 = sbr.rel (%p4234) target = $region32
      $region31: #{conv_block_forward.2} parent=27 // pred_region
        _
      $region32: #{conv_block_forward.2} parent=27 // pred_fallthru
        _
      // Predicated region
      $region33: #{conv_block_forward.2} parent=27 // pred_check
        %p4237 = pneg %p106
      $region34: #{conv_block_forward.2} parent=27 // pred_check_branch
        %4239 = sbr.rel (%p4237) target = $region36
      $region35: #{conv_block_forward.2} parent=27 // pred_region
        _
      $region36: #{conv_block_forward.2} parent=27 // pred_fallthru
        _
    $region28: #{conv_block_forward.2} parent=5 // pred_fallthru
      _
    %p4240 = scmp.le.s32.totalorder 2, %s10
    // Predicated region
    $region37: #{conv_block_forward.2} parent=5 // pred_check
      %p4241 = pneg %p4240
    $region38: #{conv_block_forward.2} parent=5 // pred_check_branch
      %4243 = sbr.rel (%p4241) target = $region40
    $region39: #{conv_block_forward.2} parent=5 // pred_region
      %s4244 = ssub.s32 %s10, 2
      // Predicated region
      $region41: #{conv_block_forward.2} parent=39 // pred_check
        %p4245 = pneg %p86
      $region42: #{conv_block_forward.2} parent=39 // pred_check_branch
        %4247 = sbr.rel (%p4245) target = $region44
      $region43: #{conv_block_forward.2} parent=39 // pred_region
        %p4248 = scmp.lt.s32.totalorder %s16, 1
        %s4249 = scalar_select %p4248, %s16, 1
        %s4250 = smul.addr %s4249, 32
        %s4251 = smul.addr %s4250, 8
        %s4252 = scalar_lea.vmem %s2, %s4251
      $region44: #{conv_block_forward.2} parent=39 // pred_fallthru
        _
      // Predicated region
      $region45: #{conv_block_forward.2} parent=39 // pred_check
        %p4253 = pneg %p112
      $region46: #{conv_block_forward.2} parent=39 // pred_check_branch
        %4255 = sbr.rel (%p4253) target = $region48
      $region47: #{conv_block_forward.2} parent=39 // pred_region
        %p4256 = scmp.lt.s32.totalorder %s16, 1
        %s4257 = scalar_select %p4256, %s16, 1
        %s4258 = smul.addr %s4257, 2
        %s4259 = scalar_lea.vmem %s3, %s4258
      $region48: #{conv_block_forward.2} parent=39 // pred_fallthru
        _
    $region40: #{conv_block_forward.2} parent=5 // pred_fallthru
      _
  $region6: #{conv_block_forward.2} parent=0 // loop_footer
    %s14 = sadd.s32 1, %s10
  $region7: #{conv_block_forward.2} parent=0 // loop_footer_branch
    %9 = sbr.rel target = $region3
  $region8: #{conv_block_forward.2} parent=0 // loop_exit
    _

</llo_original>
